<compile_context>
chip_gen: v6e
topology: v6e:2x2x1
jax: 0.10.0
libtpu: 0.0.40
codegen_flags: <defaults>
</compile_context>

<pallas_src>
import math

import jax
import jax.numpy as jnp
import numpy as np
from jax import lax
from jax.experimental import pallas as pl
from jax.experimental.pallas import tpu as pltpu

BN_EPS = 1e-5
_INV_SQRT2 = 1.0 / math.sqrt(2.0)


def _gelu_exact(x):
    # nn.GELU() default = exact erf formulation (kept for semantic parity).
    # TODO(synk): if a v5e bundle dump shows VALU saturated, switch to the
    # tanh-approximate GELU (EUP slot) at the cost of exact nn.GELU parity.
    return 0.5 * x * (1.0 + lax.erf(x * _INV_SQRT2))


def _conv3x3_rows(xp, w_ref, TH, W, CP):
    """3x3 'same' conv on a row-haloed bf16 tile xp: (TH+2, W, CP) -> (TH, W, CP) f32.

    Single MXU matmul: K = 3*CP (the three ky row taps, lane-concatenated from
    cheap outer-dim slices), N = 3*CP (the three kx column taps for all Cout).
    The kx = 0 / kx = 2 taps are then accumulated with a one-column shift of the
    f32 result, with a zero column at the image border.
    """
    P = jnp.concatenate([xp[dy:dy + TH] for dy in range(3)], axis=-1)      # (TH, W, 3CP) bf16
    M = jnp.dot(P, w_ref[...], preferred_element_type=jnp.float32)          # (TH, W, 3CP) f32
    m_left, m_mid, m_right = M[..., :CP], M[..., CP:2 * CP], M[..., 2 * CP:]
    zcol = jnp.zeros((TH, 1, CP), jnp.float32)
    # out[:, w] = m_mid[:, w] + m_left[:, w-1] + m_right[:, w+1]   (zero outside image)
    return (m_mid
            + jnp.concatenate([zcol, m_left[:, :W - 1, :]], axis=1)
            + jnp.concatenate([m_right[:, 1:, :], zcol], axis=1))


# -------------------- pass 1: conv1 + GELU + per-tile BN stats ---------------
def conv1_gelu_stats_kernel(x_ref, xt_ref, xb_ref, w1_ref, b1_ref,
                            h_ref, sum_ref, m2_ref):
    t = pl.program_id(1)
    nT = pl.num_programs(1)
    _, TH, W, CP = x_ref.shape

    # Row-haloed tile (halo rows are clamped duplicates at the image boundary,
    # replaced by zeros here -> conv1 zero padding).
    top = jnp.where(t == 0, 0.0, xt_ref[0])
    bot = jnp.where(t == nT - 1, 0.0, xb_ref[0])
    xp = jnp.concatenate([top, x_ref[0], bot], axis=0)                      # (TH+2, W, CP) bf16

    acc = _conv3x3_rows(xp, w1_ref, TH, W, CP) + b1_ref[...]                # f32
    h_bf = _gelu_exact(acc).astype(jnp.bfloat16)
    h_ref[0] = h_bf                                                         # lane-dense store

    # Per-tile mean and centered sum of squares (from the same bf16-rounded h
    # that pass 2 will normalize) -> numerically stable global BN stats.
    hf = h_bf.astype(jnp.float32)
    s = jnp.sum(hf, axis=(0, 1), keepdims=True)                             # (1,1,CP)
    m = s * (1.0 / (TH * W))
    d = hf - m
    sum_ref[0] = s
    m2_ref[0] = jnp.sum(d * d, axis=(0, 1), keepdims=True)


# -------------------- pass 2: BN apply + conv2 + residual --------------------
def bn_conv2_residual_kernel(h_ref, ht_ref, hb_ref, x_ref, w2_ref,
                             scale_ref, shift_ref, b2_ref, out_ref):
    t = pl.program_id(1)
    nT = pl.num_programs(1)
    _, TH, W, CP = h_ref.shape
    scale = scale_ref[...]
    shift = shift_ref[...]

    # BatchNorm folded to a per-channel FMA; conv2's zero padding is in
    # *normalized* space, so boundary halo rows are zeroed AFTER the FMA.
    top = jnp.where(t == 0, 0.0,
                    ht_ref[0].astype(jnp.float32) * scale + shift).astype(jnp.bfloat16)
    mid = (h_ref[0].astype(jnp.float32) * scale + shift).astype(jnp.bfloat16)
    bot = jnp.where(t == nT - 1, 0.0,
                    hb_ref[0].astype(jnp.float32) * scale + shift).astype(jnp.bfloat16)
    hn = jnp.concatenate([top, mid, bot], axis=0)                           # (TH+2, W, CP) bf16

    acc = _conv3x3_rows(hn, w2_ref, TH, W, CP)
    out_ref[0] = (acc + b2_ref[...] + x_ref[0].astype(jnp.float32)).astype(out_ref.dtype)


# ------------------------------- wrapper helpers ------------------------------
def _pack_weight(w, C, CP):
    """(Cout, Cin, 3, 3) -> (3*CP, 3*CP) bf16 with [ky*CP+ci, kx*CP+co]."""
    wt = jnp.transpose(w, (2, 1, 3, 0))                                     # (ky, ci, kx, co)
    wp = jnp.zeros((3, CP, 3, CP), jnp.float32).at[:, :C, :, :C].set(wt.astype(jnp.float32))
    return wp.reshape(3 * CP, 3 * CP).astype(jnp.bfloat16)


def _pick_row_tile(N, H, W, CP, budget_bytes):
    """Largest divisor of H whose per-step VMEM estimate fits the budget while
    still giving the pipeline enough grid steps per TensorCore."""
    divisors = [d for d in range(1, H + 1) if H % d == 0]

    def fits(th):
        blk = th * W * CP
        est = (2 * blk * (2 + 2 + 4)               # double-buffered main in/out blocks
               + 3 * blk * (2 + 4 + 4)             # patches bf16 + matmul out f32 + f32 temps
               + 2 * (3 * CP) * (3 * CP) * 2       # weight matrix (bf16, double-buffered)
               + 4 * W * CP * 2)                   # halo row blocks
        return est <= budget_bytes

    for min_steps in (8, 4, 2, 1):                 # prefer >=4 steps per core on a 2-TC chip
        cands = [d for d in divisors if fits(d) and N * (H // d) >= min_steps]
        if cands:
            return max(cands)
    return 1


def residual_block_pallas(x_nchw, w1, b1, w2, b2, gamma, beta):
    """x_nchw: (N, C, H, W) float32, PyTorch layout. Returns (N, C, H, W) float32."""
    N, C, H, W = x_nchw.shape
    CP = ((max(C, 1) + 127) // 128) * 128          # lane-dense channel padding
    TH = _pick_row_tile(N, H, W, CP, budget_bytes=32 * 1024 * 1024)
    nT = H // TH

    # Layout glue (kept only for NCHW PyTorch API parity; a real model should
    # stay NHWC end-to-end so these transposes disappear).
    x_nhwc = jnp.transpose(x_nchw, (0, 2, 3, 1))
    x_p = jnp.zeros((N, H, W, CP), jnp.bfloat16).at[..., :C].set(x_nhwc.astype(jnp.bfloat16))
    w1_m = _pack_weight(w1, C, CP)
    w2_m = _pack_weight(w2, C, CP)
    b1_m = jnp.zeros((1, 1, CP), jnp.float32).at[..., :C].set(b1.astype(jnp.float32))
    b2_m = jnp.zeros((1, 1, CP), jnp.float32).at[..., :C].set(b2.astype(jnp.float32))
    gamma_p = jnp.zeros((CP,), jnp.float32).at[:C].set(gamma.astype(jnp.float32))
    beta_p = jnp.zeros((CP,), jnp.float32).at[:C].set(beta.astype(jnp.float32))

    main_spec = pl.BlockSpec((1, TH, W, CP), lambda b, t: (b, t, 0, 0))
    top_spec = pl.BlockSpec((1, 1, W, CP),
                            lambda b, t: (b, jnp.maximum(t * TH - 1, 0), 0, 0))
    bot_spec = pl.BlockSpec((1, 1, W, CP),
                            lambda b, t: (b, jnp.minimum((t + 1) * TH, H - 1), 0, 0))
    w_spec = pl.BlockSpec((3 * CP, 3 * CP), lambda b, t: (0, 0))
    vec_spec = pl.BlockSpec((1, 1, CP), lambda b, t: (0, 0, 0))
    stat_spec = pl.BlockSpec((1, 1, 1, CP), lambda b, t: (b, t, 0, 0))

    cparams = pltpu.CompilerParams(
        dimension_semantics=("parallel", "parallel"),
        vmem_limit_bytes=48 * 1024 * 1024)

    # ---- pass 1: conv1 + GELU + per-tile BN partial stats --------------------
    h, hsum, hm2 = pl.pallas_call(
        conv1_gelu_stats_kernel,
        grid=(N, nT),
        in_specs=[main_spec, top_spec, bot_spec, w_spec, vec_spec],
        out_specs=(main_spec, stat_spec, stat_spec),
        out_shape=(jax.ShapeDtypeStruct((N, H, W, CP), jnp.bfloat16),
                   jax.ShapeDtypeStruct((N, nT, 1, CP), jnp.float32),
                   jax.ShapeDtypeStruct((N, nT, 1, CP), jnp.float32)),
        compiler_params=cparams,
    )(x_p, x_p, x_p, w1_m, b1_m)

    # ---- tiny XLA reduction: pooled (stable) variance -> per-channel FMA ------
    cnt_tile = float(TH * W)
    total = float(N * H * W)
    sums = hsum.reshape(N * nT, CP)
    m2s = hm2.reshape(N * nT, CP)
    mu = jnp.sum(sums, axis=0) / total
    tile_mu = sums / cnt_tile
    var = (jnp.sum(m2s, axis=0)
           + cnt_tile * jnp.sum((tile_mu - mu[None, :]) ** 2, axis=0)) / total
    scale = gamma_p * lax.rsqrt(var + BN_EPS)
    shift = beta_p - mu * scale
    scale = scale.reshape(1, 1, CP)
    shift = shift.reshape(1, 1, CP)

    # ---- pass 2: BN apply + conv2 + residual ---------------------------------
    out_p = pl.pallas_call(
        bn_conv2_residual_kernel,
        grid=(N, nT),
        in_specs=[main_spec, top_spec, bot_spec, main_spec, w_spec,
                  vec_spec, vec_spec, vec_spec],
        out_specs=main_spec,
        out_shape=jax.ShapeDtypeStruct((N, H, W, CP), jnp.float32),
        compiler_params=cparams,
    )(h, h, h, x_p, w2_m, scale, shift, b2_m)

    return jnp.transpose(out_p[..., :C], (0, 3, 1, 2))             # back to NCHW


# ----------------------------- pure-JAX reference ----------------------------
def residual_block_ref(x_nchw, w1, b1, w2, b2, gamma, beta):
    dn = ('NCHW', 'OIHW', 'NCHW')
    h = lax.conv_general_dilated(x_nchw, w1, (1, 1), 'SAME', dimension_numbers=dn)
    h = h + b1[None, :, None, None]
    h = _gelu_exact(h)
    mu = jnp.mean(h, axis=(0, 2, 3), keepdims=True)
    var = jnp.mean((h - mu) ** 2, axis=(0, 2, 3), keepdims=True)
    h = (h - mu) * lax.rsqrt(var + BN_EPS)
    h = h * gamma[None, :, None, None] + beta[None, :, None, None]
    h = lax.conv_general_dilated(h, w2, (1, 1), 'SAME', dimension_numbers=dn)
    h = h + b2[None, :, None, None]
    return h + x_nchw


if __name__ == "__main__":
    N, C, H, W = 2, 4, 16, 16

    key = jax.random.PRNGKey(0)
    kx, kw1, kb1, kw2, kb2, kg, kb = jax.random.split(key, 7)

    # Deterministic synthetic parameters (PyTorch-like uniform fan-in init).
    bound = 1.0 / math.sqrt(C * 3 * 3)
    x = jax.random.normal(kx, (N, C, H, W), jnp.float32)
    w1 = jax.random.uniform(kw1, (C, C, 3, 3), jnp.float32, -bound, bound)
    b1 = jax.random.uniform(kb1, (C,), jnp.float32, -bound, bound)
    w2 = jax.random.uniform(kw2, (C, C, 3, 3), jnp.float32, -bound, bound)
    b2 = jax.random.uniform(kb2, (C,), jnp.float32, -bound, bound)
    gamma = 1.0 + 0.1 * jax.random.normal(kg, (C,), jnp.float32)
    beta = 0.1 * jax.random.normal(kb, (C,), jnp.float32)

    out = jax.jit(residual_block_pallas)(x, w1, b1, w2, b2, gamma, beta)
    out = jax.block_until_ready(out)

    ref = jax.block_until_ready(residual_block_ref(x, w1, b1, w2, b2, gamma, beta))
    # bf16 MXU operands / bf16 residual -> ~1e-2-scale error budget.
    np.testing.assert_allclose(np.asarray(out), np.asarray(ref), rtol=2e-2, atol=2e-2)

    print("KERNEL_OK")
</pallas_src>

<mosaic_0001>
module attributes {stable_mosaic.version = 11 : i64} {
  func.func @conv1_gelu_stats_kernel(%arg0: i32, %arg1: i32, %arg2: memref<1x4x16x128xbf16, #tpu.memory_space<vmem>>, %arg3: memref<1x1x16x128xbf16, #tpu.memory_space<vmem>>, %arg4: memref<1x1x16x128xbf16, #tpu.memory_space<vmem>>, %arg5: memref<384x384xbf16, #tpu.memory_space<vmem>>, %arg6: memref<1x1x128xf32, #tpu.memory_space<vmem>>, %arg7: memref<1x4x16x128xbf16, #tpu.memory_space<vmem>>, %arg8: memref<1x1x1x128xf32, #tpu.memory_space<vmem>>, %arg9: memref<1x1x1x128xf32, #tpu.memory_space<vmem>>) attributes {dimension_semantics = [#tpu.dimension_semantics<parallel>, #tpu.dimension_semantics<parallel>], iteration_bounds = array<i64: 2, 4>, scalar_prefetch = 0 : i64, scratch_operands = 0 : i64, tpu.core_type = #tpu.core_type<tc>, window_params = [{transform_indices = @transform_0, window_bounds = array<i64: 1, 4, 16, 128>}, {transform_indices = @transform_1, window_bounds = array<i64: 1, 1, 16, 128>}, {transform_indices = @transform_2, window_bounds = array<i64: 1, 1, 16, 128>}, {pipeline_mode = #tpu.pipeline_mode<synchronous>, transform_indices = @transform_3, window_bounds = array<i64: 384, 384>}, {pipeline_mode = #tpu.pipeline_mode<synchronous>, transform_indices = @transform_4, window_bounds = array<i64: 1, 1, 128>}, {transform_indices = @transform_5, window_bounds = array<i64: 1, 4, 16, 128>}, {transform_indices = @transform_6, window_bounds = array<i64: 1, 1, 1, 128>}, {transform_indices = @transform_7, window_bounds = array<i64: 1, 1, 1, 128>}]} {
    %c0_i32 = arith.constant 0 : i32
    %0 = arith.cmpi eq, %arg1, %c0_i32 : i32
    %c0 = arith.constant 0 : index
    %c0_0 = arith.constant 0 : index
    %c0_1 = arith.constant 0 : index
    %c0_2 = arith.constant 0 : index
    %1 = vector.load %arg3[%c0, %c0_0, %c0_1, %c0_2] : memref<1x1x16x128xbf16, #tpu.memory_space<vmem>>, vector<1x1x16x128xbf16>
    %2 = vector.shape_cast %1 : vector<1x1x16x128xbf16> to vector<1x16x128xbf16>
    %cst = arith.constant 0.000000e+00 : f32
    %3 = arith.truncf %cst : f32 to bf16
    %4 = vector.broadcast %3 : bf16 to vector<1x16x128xbf16>
    %5 = arith.select %0, %4, %2 : vector<1x16x128xbf16>
    %c3_i32 = arith.constant 3 : i32
    %6 = arith.cmpi eq, %arg1, %c3_i32 : i32
    %c0_3 = arith.constant 0 : index
    %c0_4 = arith.constant 0 : index
    %c0_5 = arith.constant 0 : index
    %c0_6 = arith.constant 0 : index
    %7 = vector.load %arg4[%c0_3, %c0_4, %c0_5, %c0_6] : memref<1x1x16x128xbf16, #tpu.memory_space<vmem>>, vector<1x1x16x128xbf16>
    %8 = vector.shape_cast %7 : vector<1x1x16x128xbf16> to vector<1x16x128xbf16>
    %cst_7 = arith.constant 0.000000e+00 : f32
    %9 = arith.truncf %cst_7 : f32 to bf16
    %10 = vector.broadcast %9 : bf16 to vector<1x16x128xbf16>
    %11 = arith.select %6, %10, %8 : vector<1x16x128xbf16>
    %c0_8 = arith.constant 0 : index
    %c0_9 = arith.constant 0 : index
    %c0_10 = arith.constant 0 : index
    %c0_11 = arith.constant 0 : index
    %12 = vector.load %arg2[%c0_8, %c0_9, %c0_10, %c0_11] : memref<1x4x16x128xbf16, #tpu.memory_space<vmem>>, vector<1x4x16x128xbf16>
    %13 = vector.shape_cast %12 : vector<1x4x16x128xbf16> to vector<4x16x128xbf16>
    %14 = tpu.concatenate %5, %13, %11 in 0 : vector<1x16x128xbf16>, vector<4x16x128xbf16>, vector<1x16x128xbf16> -> vector<6x16x128xbf16>
    %15 = vector.extract_strided_slice %14 {offsets = [0, 0, 0], sizes = [4, 16, 128], strides = [1, 1, 1]} : vector<6x16x128xbf16> to vector<4x16x128xbf16>
    %16 = vector.extract_strided_slice %14 {offsets = [1, 0, 0], sizes = [4, 16, 128], strides = [1, 1, 1]} : vector<6x16x128xbf16> to vector<4x16x128xbf16>
    %17 = vector.extract_strided_slice %14 {offsets = [2, 0, 0], sizes = [4, 16, 128], strides = [1, 1, 1]} : vector<6x16x128xbf16> to vector<4x16x128xbf16>
    %18 = tpu.concatenate %15, %16, %17 in 2 : vector<4x16x128xbf16>, vector<4x16x128xbf16>, vector<4x16x128xbf16> -> vector<4x16x384xbf16>
    %c0_12 = arith.constant 0 : index
    %c0_13 = arith.constant 0 : index
    %19 = vector.load %arg5[%c0_12, %c0_13] : memref<384x384xbf16, #tpu.memory_space<vmem>>, vector<384x384xbf16>
    %cst_14 = arith.constant dense<0.000000e+00> : vector<4x16x384xf32>
    %20 = tpu.matmul %18, %19, %cst_14 {dimension_numbers = #tpu.dot_dimension_numbers<[2], [0], [0, 1], [1], [0, 0, 0, 1, 1, 1], [], []>} : vector<4x16x384xbf16>, vector<384x384xbf16>, vector<4x16x384xf32> -> vector<4x16x384xf32>
    %21 = vector.extract_strided_slice %20 {offsets = [0, 0, 0], sizes = [4, 16, 128], strides = [1, 1, 1]} : vector<4x16x384xf32> to vector<4x16x128xf32>
    %22 = vector.extract_strided_slice %20 {offsets = [0, 0, 128], sizes = [4, 16, 128], strides = [1, 1, 1]} : vector<4x16x384xf32> to vector<4x16x128xf32>
    %23 = vector.extract_strided_slice %20 {offsets = [0, 0, 256], sizes = [4, 16, 128], strides = [1, 1, 1]} : vector<4x16x384xf32> to vector<4x16x128xf32>
    %cst_15 = arith.constant 0.000000e+00 : f32
    %24 = vector.broadcast %cst_15 : f32 to vector<4x1x128xf32>
    %25 = vector.extract_strided_slice %21 {offsets = [0, 0, 0], sizes = [4, 15, 128], strides = [1, 1, 1]} : vector<4x16x128xf32> to vector<4x15x128xf32>
    %26 = tpu.concatenate %24, %25 in 1 : vector<4x1x128xf32>, vector<4x15x128xf32> -> vector<4x16x128xf32>
    %27 = arith.addf %22, %26 : vector<4x16x128xf32>
    %28 = vector.extract_strided_slice %23 {offsets = [0, 1, 0], sizes = [4, 15, 128], strides = [1, 1, 1]} : vector<4x16x128xf32> to vector<4x15x128xf32>
    %29 = tpu.concatenate %28, %24 in 1 : vector<4x15x128xf32>, vector<4x1x128xf32> -> vector<4x16x128xf32>
    %30 = arith.addf %27, %29 : vector<4x16x128xf32>
    %c0_16 = arith.constant 0 : index
    %c0_17 = arith.constant 0 : index
    %c0_18 = arith.constant 0 : index
    %31 = vector.load %arg6[%c0_16, %c0_17, %c0_18] : memref<1x1x128xf32, #tpu.memory_space<vmem>>, vector<1x1x128xf32>
    %32 = vector.broadcast %31 : vector<1x1x128xf32> to vector<4x16x128xf32>
    %33 = arith.addf %30, %32 : vector<4x16x128xf32>
    %cst_19 = arith.constant 5.000000e-01 : f32
    %34 = vector.broadcast %cst_19 : f32 to vector<4x16x128xf32>
    %35 = arith.mulf %34, %33 : vector<4x16x128xf32>
    %cst_20 = arith.constant 0.707106769 : f32
    %36 = vector.broadcast %cst_20 : f32 to vector<4x16x128xf32>
    %37 = arith.mulf %33, %36 : vector<4x16x128xf32>
    %38 = math.erf %37 : vector<4x16x128xf32>
    %cst_21 = arith.constant 1.000000e+00 : f32
    %39 = vector.broadcast %cst_21 : f32 to vector<4x16x128xf32>
    %40 = arith.addf %39, %38 : vector<4x16x128xf32>
    %41 = arith.mulf %35, %40 : vector<4x16x128xf32>
    %42 = arith.truncf %41 : vector<4x16x128xf32> to vector<4x16x128xbf16>
    %c0_22 = arith.constant 0 : index
    %c0_23 = arith.constant 0 : index
    %c0_24 = arith.constant 0 : index
    %c0_25 = arith.constant 0 : index
    %43 = vector.load %arg7[%c0_22, %c0_23, %c0_24, %c0_25] : memref<1x4x16x128xbf16, #tpu.memory_space<vmem>>, vector<1x4x16x128xbf16>
    %44 = vector.shape_cast %43 : vector<1x4x16x128xbf16> to vector<4x16x128xbf16>
    %45 = vector.shape_cast %42 : vector<4x16x128xbf16> to vector<1x4x16x128xbf16>
    tpu.vector_store %arg7[%c0_22, %c0_23, %c0_24, %c0_25], %45 {strides = array<i32>} : memref<1x4x16x128xbf16, #tpu.memory_space<vmem>>, vector<1x4x16x128xbf16>,
    %46 = arith.extf %42 : vector<4x16x128xbf16> to vector<4x16x128xf32>
    %cst_26 = arith.constant dense<0.000000e+00> : vector<128xf32>
    %47 = vector.multi_reduction <add>, %46, %cst_26 [0, 1] : vector<4x16x128xf32> to vector<128xf32>
    %48 = vector.shape_cast %47 : vector<128xf32> to vector<1x1x128xf32>
    %cst_27 = arith.constant 1.562500e-02 : f32
    %49 = vector.broadcast %cst_27 : f32 to vector<1x1x128xf32>
    %50 = arith.mulf %48, %49 : vector<1x1x128xf32>
    %51 = vector.broadcast %50 : vector<1x1x128xf32> to vector<4x16x128xf32>
    %52 = arith.subf %46, %51 : vector<4x16x128xf32>
    %c0_28 = arith.constant 0 : index
    %c0_29 = arith.constant 0 : index
    %c0_30 = arith.constant 0 : index
    %c0_31 = arith.constant 0 : index
    %53 = vector.load %arg8[%c0_28, %c0_29, %c0_30, %c0_31] : memref<1x1x1x128xf32, #tpu.memory_space<vmem>>, vector<1x1x1x128xf32>
    %54 = vector.shape_cast %53 : vector<1x1x1x128xf32> to vector<1x1x128xf32>
    %55 = vector.shape_cast %48 : vector<1x1x128xf32> to vector<1x1x1x128xf32>
    tpu.vector_store %arg8[%c0_28, %c0_29, %c0_30, %c0_31], %55 {strides = array<i32>} : memref<1x1x1x128xf32, #tpu.memory_space<vmem>>, vector<1x1x1x128xf32>,
    %56 = arith.mulf %52, %52 : vector<4x16x128xf32>
    %cst_32 = arith.constant dense<0.000000e+00> : vector<128xf32>
    %57 = vector.multi_reduction <add>, %56, %cst_32 [0, 1] : vector<4x16x128xf32> to vector<128xf32>
    %58 = vector.shape_cast %57 : vector<128xf32> to vector<1x1x128xf32>
    %c0_33 = arith.constant 0 : index
    %c0_34 = arith.constant 0 : index
    %c0_35 = arith.constant 0 : index
    %c0_36 = arith.constant 0 : index
    %59 = vector.load %arg9[%c0_33, %c0_34, %c0_35, %c0_36] : memref<1x1x1x128xf32, #tpu.memory_space<vmem>>, vector<1x1x1x128xf32>
    %60 = vector.shape_cast %59 : vector<1x1x1x128xf32> to vector<1x1x128xf32>
    %61 = vector.shape_cast %58 : vector<1x1x128xf32> to vector<1x1x1x128xf32>
    tpu.vector_store %arg9[%c0_33, %c0_34, %c0_35, %c0_36], %61 {strides = array<i32>} : memref<1x1x1x128xf32, #tpu.memory_space<vmem>>, vector<1x1x1x128xf32>,
    return
  }
  func.func @transform_0(%arg0: i32, %arg1: i32) -> (i32, i32, i32, i32) {
    %c0_i32 = arith.constant 0 : i32
    %c0_i32_0 = arith.constant 0 : i32
    %c0_i32_1 = arith.constant 0 : i32
    return %arg0, %arg1, %c0_i32, %c0_i32_0 : i32, i32, i32, i32
  }
  func.func @transform_1(%arg0: i32, %arg1: i32) -> (i32, i32, i32, i32) {
    %c4_i32 = arith.constant 4 : i32
    %0 = arith.muli %arg1, %c4_i32 : i32
    %c1_i32 = arith.constant 1 : i32
    %1 = arith.subi %0, %c1_i32 : i32
    %c0_i32 = arith.constant 0 : i32
    %2 = arith.maxsi %1, %c0_i32 : i32
    %c0_i32_0 = arith.constant 0 : i32
    %c0_i32_1 = arith.constant 0 : i32
    %c0_i32_2 = arith.constant 0 : i32
    return %arg0, %2, %c0_i32_0, %c0_i32_1 : i32, i32, i32, i32
  }
  func.func @transform_2(%arg0: i32, %arg1: i32) -> (i32, i32, i32, i32) {
    %c1_i32 = arith.constant 1 : i32
    %0 = arith.addi %arg1, %c1_i32 : i32
    %c4_i32 = arith.constant 4 : i32
    %1 = arith.muli %0, %c4_i32 : i32
    %c15_i32 = arith.constant 15 : i32
    %2 = arith.minsi %1, %c15_i32 : i32
    %c0_i32 = arith.constant 0 : i32
    %c0_i32_0 = arith.constant 0 : i32
    %c0_i32_1 = arith.constant 0 : i32
    return %arg0, %2, %c0_i32, %c0_i32_0 : i32, i32, i32, i32
  }
  func.func @transform_3(%arg0: i32, %arg1: i32) -> (i32, i32) {
    %c0_i32 = arith.constant 0 : i32
    %c0_i32_0 = arith.constant 0 : i32
    %c0_i32_1 = arith.constant 0 : i32
    return %c0_i32, %c0_i32_0 : i32, i32
  }
  func.func @transform_4(%arg0: i32, %arg1: i32) -> (i32, i32, i32) {
    %c0_i32 = arith.constant 0 : i32
    %c0_i32_0 = arith.constant 0 : i32
    %c0_i32_1 = arith.constant 0 : i32
    %c0_i32_2 = arith.constant 0 : i32
    return %c0_i32, %c0_i32_0, %c0_i32_1 : i32, i32, i32
  }
  func.func @transform_5(%arg0: i32, %arg1: i32) -> (i32, i32, i32, i32) {
    %c0_i32 = arith.constant 0 : i32
    %c0_i32_0 = arith.constant 0 : i32
    %c0_i32_1 = arith.constant 0 : i32
    return %arg0, %arg1, %c0_i32, %c0_i32_0 : i32, i32, i32, i32
  }
  func.func @transform_6(%arg0: i32, %arg1: i32) -> (i32, i32, i32, i32) {
    %c0_i32 = arith.constant 0 : i32
    %c0_i32_0 = arith.constant 0 : i32
    %c0_i32_1 = arith.constant 0 : i32
    return %arg0, %arg1, %c0_i32, %c0_i32_0 : i32, i32, i32, i32
  }
  func.func @transform_7(%arg0: i32, %arg1: i32) -> (i32, i32, i32, i32) {
    %c0_i32 = arith.constant 0 : i32
    %c0_i32_0 = arith.constant 0 : i32
    %c0_i32_1 = arith.constant 0 : i32
    return %arg0, %arg1, %c0_i32, %c0_i32_0 : i32, i32, i32, i32
  }
}

module attributes {stable_mosaic.version = 11 : i64} {
  func.func @bn_conv2_residual_kernel(%arg0: i32, %arg1: i32, %arg2: memref<1x4x16x128xbf16, #tpu.memory_space<vmem>>, %arg3: memref<1x1x16x128xbf16, #tpu.memory_space<vmem>>, %arg4: memref<1x1x16x128xbf16, #tpu.memory_space<vmem>>, %arg5: memref<1x4x16x128xbf16, #tpu.memory_space<vmem>>, %arg6: memref<384x384xbf16, #tpu.memory_space<vmem>>, %arg7: memref<1x1x128xf32, #tpu.memory_space<vmem>>, %arg8: memref<1x1x128xf32, #tpu.memory_space<vmem>>, %arg9: memref<1x1x128xf32, #tpu.memory_space<vmem>>, %arg10: memref<1x4x16x128xf32, #tpu.memory_space<vmem>>) attributes {dimension_semantics = [#tpu.dimension_semantics<parallel>, #tpu.dimension_semantics<parallel>], iteration_bounds = array<i64: 2, 4>, scalar_prefetch = 0 : i64, scratch_operands = 0 : i64, tpu.core_type = #tpu.core_type<tc>, window_params = [{transform_indices = @transform_0, window_bounds = array<i64: 1, 4, 16, 128>}, {transform_indices = @transform_1, window_bounds = array<i64: 1, 1, 16, 128>}, {transform_indices = @transform_2, window_bounds = array<i64: 1, 1, 16, 128>}, {transform_indices = @transform_3, window_bounds = array<i64: 1, 4, 16, 128>}, {pipeline_mode = #tpu.pipeline_mode<synchronous>, transform_indices = @transform_4, window_bounds = array<i64: 384, 384>}, {pipeline_mode = #tpu.pipeline_mode<synchronous>, transform_indices = @transform_5, window_bounds = array<i64: 1, 1, 128>}, {pipeline_mode = #tpu.pipeline_mode<synchronous>, transform_indices = @transform_6, window_bounds = array<i64: 1, 1, 128>}, {pipeline_mode = #tpu.pipeline_mode<synchronous>, transform_indices = @transform_7, window_bounds = array<i64: 1, 1, 128>}, {transform_indices = @transform_8, window_bounds = array<i64: 1, 4, 16, 128>}]} {
    %c0 = arith.constant 0 : index
    %c0_0 = arith.constant 0 : index
    %c0_1 = arith.constant 0 : index
    %0 = vector.load %arg7[%c0, %c0_0, %c0_1] : memref<1x1x128xf32, #tpu.memory_space<vmem>>, vector<1x1x128xf32>
    %c0_2 = arith.constant 0 : index
    %c0_3 = arith.constant 0 : index
    %c0_4 = arith.constant 0 : index
    %1 = vector.load %arg8[%c0_2, %c0_3, %c0_4] : memref<1x1x128xf32, #tpu.memory_space<vmem>>, vector<1x1x128xf32>
    %c0_i32 = arith.constant 0 : i32
    %2 = arith.cmpi eq, %arg1, %c0_i32 : i32
    %c0_5 = arith.constant 0 : index
    %c0_6 = arith.constant 0 : index
    %c0_7 = arith.constant 0 : index
    %c0_8 = arith.constant 0 : index
    %3 = vector.load %arg3[%c0_5, %c0_6, %c0_7, %c0_8] : memref<1x1x16x128xbf16, #tpu.memory_space<vmem>>, vector<1x1x16x128xbf16>
    %4 = vector.shape_cast %3 : vector<1x1x16x128xbf16> to vector<1x16x128xbf16>
    %5 = arith.extf %4 : vector<1x16x128xbf16> to vector<1x16x128xf32>
    %6 = vector.broadcast %0 : vector<1x1x128xf32> to vector<1x16x128xf32>
    %7 = arith.mulf %5, %6 : vector<1x16x128xf32>
    %8 = vector.broadcast %1 : vector<1x1x128xf32> to vector<1x16x128xf32>
    %9 = arith.addf %7, %8 : vector<1x16x128xf32>
    %cst = arith.constant 0.000000e+00 : f32
    %10 = vector.broadcast %cst : f32 to vector<1x16x128xf32>
    %11 = arith.select %2, %10, %9 : vector<1x16x128xf32>
    %12 = arith.truncf %11 : vector<1x16x128xf32> to vector<1x16x128xbf16>
    %c0_9 = arith.constant 0 : index
    %c0_10 = arith.constant 0 : index
    %c0_11 = arith.constant 0 : index
    %c0_12 = arith.constant 0 : index
    %13 = vector.load %arg2[%c0_9, %c0_10, %c0_11, %c0_12] : memref<1x4x16x128xbf16, #tpu.memory_space<vmem>>, vector<1x4x16x128xbf16>
    %14 = vector.shape_cast %13 : vector<1x4x16x128xbf16> to vector<4x16x128xbf16>
    %15 = arith.extf %14 : vector<4x16x128xbf16> to vector<4x16x128xf32>
    %16 = vector.broadcast %0 : vector<1x1x128xf32> to vector<4x16x128xf32>
    %17 = arith.mulf %15, %16 : vector<4x16x128xf32>
    %18 = vector.broadcast %1 : vector<1x1x128xf32> to vector<4x16x128xf32>
    %19 = arith.addf %17, %18 : vector<4x16x128xf32>
    %20 = arith.truncf %19 : vector<4x16x128xf32> to vector<4x16x128xbf16>
    %c3_i32 = arith.constant 3 : i32
    %21 = arith.cmpi eq, %arg1, %c3_i32 : i32
    %c0_13 = arith.constant 0 : index
    %c0_14 = arith.constant 0 : index
    %c0_15 = arith.constant 0 : index
    %c0_16 = arith.constant 0 : index
    %22 = vector.load %arg4[%c0_13, %c0_14, %c0_15, %c0_16] : memref<1x1x16x128xbf16, #tpu.memory_space<vmem>>, vector<1x1x16x128xbf16>
    %23 = vector.shape_cast %22 : vector<1x1x16x128xbf16> to vector<1x16x128xbf16>
    %24 = arith.extf %23 : vector<1x16x128xbf16> to vector<1x16x128xf32>
    %25 = vector.broadcast %0 : vector<1x1x128xf32> to vector<1x16x128xf32>
    %26 = arith.mulf %24, %25 : vector<1x16x128xf32>
    %27 = vector.broadcast %1 : vector<1x1x128xf32> to vector<1x16x128xf32>
    %28 = arith.addf %26, %27 : vector<1x16x128xf32>
    %cst_17 = arith.constant 0.000000e+00 : f32
    %29 = vector.broadcast %cst_17 : f32 to vector<1x16x128xf32>
    %30 = arith.select %21, %29, %28 : vector<1x16x128xf32>
    %31 = arith.truncf %30 : vector<1x16x128xf32> to vector<1x16x128xbf16>
    %32 = tpu.concatenate %12, %20, %31 in 0 : vector<1x16x128xbf16>, vector<4x16x128xbf16>, vector<1x16x128xbf16> -> vector<6x16x128xbf16>
    %33 = vector.extract_strided_slice %32 {offsets = [0, 0, 0], sizes = [4, 16, 128], strides = [1, 1, 1]} : vector<6x16x128xbf16> to vector<4x16x128xbf16>
    %34 = vector.extract_strided_slice %32 {offsets = [1, 0, 0], sizes = [4, 16, 128], strides = [1, 1, 1]} : vector<6x16x128xbf16> to vector<4x16x128xbf16>
    %35 = vector.extract_strided_slice %32 {offsets = [2, 0, 0], sizes = [4, 16, 128], strides = [1, 1, 1]} : vector<6x16x128xbf16> to vector<4x16x128xbf16>
    %36 = tpu.concatenate %33, %34, %35 in 2 : vector<4x16x128xbf16>, vector<4x16x128xbf16>, vector<4x16x128xbf16> -> vector<4x16x384xbf16>
    %c0_18 = arith.constant 0 : index
    %c0_19 = arith.constant 0 : index
    %37 = vector.load %arg6[%c0_18, %c0_19] : memref<384x384xbf16, #tpu.memory_space<vmem>>, vector<384x384xbf16>
    %cst_20 = arith.constant dense<0.000000e+00> : vector<4x16x384xf32>
    %38 = tpu.matmul %36, %37, %cst_20 {dimension_numbers = #tpu.dot_dimension_numbers<[2], [0], [0, 1], [1], [0, 0, 0, 1, 1, 1], [], []>} : vector<4x16x384xbf16>, vector<384x384xbf16>, vector<4x16x384xf32> -> vector<4x16x384xf32>
    %39 = vector.extract_strided_slice %38 {offsets = [0, 0, 0], sizes = [4, 16, 128], strides = [1, 1, 1]} : vector<4x16x384xf32> to vector<4x16x128xf32>
    %40 = vector.extract_strided_slice %38 {offsets = [0, 0, 128], sizes = [4, 16, 128], strides = [1, 1, 1]} : vector<4x16x384xf32> to vector<4x16x128xf32>
    %41 = vector.extract_strided_slice %38 {offsets = [0, 0, 256], sizes = [4, 16, 128], strides = [1, 1, 1]} : vector<4x16x384xf32> to vector<4x16x128xf32>
    %cst_21 = arith.constant 0.000000e+00 : f32
    %42 = vector.broadcast %cst_21 : f32 to vector<4x1x128xf32>
    %43 = vector.extract_strided_slice %39 {offsets = [0, 0, 0], sizes = [4, 15, 128], strides = [1, 1, 1]} : vector<4x16x128xf32> to vector<4x15x128xf32>
    %44 = tpu.concatenate %42, %43 in 1 : vector<4x1x128xf32>, vector<4x15x128xf32> -> vector<4x16x128xf32>
    %45 = arith.addf %40, %44 : vector<4x16x128xf32>
    %46 = vector.extract_strided_slice %41 {offsets = [0, 1, 0], sizes = [4, 15, 128], strides = [1, 1, 1]} : vector<4x16x128xf32> to vector<4x15x128xf32>
    %47 = tpu.concatenate %46, %42 in 1 : vector<4x15x128xf32>, vector<4x1x128xf32> -> vector<4x16x128xf32>
    %48 = arith.addf %45, %47 : vector<4x16x128xf32>
    %c0_22 = arith.constant 0 : index
    %c0_23 = arith.constant 0 : index
    %c0_24 = arith.constant 0 : index
    %49 = vector.load %arg9[%c0_22, %c0_23, %c0_24] : memref<1x1x128xf32, #tpu.memory_space<vmem>>, vector<1x1x128xf32>
    %50 = vector.broadcast %49 : vector<1x1x128xf32> to vector<4x16x128xf32>
    %51 = arith.addf %48, %50 : vector<4x16x128xf32>
    %c0_25 = arith.constant 0 : index
    %c0_26 = arith.constant 0 : index
    %c0_27 = arith.constant 0 : index
    %c0_28 = arith.constant 0 : index
    %52 = vector.load %arg5[%c0_25, %c0_26, %c0_27, %c0_28] : memref<1x4x16x128xbf16, #tpu.memory_space<vmem>>, vector<1x4x16x128xbf16>
    %53 = vector.shape_cast %52 : vector<1x4x16x128xbf16> to vector<4x16x128xbf16>
    %54 = arith.extf %53 : vector<4x16x128xbf16> to vector<4x16x128xf32>
    %55 = arith.addf %51, %54 : vector<4x16x128xf32>
    %c0_29 = arith.constant 0 : index
    %c0_30 = arith.constant 0 : index
    %c0_31 = arith.constant 0 : index
    %c0_32 = arith.constant 0 : index
    %56 = vector.load %arg10[%c0_29, %c0_30, %c0_31, %c0_32] : memref<1x4x16x128xf32, #tpu.memory_space<vmem>>, vector<1x4x16x128xf32>
    %57 = vector.shape_cast %56 : vector<1x4x16x128xf32> to vector<4x16x128xf32>
    %58 = vector.shape_cast %55 : vector<4x16x128xf32> to vector<1x4x16x128xf32>
    tpu.vector_store %arg10[%c0_29, %c0_30, %c0_31, %c0_32], %58 {strides = array<i32>} : memref<1x4x16x128xf32, #tpu.memory_space<vmem>>, vector<1x4x16x128xf32>,
    return
  }
  func.func @transform_0(%arg0: i32, %arg1: i32) -> (i32, i32, i32, i32) {
    %c0_i32 = arith.constant 0 : i32
    %c0_i32_0 = arith.constant 0 : i32
    %c0_i32_1 = arith.constant 0 : i32
    return %arg0, %arg1, %c0_i32, %c0_i32_0 : i32, i32, i32, i32
  }
  func.func @transform_1(%arg0: i32, %arg1: i32) -> (i32, i32, i32, i32) {
    %c4_i32 = arith.constant 4 : i32
    %0 = arith.muli %arg1, %c4_i32 : i32
    %c1_i32 = arith.constant 1 : i32
    %1 = arith.subi %0, %c1_i32 : i32
    %c0_i32 = arith.constant 0 : i32
    %2 = arith.maxsi %1, %c0_i32 : i32
    %c0_i32_0 = arith.constant 0 : i32
    %c0_i32_1 = arith.constant 0 : i32
    %c0_i32_2 = arith.constant 0 : i32
    return %arg0, %2, %c0_i32_0, %c0_i32_1 : i32, i32, i32, i32
  }
  func.func @transform_2(%arg0: i32, %arg1: i32) -> (i32, i32, i32, i32) {
    %c1_i32 = arith.constant 1 : i32
    %0 = arith.addi %arg1, %c1_i32 : i32
    %c4_i32 = arith.constant 4 : i32
    %1 = arith.muli %0, %c4_i32 : i32
    %c15_i32 = arith.constant 15 : i32
    %2 = arith.minsi %1, %c15_i32 : i32
    %c0_i32 = arith.constant 0 : i32
    %c0_i32_0 = arith.constant 0 : i32
    %c0_i32_1 = arith.constant 0 : i32
    return %arg0, %2, %c0_i32, %c0_i32_0 : i32, i32, i32, i32
  }
  func.func @transform_3(%arg0: i32, %arg1: i32) -> (i32, i32, i32, i32) {
    %c0_i32 = arith.constant 0 : i32
    %c0_i32_0 = arith.constant 0 : i32
    %c0_i32_1 = arith.constant 0 : i32
    return %arg0, %arg1, %c0_i32, %c0_i32_0 : i32, i32, i32, i32
  }
  func.func @transform_4(%arg0: i32, %arg1: i32) -> (i32, i32) {
    %c0_i32 = arith.constant 0 : i32
    %c0_i32_0 = arith.constant 0 : i32
    %c0_i32_1 = arith.constant 0 : i32
    return %c0_i32, %c0_i32_0 : i32, i32
  }
  func.func @transform_5(%arg0: i32, %arg1: i32) -> (i32, i32, i32) {
    %c0_i32 = arith.constant 0 : i32
    %c0_i32_0 = arith.constant 0 : i32
    %c0_i32_1 = arith.constant 0 : i32
    %c0_i32_2 = arith.constant 0 : i32
    return %c0_i32, %c0_i32_0, %c0_i32_1 : i32, i32, i32
  }
  func.func @transform_6(%arg0: i32, %arg1: i32) -> (i32, i32, i32) {
    %c0_i32 = arith.constant 0 : i32
    %c0_i32_0 = arith.constant 0 : i32
    %c0_i32_1 = arith.constant 0 : i32
    %c0_i32_2 = arith.constant 0 : i32
    return %c0_i32, %c0_i32_0, %c0_i32_1 : i32, i32, i32
  }
  func.func @transform_7(%arg0: i32, %arg1: i32) -> (i32, i32, i32) {
    %c0_i32 = arith.constant 0 : i32
    %c0_i32_0 = arith.constant 0 : i32
    %c0_i32_1 = arith.constant 0 : i32
    %c0_i32_2 = arith.constant 0 : i32
    return %c0_i32, %c0_i32_0, %c0_i32_1 : i32, i32, i32
  }
  func.func @transform_8(%arg0: i32, %arg1: i32) -> (i32, i32, i32, i32) {
    %c0_i32 = arith.constant 0 : i32
    %c0_i32_0 = arith.constant 0 : i32
    %c0_i32_1 = arith.constant 0 : i32
    return %arg0, %arg1, %c0_i32, %c0_i32_0 : i32, i32, i32, i32
  }
}

</mosaic_0001>

<llo_original>
// kernel: residual_block_pallas.3
$region0: #{residual_block_pallas.3}
  #allocation0 [shape = 'u32[]', space=smem, size = 0x4, offset = 0x4, fixed_abs, tag = 'smem constant byte address 0x4 - core index']
  #allocation1 [shape = 'u32[144,128]{1,0:T(1,128)}', space=vmem, size = 0x12000, scoped, tag = 'internal scratch']
  %s0 = inlined_call_operand.vmem [shape: bf16[2,16,16,128], index: 0, kind: input, shape index: {}, may-alias: {0,1,2}]
  %s1 = inlined_call_operand.vmem [shape: bf16[2,16,16,128], index: 1, kind: input, shape index: {}, may-alias: {0,1,2}]
  %s2 = inlined_call_operand.vmem [shape: bf16[2,16,16,128], index: 2, kind: input, shape index: {}, may-alias: {0,1,2}]
  %s3 = inlined_call_operand.vmem [shape: bf16[2,16,16,128], index: 3, kind: input, shape index: {}]
  %s4 = inlined_call_operand.vmem [shape: bf16[384,384], index: 4, kind: input, shape index: {}]
  %s5 = inlined_call_operand.vmem [shape: f32[1,1,128], index: 5, kind: input, shape index: {}]
  %s6 = inlined_call_operand.vmem [shape: f32[1,1,128], index: 6, kind: input, shape index: {}]
  %s7 = inlined_call_operand.vmem [shape: f32[1,1,128], index: 7, kind: input, shape index: {}]
  %s8 = inlined_call_operand.vmem [shape: f32[2,16,16,128], index: 8, kind: output, shape index: {}]
  %s9 = sld [smem:[#allocation0]]
  $region65: #{residual_block_pallas.3} parent=0
    _
  %s11 = ssub.s32 1, %s9
  %s12 = scalar_select 0, %s11, %s9
  loop: start=0, step=1, limit=10
  $region2: #{residual_block_pallas.3} parent=0 // loop_pre_header
    _
  $region3: #{residual_block_pallas.3} parent=0 // loop_header
    %s14 = sphi 0, %s18
    %p15 = scmp.ge.s32.totalorder %s14, 10
    %s21 = sphi 0, %s33
    %s22 = sphi 0, %s29
    %s23 = sphi 0, %s21
    %s24 = sphi 0, %s22
    %s25 = sphi 0, %s23
    %s26 = sphi 0, %s24
    %s38 = sphi 0, %s40
    %s41 = sphi 0, %s38
    %s42 = sphi 0, %s41
    %s58 = sphi 0, %s42
    %s74 = sphi 0, %s76
    %s77 = sphi 0, %s74
    %s78 = sphi 0, %s77
    %s94 = sphi 0, %s78
    %s110 = sphi 0, %s112
    %s113 = sphi 0, %s110
    %s114 = sphi 0, %s113
    %s130 = sphi 0, %s114
    %s138 = sphi 0, %s140
    %s141 = sphi 0, %s138
    %s142 = sphi 0, %s141
    %s158 = sphi 0, %s142
    %s162 = sphi 0, %s162
    %s164 = sphi 0, %s162
    %s165 = sphi 0, %s164
    %s179 = sphi 0, %s165
    %s183 = sphi 0, %s183
    %s185 = sphi 0, %s183
    %s186 = sphi 0, %s185
    %s200 = sphi 0, %s186
    %s204 = sphi 0, %s204
    %s206 = sphi 0, %s204
    %s207 = sphi 0, %s206
    %s221 = sphi 0, %s207
    %s225 = sphi 0, %s225
    %s227 = sphi 0, %s225
    %s228 = sphi 0, %s227
    %s242 = sphi 0, %s228
    %s250 = sphi 0, %s252
    %s253 = sphi 0, %s250
    %s254 = sphi 0, %s253
    %s270 = sphi 0, %s254
  $region4: #{residual_block_pallas.3} parent=0 // loop_header_branch
    %17 = sbr.rel (%p15) target = $region8
  $region5: #{residual_block_pallas.3} parent=0 // loop_body
    %s19 = ssub.s32 %s14, 1
    %s20 = ssub.s32 %s14, 2
    %s27 = sadd.s32 1, %s22
    %p28 = scmp.ge.s32.totalorder %s27, 4
    %s29 = scalar_select %p28, 0, %s27
    %s30 = sadd.s32 1, %s21
    %s31 = scalar_select %p28, %s30, %s21
    %p32 = scmp.ge.s32.totalorder %s31, 2
    %s33 = scalar_select %p32, 0, %s31
    %s34 = ssub.s32 %s21, %s33
    %s35 = ssub.s32 %s22, %s29
    %s36 = sor.u32 %s34, %s35
    %p37 = scmp.eq.s32.totalorder %s36, 0
    %s39 = sadd.s32 %s38, 1
    %s40 = scalar_select %p37, %s38, %s39
    %p43 = pneg %p37
    %p44 = scmp.eq.s32.totalorder %s14, 7
    %p45 = por %p43, %p44
    %p46 = scmp.ne.s32.totalorder %s38, %s41
    %p47 = scmp.eq.s32.totalorder %s14, 0
    %p48 = por %p46, %p47
    %p49 = scmp.ne.s32.totalorder %s38, %s41
    %p50 = scmp.eq.s32.totalorder %s19, 7
    %p51 = por %p49, %p50
    %p52 = scmp.ne.s32.totalorder %s41, %s42
    %p53 = scmp.eq.s32.totalorder %s19, 0
    %p54 = por %p52, %p53
    %p55 = scmp.ne.s32.totalorder %s41, %s42
    %p56 = scmp.eq.s32.totalorder %s20, 7
    %p57 = por %p55, %p56
    %p59 = scmp.ne.s32.totalorder %s42, %s58
    %p60 = scmp.eq.s32.totalorder %s20, 0
    %p61 = por %p59, %p60
    %s62 = smul.u32 %s22, 4
    %s63 = ssub.s32 %s62, 1
    %p64 = scmp.gt.s32.totalorder %s63, 0
    %s65 = scalar_select %p64, %s63, 0
    %s66 = smul.u32 %s29, 4
    %s67 = ssub.s32 %s66, 1
    %p68 = scmp.gt.s32.totalorder %s67, 0
    %s69 = scalar_select %p68, %s67, 0
    %s70 = ssub.s32 %s21, %s33
    %s71 = ssub.s32 %s65, %s69
    %s72 = sor.u32 %s70, %s71
    %p73 = scmp.eq.s32.totalorder %s72, 0
    %s75 = sadd.s32 %s74, 1
    %s76 = scalar_select %p73, %s74, %s75
    %p79 = pneg %p73
    %p80 = scmp.eq.s32.totalorder %s14, 7
    %p81 = por %p79, %p80
    %p82 = scmp.ne.s32.totalorder %s74, %s77
    %p83 = scmp.eq.s32.totalorder %s14, 0
    %p84 = por %p82, %p83
    %p85 = scmp.ne.s32.totalorder %s74, %s77
    %p86 = scmp.eq.s32.totalorder %s19, 7
    %p87 = por %p85, %p86
    %p88 = scmp.ne.s32.totalorder %s77, %s78
    %p89 = scmp.eq.s32.totalorder %s19, 0
    %p90 = por %p88, %p89
    %p91 = scmp.ne.s32.totalorder %s77, %s78
    %p92 = scmp.eq.s32.totalorder %s20, 7
    %p93 = por %p91, %p92
    %p95 = scmp.ne.s32.totalorder %s78, %s94
    %p96 = scmp.eq.s32.totalorder %s20, 0
    %p97 = por %p95, %p96
    %s98 = sadd.s32 %s22, 1
    %s99 = smul.u32 %s98, 4
    %p100 = scmp.lt.s32.totalorder %s99, 15
    %s101 = scalar_select %p100, %s99, 15
    %s102 = sadd.s32 %s29, 1
    %s103 = smul.u32 %s102, 4
    %p104 = scmp.lt.s32.totalorder %s103, 15
    %s105 = scalar_select %p104, %s103, 15
    %s106 = ssub.s32 %s21, %s33
    %s107 = ssub.s32 %s101, %s105
    %s108 = sor.u32 %s106, %s107
    %p109 = scmp.eq.s32.totalorder %s108, 0
    %s111 = sadd.s32 %s110, 1
    %s112 = scalar_select %p109, %s110, %s111
    %p115 = pneg %p109
    %p116 = scmp.eq.s32.totalorder %s14, 7
    %p117 = por %p115, %p116
    %p118 = scmp.ne.s32.totalorder %s110, %s113
    %p119 = scmp.eq.s32.totalorder %s14, 0
    %p120 = por %p118, %p119
    %p121 = scmp.ne.s32.totalorder %s110, %s113
    %p122 = scmp.eq.s32.totalorder %s19, 7
    %p123 = por %p121, %p122
    %p124 = scmp.ne.s32.totalorder %s113, %s114
    %p125 = scmp.eq.s32.totalorder %s19, 0
    %p126 = por %p124, %p125
    %p127 = scmp.ne.s32.totalorder %s113, %s114
    %p128 = scmp.eq.s32.totalorder %s20, 7
    %p129 = por %p127, %p128
    %p131 = scmp.ne.s32.totalorder %s114, %s130
    %p132 = scmp.eq.s32.totalorder %s20, 0
    %p133 = por %p131, %p132
    %s134 = ssub.s32 %s21, %s33
    %s135 = ssub.s32 %s22, %s29
    %s136 = sor.u32 %s134, %s135
    %p137 = scmp.eq.s32.totalorder %s136, 0
    %s139 = sadd.s32 %s138, 1
    %s140 = scalar_select %p137, %s138, %s139
    %p143 = pneg %p137
    %p144 = scmp.eq.s32.totalorder %s14, 7
    %p145 = por %p143, %p144
    %p146 = scmp.ne.s32.totalorder %s138, %s141
    %p147 = scmp.eq.s32.totalorder %s14, 0
    %p148 = por %p146, %p147
    %p149 = scmp.ne.s32.totalorder %s138, %s141
    %p150 = scmp.eq.s32.totalorder %s19, 7
    %p151 = por %p149, %p150
    %p152 = scmp.ne.s32.totalorder %s141, %s142
    %p153 = scmp.eq.s32.totalorder %s19, 0
    %p154 = por %p152, %p153
    %p155 = scmp.ne.s32.totalorder %s141, %s142
    %p156 = scmp.eq.s32.totalorder %s20, 7
    %p157 = por %p155, %p156
    %p159 = scmp.ne.s32.totalorder %s142, %s158
    %p160 = scmp.eq.s32.totalorder %s20, 0
    %p161 = por %p159, %p160
    %s163 = sadd.s32 %s162, 1
    %p166 = scmp.eq.s32.totalorder %s14, 7
    %p167 = scmp.ne.s32.totalorder %s162, %s164
    %p168 = scmp.eq.s32.totalorder %s14, 0
    %p169 = por %p167, %p168
    %p170 = scmp.ne.s32.totalorder %s162, %s164
    %p171 = scmp.eq.s32.totalorder %s19, 7
    %p172 = por %p170, %p171
    %p173 = scmp.ne.s32.totalorder %s164, %s165
    %p174 = scmp.eq.s32.totalorder %s19, 0
    %p175 = por %p173, %p174
    %p176 = scmp.ne.s32.totalorder %s164, %s165
    %p177 = scmp.eq.s32.totalorder %s20, 7
    %p178 = por %p176, %p177
    %p180 = scmp.ne.s32.totalorder %s165, %s179
    %p181 = scmp.eq.s32.totalorder %s20, 0
    %p182 = por %p180, %p181
    %s184 = sadd.s32 %s183, 1
    %p187 = scmp.eq.s32.totalorder %s14, 7
    %p188 = scmp.ne.s32.totalorder %s183, %s185
    %p189 = scmp.eq.s32.totalorder %s14, 0
    %p190 = por %p188, %p189
    %p191 = scmp.ne.s32.totalorder %s183, %s185
    %p192 = scmp.eq.s32.totalorder %s19, 7
    %p193 = por %p191, %p192
    %p194 = scmp.ne.s32.totalorder %s185, %s186
    %p195 = scmp.eq.s32.totalorder %s19, 0
    %p196 = por %p194, %p195
    %p197 = scmp.ne.s32.totalorder %s185, %s186
    %p198 = scmp.eq.s32.totalorder %s20, 7
    %p199 = por %p197, %p198
    %p201 = scmp.ne.s32.totalorder %s186, %s200
    %p202 = scmp.eq.s32.totalorder %s20, 0
    %p203 = por %p201, %p202
    %s205 = sadd.s32 %s204, 1
    %p208 = scmp.eq.s32.totalorder %s14, 7
    %p209 = scmp.ne.s32.totalorder %s204, %s206
    %p210 = scmp.eq.s32.totalorder %s14, 0
    %p211 = por %p209, %p210
    %p212 = scmp.ne.s32.totalorder %s204, %s206
    %p213 = scmp.eq.s32.totalorder %s19, 7
    %p214 = por %p212, %p213
    %p215 = scmp.ne.s32.totalorder %s206, %s207
    %p216 = scmp.eq.s32.totalorder %s19, 0
    %p217 = por %p215, %p216
    %p218 = scmp.ne.s32.totalorder %s206, %s207
    %p219 = scmp.eq.s32.totalorder %s20, 7
    %p220 = por %p218, %p219
    %p222 = scmp.ne.s32.totalorder %s207, %s221
    %p223 = scmp.eq.s32.totalorder %s20, 0
    %p224 = por %p222, %p223
    %s226 = sadd.s32 %s225, 1
    %p229 = scmp.eq.s32.totalorder %s14, 7
    %p230 = scmp.ne.s32.totalorder %s225, %s227
    %p231 = scmp.eq.s32.totalorder %s14, 0
    %p232 = por %p230, %p231
    %p233 = scmp.ne.s32.totalorder %s225, %s227
    %p234 = scmp.eq.s32.totalorder %s19, 7
    %p235 = por %p233, %p234
    %p236 = scmp.ne.s32.totalorder %s227, %s228
    %p237 = scmp.eq.s32.totalorder %s19, 0
    %p238 = por %p236, %p237
    %p239 = scmp.ne.s32.totalorder %s227, %s228
    %p240 = scmp.eq.s32.totalorder %s20, 7
    %p241 = por %p239, %p240
    %p243 = scmp.ne.s32.totalorder %s228, %s242
    %p244 = scmp.eq.s32.totalorder %s20, 0
    %p245 = por %p243, %p244
    %s246 = ssub.s32 %s21, %s33
    %s247 = ssub.s32 %s22, %s29
    %s248 = sor.u32 %s246, %s247
    %p249 = scmp.eq.s32.totalorder %s248, 0
    %s251 = sadd.s32 %s250, 1
    %s252 = scalar_select %p249, %s250, %s251
    %p255 = pneg %p249
    %p256 = scmp.eq.s32.totalorder %s14, 7
    %p257 = por %p255, %p256
    %p258 = scmp.ne.s32.totalorder %s250, %s253
    %p259 = scmp.eq.s32.totalorder %s14, 0
    %p260 = por %p258, %p259
    %p261 = scmp.ne.s32.totalorder %s250, %s253
    %p262 = scmp.eq.s32.totalorder %s19, 7
    %p263 = por %p261, %p262
    %p264 = scmp.ne.s32.totalorder %s253, %s254
    %p265 = scmp.eq.s32.totalorder %s19, 0
    %p266 = por %p264, %p265
    %p267 = scmp.ne.s32.totalorder %s253, %s254
    %p268 = scmp.eq.s32.totalorder %s20, 7
    %p269 = por %p267, %p268
    %p271 = scmp.ne.s32.totalorder %s254, %s270
    %p272 = scmp.eq.s32.totalorder %s20, 0
    %p273 = por %p271, %p272
    %p274 = scmp.le.s32.totalorder 1, %s14
    %p275 = scmp.lt.s32.totalorder %s14, 9
    %p276 = pnand %p274, %p275
    %p277 = pneg %p276
    // Predicated region
    $region9: #{residual_block_pallas.3} parent=5 // pred_check
      _
    $region10: #{residual_block_pallas.3} parent=5 // pred_check_branch
      %279 = sbr.rel (%p276) target = $region12
    $region11: #{residual_block_pallas.3} parent=5 // pred_region
      %s280 = ssub.s32 %s14, 1
      // Predicated region
      $region13: #{residual_block_pallas.3} parent=11 // pred_check
        %p281 = pneg %p175
      $region14: #{residual_block_pallas.3} parent=11 // pred_check_branch
        %283 = sbr.rel (%p281) target = $region16
      $region15: #{residual_block_pallas.3} parent=11 // pred_region
        _
      $region16: #{residual_block_pallas.3} parent=11 // pred_fallthru
        _
      // Predicated region
      $region17: #{residual_block_pallas.3} parent=11 // pred_check
        %p284 = pneg %p196
      $region18: #{residual_block_pallas.3} parent=11 // pred_check_branch
        %286 = sbr.rel (%p284) target = $region20
      $region19: #{residual_block_pallas.3} parent=11 // pred_region
        _
      $region20: #{residual_block_pallas.3} parent=11 // pred_fallthru
        _
      // Predicated region
      $region21: #{residual_block_pallas.3} parent=11 // pred_check
        %p287 = pneg %p217
      $region22: #{residual_block_pallas.3} parent=11 // pred_check_branch
        %289 = sbr.rel (%p287) target = $region24
      $region23: #{residual_block_pallas.3} parent=11 // pred_region
        _
      $region24: #{residual_block_pallas.3} parent=11 // pred_fallthru
        _
      // Predicated region
      $region25: #{residual_block_pallas.3} parent=11 // pred_check
        %p290 = pneg %p238
      $region26: #{residual_block_pallas.3} parent=11 // pred_check_branch
        %292 = sbr.rel (%p290) target = $region28
      $region27: #{residual_block_pallas.3} parent=11 // pred_region
        _
      $region28: #{residual_block_pallas.3} parent=11 // pred_fallthru
        _
    $region12: #{residual_block_pallas.3} parent=5 // pred_fallthru
      _
    %p293 = scmp.lt.s32.totalorder %s14, 8
    // Predicated region
    $region29: #{residual_block_pallas.3} parent=5 // pred_check
      %p294 = pneg %p293
    $region30: #{residual_block_pallas.3} parent=5 // pred_check_branch
      %296 = sbr.rel (%p294) target = $region32
    $region31: #{residual_block_pallas.3} parent=5 // pred_region
      // Predicated region
      $region33: #{residual_block_pallas.3} parent=31 // pred_check
        %p297 = pneg %p48
      $region34: #{residual_block_pallas.3} parent=31 // pred_check_branch
        %299 = sbr.rel (%p297) target = $region36
      $region35: #{residual_block_pallas.3} parent=31 // pred_region
        %s300 = smul.u32 4, %s22
        %p301 = scmp.lt.s32.totalorder %s21, 1
        %s302 = scalar_select %p301, %s21, 1
        %p303 = scmp.lt.s32.totalorder %s300, 15
        %s304 = scalar_select %p303, %s300, 15
        %s305 = smul.addr %s304, 2
        %s306 = smul.addr %s302, 32
        %s307 = sadd.s32 %s305, %s306
        %s308 = smul.addr %s307, 4
        %s309 = scalar_lea.vmem %s0, %s308
        %s310 = smul.u32 4, %s22
      $region36: #{residual_block_pallas.3} parent=31 // pred_fallthru
        _
      // Predicated region
      $region37: #{residual_block_pallas.3} parent=31 // pred_check
        %p311 = pneg %p84
      $region38: #{residual_block_pallas.3} parent=31 // pred_check_branch
        %313 = sbr.rel (%p311) target = $region40
      $region39: #{residual_block_pallas.3} parent=31 // pred_region
        %s314 = smul.u32 %s22, 4
        %s315 = ssub.s32 %s314, 1
        %p316 = scmp.gt.s32.totalorder %s315, 0
        %s317 = scalar_select %p316, %s315, 0
        %p318 = scmp.lt.s32.totalorder %s21, 1
        %s319 = scalar_select %p318, %s21, 1
        %p320 = scmp.lt.s32.totalorder %s317, 15
        %s321 = scalar_select %p320, %s317, 15
        %s322 = smul.addr %s321, 2
        %s323 = smul.addr %s319, 32
        %s324 = sadd.s32 %s322, %s323
        %s325 = smul.addr %s324, 4
        %s326 = scalar_lea.vmem %s1, %s325
        %s327 = smul.u32 %s22, 4
        %s328 = ssub.s32 %s327, 1
        %p329 = scmp.gt.s32.totalorder %s328, 0
        %s330 = scalar_select %p329, %s328, 0
      $region40: #{residual_block_pallas.3} parent=31 // pred_fallthru
        _
      // Predicated region
      $region41: #{residual_block_pallas.3} parent=31 // pred_check
        %p331 = pneg %p120
      $region42: #{residual_block_pallas.3} parent=31 // pred_check_branch
        %333 = sbr.rel (%p331) target = $region44
      $region43: #{residual_block_pallas.3} parent=31 // pred_region
        %s334 = sadd.s32 %s22, 1
        %s335 = smul.u32 %s334, 4
        %p336 = scmp.lt.s32.totalorder %s335, 15
        %s337 = scalar_select %p336, %s335, 15
        %p338 = scmp.lt.s32.totalorder %s21, 1
        %s339 = scalar_select %p338, %s21, 1
        %p340 = scmp.lt.s32.totalorder %s337, 15
        %s341 = scalar_select %p340, %s337, 15
        %s342 = smul.addr %s341, 2
        %s343 = smul.addr %s339, 32
        %s344 = sadd.s32 %s342, %s343
        %s345 = smul.addr %s344, 4
        %s346 = scalar_lea.vmem %s2, %s345
        %s347 = sadd.s32 %s22, 1
        %s348 = smul.u32 %s347, 4
        %p349 = scmp.lt.s32.totalorder %s348, 15
        %s350 = scalar_select %p349, %s348, 15
      $region44: #{residual_block_pallas.3} parent=31 // pred_fallthru
        _
      // Predicated region
      $region45: #{residual_block_pallas.3} parent=31 // pred_check
        %p351 = pneg %p148
      $region46: #{residual_block_pallas.3} parent=31 // pred_check_branch
        %353 = sbr.rel (%p351) target = $region48
      $region47: #{residual_block_pallas.3} parent=31 // pred_region
        %s354 = smul.u32 4, %s22
        %p355 = scmp.lt.s32.totalorder %s21, 1
        %s356 = scalar_select %p355, %s21, 1
        %p357 = scmp.lt.s32.totalorder %s354, 15
        %s358 = scalar_select %p357, %s354, 15
        %s359 = smul.addr %s358, 2
        %s360 = smul.addr %s356, 32
        %s361 = sadd.s32 %s359, %s360
        %s362 = smul.addr %s361, 4
        %s363 = scalar_lea.vmem %s3, %s362
        %s364 = smul.u32 4, %s22
      $region48: #{residual_block_pallas.3} parent=31 // pred_fallthru
        _
    $region32: #{residual_block_pallas.3} parent=5 // pred_fallthru
      _
    %p365 = scmp.le.s32.totalorder 1, %s14
    %p366 = scmp.lt.s32.totalorder %s14, 9
    %p367 = pnand %p365, %p366
    %p368 = pneg %p367
    // Predicated region
    $region49: #{residual_block_pallas.3} parent=5 // pred_check
      _
    $region50: #{residual_block_pallas.3} parent=5 // pred_check_branch
      %370 = sbr.rel (%p367) target = $region52
    $region51: #{residual_block_pallas.3} parent=5 // pred_region
      %s371 = ssub.s32 %s14, 1
      %s372 = smul.u32 4, %s24
      %p373 = scmp.lt.s32.totalorder %s23, 1
      %s374 = scalar_select %p373, %s23, 1
      %p375 = scmp.lt.s32.totalorder %s372, 15
      %s376 = scalar_select %p375, %s372, 15
      %s377 = smul.addr %s376, 2
      %s378 = smul.addr %s374, 32
      %s379 = sadd.s32 %s377, %s378
      %s380 = smul.addr %s379, 4
      %s381 = scalar_lea.vmem %s0, %s380
      %p382 = pneg %p54
      %p383 = pneg %p51
      %s384 = smul.u32 %s24, 4
      %s385 = ssub.s32 %s384, 1
      %p386 = scmp.gt.s32.totalorder %s385, 0
      %s387 = scalar_select %p386, %s385, 0
      %p388 = scmp.lt.s32.totalorder %s23, 1
      %s389 = scalar_select %p388, %s23, 1
      %p390 = scmp.lt.s32.totalorder %s387, 15
      %s391 = scalar_select %p390, %s387, 15
      %s392 = smul.addr %s391, 2
      %s393 = smul.addr %s389, 32
      %s394 = sadd.s32 %s392, %s393
      %s395 = smul.addr %s394, 4
      %s396 = scalar_lea.vmem %s1, %s395
      %p397 = pneg %p90
      %p398 = pneg %p87
      %s399 = sadd.s32 %s24, 1
      %s400 = smul.u32 %s399, 4
      %p401 = scmp.lt.s32.totalorder %s400, 15
      %s402 = scalar_select %p401, %s400, 15
      %p403 = scmp.lt.s32.totalorder %s23, 1
      %s404 = scalar_select %p403, %s23, 1
      %p405 = scmp.lt.s32.totalorder %s402, 15
      %s406 = scalar_select %p405, %s402, 15
      %s407 = smul.addr %s406, 2
      %s408 = smul.addr %s404, 32
      %s409 = sadd.s32 %s407, %s408
      %s410 = smul.addr %s409, 4
      %s411 = scalar_lea.vmem %s2, %s410
      %p412 = pneg %p126
      %p413 = pneg %p123
      %s414 = smul.u32 4, %s24
      %p415 = scmp.lt.s32.totalorder %s23, 1
      %s416 = scalar_select %p415, %s23, 1
      %p417 = scmp.lt.s32.totalorder %s414, 15
      %s418 = scalar_select %p417, %s414, 15
      %s419 = smul.addr %s418, 2
      %s420 = smul.addr %s416, 32
      %s421 = sadd.s32 %s419, %s420
      %s422 = smul.addr %s421, 4
      %s423 = scalar_lea.vmem %s3, %s422
      %p424 = pneg %p154
      %p425 = pneg %p151
      %p426 = pneg %p175
      %p427 = pneg %p172
      %p428 = pneg %p196
      %p429 = pneg %p193
      %p430 = pneg %p217
      %p431 = pneg %p214
      %p432 = pneg %p238
      %p433 = pneg %p235
      %p434 = pneg %p266
      %p435 = pneg %p263
      %s436 = smul.u32 4, %s24
      %p437 = scmp.lt.s32.totalorder %s23, 1
      %s438 = scalar_select %p437, %s23, 1
      %p439 = scmp.lt.s32.totalorder %s436, 15
      %s440 = scalar_select %p439, %s436, 15
      %s441 = smul.addr %s440, 2
      %s442 = smul.addr %s438, 32
      %s443 = sadd.s32 %s441, %s442
      %s444 = smul.addr %s443, 8
      %s445 = scalar_lea.vmem %s8, %s444
      %s446 = smul.u32 4, %s24
      %p447 = scmp.lt.s32.totalorder %s23, 1
      %s448 = scalar_select %p447, %s23, 1
      %p449 = scmp.lt.s32.totalorder %s446, 15
      %s450 = scalar_select %p449, %s446, 15
      %s451 = smul.addr %s450, 2
      %s452 = smul.addr %s448, 32
      %s453 = sadd.s32 %s451, %s452
      %s454 = smul.addr %s453, 4
      %s455 = scalar_lea.vmem %s0, %s454
      %s456 = smul.u32 4, %s24
      %s457 = smul.u32 %s24, 4
      %s458 = ssub.s32 %s457, 1
      %p459 = scmp.gt.s32.totalorder %s458, 0
      %s460 = scalar_select %p459, %s458, 0
      %p461 = scmp.lt.s32.totalorder %s23, 1
      %s462 = scalar_select %p461, %s23, 1
      %p463 = scmp.lt.s32.totalorder %s460, 15
      %s464 = scalar_select %p463, %s460, 15
      %s465 = smul.addr %s464, 2
      %s466 = smul.addr %s462, 32
      %s467 = sadd.s32 %s465, %s466
      %s468 = smul.addr %s467, 4
      %s469 = scalar_lea.vmem %s1, %s468
      %s470 = smul.u32 %s24, 4
      %s471 = ssub.s32 %s470, 1
      %p472 = scmp.gt.s32.totalorder %s471, 0
      %s473 = scalar_select %p472, %s471, 0
      %s474 = sadd.s32 %s24, 1
      %s475 = smul.u32 %s474, 4
      %p476 = scmp.lt.s32.totalorder %s475, 15
      %s477 = scalar_select %p476, %s475, 15
      %p478 = scmp.lt.s32.totalorder %s23, 1
      %s479 = scalar_select %p478, %s23, 1
      %p480 = scmp.lt.s32.totalorder %s477, 15
      %s481 = scalar_select %p480, %s477, 15
      %s482 = smul.addr %s481, 2
      %s483 = smul.addr %s479, 32
      %s484 = sadd.s32 %s482, %s483
      %s485 = smul.addr %s484, 4
      %s486 = scalar_lea.vmem %s2, %s485
      %s487 = sadd.s32 %s24, 1
      %s488 = smul.u32 %s487, 4
      %p489 = scmp.lt.s32.totalorder %s488, 15
      %s490 = scalar_select %p489, %s488, 15
      %s491 = smul.u32 4, %s24
      %p492 = scmp.lt.s32.totalorder %s23, 1
      %s493 = scalar_select %p492, %s23, 1
      %p494 = scmp.lt.s32.totalorder %s491, 15
      %s495 = scalar_select %p494, %s491, 15
      %s496 = smul.addr %s495, 2
      %s497 = smul.addr %s493, 32
      %s498 = sadd.s32 %s496, %s497
      %s499 = smul.addr %s498, 4
      %s500 = scalar_lea.vmem %s3, %s499
      %s501 = smul.u32 4, %s24
      %s502 = smul.u32 4, %s24
      %p503 = scmp.lt.s32.totalorder %s23, 1
      %s504 = scalar_select %p503, %s23, 1
      %p505 = scmp.lt.s32.totalorder %s502, 15
      %s506 = scalar_select %p505, %s502, 15
      %s507 = smul.addr %s506, 2
      %s508 = smul.addr %s504, 32
      %s509 = sadd.s32 %s507, %s508
      %s510 = smul.addr %s509, 8
      %s511 = scalar_lea.vmem %s8, %s510
      %s512 = smul.u32 4, %s24
      %v514 = vld [vmem:[%s5] sm:$0x1]
      %v515 = vld [vmem:[%s6] sm:$0x1]
      %p516 = scmp.eq.s32.totalorder %s24, 0
      %v517 = vld [vmem:[%s469] sm:$0xf]
      %v518 = vld [vmem:[%s469 + $0x4] sm:$0xf]
      %v519 = vunpack.c.l.bf16 %v517
      %v520 = vunpack.c.l.bf16 %v518
      %v522 = vlaneseq
      %v523 = vshrl.u32 %v522, 7
      %v524 = vsub.s32 0, %v523
      %v525 = vrot.slane %v514, %v524
      %v527 = vmul.f32 %v519, %v525
      %v528 = vmul.f32 %v520, %v525
      %v530 = vlaneseq
      %v531 = vshrl.u32 %v530, 7
      %v532 = vsub.s32 0, %v531
      %v533 = vrot.slane %v515, %v532
      %v535 = vadd.f32 %v527, %v533
      %v536 = vadd.f32 %v528, %v533
      %s537 = scalar_select %p516, 1, 0
      %v538 = vstv %s537
      %vm539 = vcmp.eq.s32.totalorder %v538, 1
      %v540 = vsel %vm539, 0.0, %v535
      %v541 = vsel %vm539, 0.0, %v536
      %v542 = vpack.c.bf16 %v541, %v540
      %v543 = vld [vmem:[%s455] sm:$0xf]
      %v544 = vld [vmem:[%s455 + $0x4] sm:$0xf]
      %v545 = vld [vmem:[%s455 + $0x8] sm:$0xf]
      %v546 = vld [vmem:[%s455 + $0xc] sm:$0xf]
      %v547 = vld [vmem:[%s455 + $0x10] sm:$0xf]
      %v548 = vld [vmem:[%s455 + $0x14] sm:$0xf]
      %v549 = vld [vmem:[%s455 + $0x18] sm:$0xf]
      %v550 = vld [vmem:[%s455 + $0x1c] sm:$0xf]
      %v551 = vunpack.c.l.bf16 %v543
      %v552 = vunpack.c.l.bf16 %v544
      %v553 = vunpack.c.l.bf16 %v545
      %v554 = vunpack.c.l.bf16 %v546
      %v555 = vunpack.c.l.bf16 %v547
      %v556 = vunpack.c.l.bf16 %v548
      %v557 = vunpack.c.l.bf16 %v549
      %v558 = vunpack.c.l.bf16 %v550
      %v559 = vmul.f32 %v551, %v525
      %v560 = vmul.f32 %v552, %v525
      %v561 = vmul.f32 %v553, %v525
      %v562 = vmul.f32 %v554, %v525
      %v563 = vmul.f32 %v555, %v525
      %v564 = vmul.f32 %v556, %v525
      %v565 = vmul.f32 %v557, %v525
      %v566 = vmul.f32 %v558, %v525
      %v567 = vadd.f32 %v559, %v533
      %v568 = vadd.f32 %v560, %v533
      %v569 = vadd.f32 %v561, %v533
      %v570 = vadd.f32 %v562, %v533
      %v571 = vadd.f32 %v563, %v533
      %v572 = vadd.f32 %v564, %v533
      %v573 = vadd.f32 %v565, %v533
      %v574 = vadd.f32 %v566, %v533
      %v575 = vpack.c.bf16 %v568, %v567
      %v576 = vpack.c.bf16 %v570, %v569
      %v577 = vpack.c.bf16 %v572, %v571
      %v578 = vpack.c.bf16 %v574, %v573
      %p579 = scmp.eq.s32.totalorder %s24, 3
      %v580 = vld [vmem:[%s486] sm:$0xf]
      %v581 = vld [vmem:[%s486 + $0x4] sm:$0xf]
      %v582 = vunpack.c.l.bf16 %v580
      %v583 = vunpack.c.l.bf16 %v581
      %v584 = vmul.f32 %v582, %v525
      %v585 = vmul.f32 %v583, %v525
      %v586 = vadd.f32 %v584, %v533
      %v587 = vadd.f32 %v585, %v533
      %s588 = scalar_select %p579, 1, 0
      %v589 = vstv %s588
      %vm590 = vcmp.eq.s32.totalorder %v589, 1
      %v591 = vsel %vm590, 0.0, %v586
      %v592 = vsel %vm590, 0.0, %v587
      %v593 = vpack.c.bf16 %v592, %v591
      %v594 = vld [vmem:[%s4] sm:$0xff]
      %v595 = vld [vmem:[%s4 + $0x8] sm:$0xf]
      %v596 = vld [vmem:[%s4 + $0xc] sm:$0xff]
      %v597 = vld [vmem:[%s4 + $0x14] sm:$0xf]
      %v598 = vld [vmem:[%s4 + $0x18] sm:$0xff]
      %v599 = vld [vmem:[%s4 + $0x20] sm:$0xf]
      %v600 = vld [vmem:[%s4 + $0x24] sm:$0xff]
      %v601 = vld [vmem:[%s4 + $0x2c] sm:$0xf]
      %v602 = vld [vmem:[%s4 + $0x30] sm:$0xff]
      %v603 = vld [vmem:[%s4 + $0x38] sm:$0xf]
      %v604 = vld [vmem:[%s4 + $0x3c] sm:$0xff]
      %v605 = vld [vmem:[%s4 + $0x44] sm:$0xf]
      %v606 = vld [vmem:[%s4 + $0x48] sm:$0xff]
      %v607 = vld [vmem:[%s4 + $0x50] sm:$0xf]
      %v608 = vld [vmem:[%s4 + $0x54] sm:$0xff]
      %v609 = vld [vmem:[%s4 + $0x5c] sm:$0xf]
      %v610 = vld [vmem:[%s4 + $0x60] sm:$0xff]
      %v611 = vld [vmem:[%s4 + $0x68] sm:$0xf]
      %v612 = vld [vmem:[%s4 + $0x6c] sm:$0xff]
      %v613 = vld [vmem:[%s4 + $0x74] sm:$0xf]
      %v614 = vld [vmem:[%s4 + $0x78] sm:$0xff]
      %v615 = vld [vmem:[%s4 + $0x80] sm:$0xf]
      %v616 = vld [vmem:[%s4 + $0x84] sm:$0xff]
      %v617 = vld [vmem:[%s4 + $0x8c] sm:$0xf]
      %v618 = vld [vmem:[%s4 + $0x90] sm:$0xff]
      %v619 = vld [vmem:[%s4 + $0x98] sm:$0xf]
      %v620 = vld [vmem:[%s4 + $0x9c] sm:$0xff]
      %v621 = vld [vmem:[%s4 + $0xa4] sm:$0xf]
      %v622 = vld [vmem:[%s4 + $0xa8] sm:$0xff]
      %v623 = vld [vmem:[%s4 + $0xb0] sm:$0xf]
      %v624 = vld [vmem:[%s4 + $0xb4] sm:$0xff]
      %v625 = vld [vmem:[%s4 + $0xbc] sm:$0xf]
      %v626 = vld [vmem:[%s4 + $0xc0] sm:$0xff]
      %v627 = vld [vmem:[%s4 + $0xc8] sm:$0xf]
      %v628 = vld [vmem:[%s4 + $0xcc] sm:$0xff]
      %v629 = vld [vmem:[%s4 + $0xd4] sm:$0xf]
      %v630 = vld [vmem:[%s4 + $0xd8] sm:$0xff]
      %v631 = vld [vmem:[%s4 + $0xe0] sm:$0xf]
      %v632 = vld [vmem:[%s4 + $0xe4] sm:$0xff]
      %v633 = vld [vmem:[%s4 + $0xec] sm:$0xf]
      %v634 = vld [vmem:[%s4 + $0xf0] sm:$0xff]
      %v635 = vld [vmem:[%s4 + $0xf8] sm:$0xf]
      %v636 = vld [vmem:[%s4 + $0xfc] sm:$0xff]
      %v637 = vld [vmem:[%s4 + $0x104] sm:$0xf]
      %v638 = vld [vmem:[%s4 + $0x108] sm:$0xff]
      %v639 = vld [vmem:[%s4 + $0x110] sm:$0xf]
      %v640 = vld [vmem:[%s4 + $0x114] sm:$0xff]
      %v641 = vld [vmem:[%s4 + $0x11c] sm:$0xf]
      %v642 = vld [vmem:[%s4 + $0x120] sm:$0xff]
      %v643 = vld [vmem:[%s4 + $0x128] sm:$0xf]
      %v644 = vld [vmem:[%s4 + $0x12c] sm:$0xff]
      %v645 = vld [vmem:[%s4 + $0x134] sm:$0xf]
      %v646 = vld [vmem:[%s4 + $0x138] sm:$0xff]
      %v647 = vld [vmem:[%s4 + $0x140] sm:$0xf]
      %v648 = vld [vmem:[%s4 + $0x144] sm:$0xff]
      %v649 = vld [vmem:[%s4 + $0x14c] sm:$0xf]
      %v650 = vld [vmem:[%s4 + $0x150] sm:$0xff]
      %v651 = vld [vmem:[%s4 + $0x158] sm:$0xf]
      %v652 = vld [vmem:[%s4 + $0x15c] sm:$0xff]
      %v653 = vld [vmem:[%s4 + $0x164] sm:$0xf]
      %v654 = vld [vmem:[%s4 + $0x168] sm:$0xff]
      %v655 = vld [vmem:[%s4 + $0x170] sm:$0xf]
      %v656 = vld [vmem:[%s4 + $0x174] sm:$0xff]
      %v657 = vld [vmem:[%s4 + $0x17c] sm:$0xf]
      %v658 = vld [vmem:[%s4 + $0x180] sm:$0xff]
      %v659 = vld [vmem:[%s4 + $0x188] sm:$0xf]
      %v660 = vld [vmem:[%s4 + $0x18c] sm:$0xff]
      %v661 = vld [vmem:[%s4 + $0x194] sm:$0xf]
      %v662 = vld [vmem:[%s4 + $0x198] sm:$0xff]
      %v663 = vld [vmem:[%s4 + $0x1a0] sm:$0xf]
      %v664 = vld [vmem:[%s4 + $0x1a4] sm:$0xff]
      %v665 = vld [vmem:[%s4 + $0x1ac] sm:$0xf]
      %v666 = vld [vmem:[%s4 + $0x1b0] sm:$0xff]
      %v667 = vld [vmem:[%s4 + $0x1b8] sm:$0xf]
      %v668 = vld [vmem:[%s4 + $0x1bc] sm:$0xff]
      %v669 = vld [vmem:[%s4 + $0x1c4] sm:$0xf]
      %v670 = vld [vmem:[%s4 + $0x1c8] sm:$0xff]
      %v671 = vld [vmem:[%s4 + $0x1d0] sm:$0xf]
      %v672 = vld [vmem:[%s4 + $0x1d4] sm:$0xff]
      %v673 = vld [vmem:[%s4 + $0x1dc] sm:$0xf]
      %v674 = vld [vmem:[%s4 + $0x1e0] sm:$0xff]
      %v675 = vld [vmem:[%s4 + $0x1e8] sm:$0xf]
      %v676 = vld [vmem:[%s4 + $0x1ec] sm:$0xff]
      %v677 = vld [vmem:[%s4 + $0x1f4] sm:$0xf]
      %v678 = vld [vmem:[%s4 + $0x1f8] sm:$0xff]
      %v679 = vld [vmem:[%s4 + $0x200] sm:$0xf]
      %v680 = vld [vmem:[%s4 + $0x204] sm:$0xff]
      %v681 = vld [vmem:[%s4 + $0x20c] sm:$0xf]
      %v682 = vld [vmem:[%s4 + $0x210] sm:$0xff]
      %v683 = vld [vmem:[%s4 + $0x218] sm:$0xf]
      %v684 = vld [vmem:[%s4 + $0x21c] sm:$0xff]
      %v685 = vld [vmem:[%s4 + $0x224] sm:$0xf]
      %v686 = vld [vmem:[%s4 + $0x228] sm:$0xff]
      %v687 = vld [vmem:[%s4 + $0x230] sm:$0xf]
      %v688 = vld [vmem:[%s4 + $0x234] sm:$0xff]
      %v689 = vld [vmem:[%s4 + $0x23c] sm:$0xf]
      %v786 = vunpack.c.l.b16 %v594
      %v787 = vunpack.c.h.b16 %v594
      %v788 = vunpack.c.l.b16 %v595
      %v789 = vunpack.c.l.b16 %v596
      %v790 = vunpack.c.h.b16 %v596
      %v791 = vunpack.c.l.b16 %v597
      %v792 = vunpack.c.l.b16 %v598
      %v793 = vunpack.c.h.b16 %v598
      %v794 = vunpack.c.l.b16 %v599
      %v795 = vunpack.c.l.b16 %v600
      %v796 = vunpack.c.h.b16 %v600
      %v797 = vunpack.c.l.b16 %v601
      %v798 = vunpack.c.l.b16 %v602
      %v799 = vunpack.c.h.b16 %v602
      %v800 = vunpack.c.l.b16 %v603
      %v801 = vunpack.c.l.b16 %v604
      %v802 = vunpack.c.h.b16 %v604
      %v803 = vunpack.c.l.b16 %v605
      %v804 = vunpack.c.l.b16 %v606
      %v805 = vunpack.c.h.b16 %v606
      %v806 = vunpack.c.l.b16 %v607
      %v807 = vunpack.c.l.b16 %v608
      %v808 = vunpack.c.h.b16 %v608
      %v809 = vunpack.c.l.b16 %v609
      %v810 = vunpack.c.l.b16 %v610
      %v811 = vunpack.c.h.b16 %v610
      %v812 = vunpack.c.l.b16 %v611
      %v813 = vunpack.c.l.b16 %v612
      %v814 = vunpack.c.h.b16 %v612
      %v815 = vunpack.c.l.b16 %v613
      %v816 = vunpack.c.l.b16 %v614
      %v817 = vunpack.c.h.b16 %v614
      %v818 = vunpack.c.l.b16 %v615
      %v819 = vunpack.c.l.b16 %v616
      %v820 = vunpack.c.h.b16 %v616
      %v821 = vunpack.c.l.b16 %v617
      %v822 = vunpack.c.l.b16 %v618
      %v823 = vunpack.c.h.b16 %v618
      %v824 = vunpack.c.l.b16 %v619
      %v825 = vunpack.c.l.b16 %v620
      %v826 = vunpack.c.h.b16 %v620
      %v827 = vunpack.c.l.b16 %v621
      %v828 = vunpack.c.l.b16 %v622
      %v829 = vunpack.c.h.b16 %v622
      %v830 = vunpack.c.l.b16 %v623
      %v831 = vunpack.c.l.b16 %v624
      %v832 = vunpack.c.h.b16 %v624
      %v833 = vunpack.c.l.b16 %v625
      %v834 = vunpack.c.l.b16 %v626
      %v835 = vunpack.c.h.b16 %v626
      %v836 = vunpack.c.l.b16 %v627
      %v837 = vunpack.c.l.b16 %v628
      %v838 = vunpack.c.h.b16 %v628
      %v839 = vunpack.c.l.b16 %v629
      %v840 = vunpack.c.l.b16 %v630
      %v841 = vunpack.c.h.b16 %v630
      %v842 = vunpack.c.l.b16 %v631
      %v843 = vunpack.c.l.b16 %v632
      %v844 = vunpack.c.h.b16 %v632
      %v845 = vunpack.c.l.b16 %v633
      %v846 = vunpack.c.l.b16 %v634
      %v847 = vunpack.c.h.b16 %v634
      %v848 = vunpack.c.l.b16 %v635
      %v849 = vunpack.c.l.b16 %v636
      %v850 = vunpack.c.h.b16 %v636
      %v851 = vunpack.c.l.b16 %v637
      %v852 = vunpack.c.l.b16 %v638
      %v853 = vunpack.c.h.b16 %v638
      %v854 = vunpack.c.l.b16 %v639
      %v855 = vunpack.c.l.b16 %v640
      %v856 = vunpack.c.h.b16 %v640
      %v857 = vunpack.c.l.b16 %v641
      %v858 = vunpack.c.l.b16 %v642
      %v859 = vunpack.c.h.b16 %v642
      %v860 = vunpack.c.l.b16 %v643
      %v861 = vunpack.c.l.b16 %v644
      %v862 = vunpack.c.h.b16 %v644
      %v863 = vunpack.c.l.b16 %v645
      %v864 = vunpack.c.l.b16 %v646
      %v865 = vunpack.c.h.b16 %v646
      %v866 = vunpack.c.l.b16 %v647
      %v867 = vunpack.c.l.b16 %v648
      %v868 = vunpack.c.h.b16 %v648
      %v869 = vunpack.c.l.b16 %v649
      %v870 = vunpack.c.l.b16 %v650
      %v871 = vunpack.c.h.b16 %v650
      %v872 = vunpack.c.l.b16 %v651
      %v873 = vunpack.c.l.b16 %v652
      %v874 = vunpack.c.h.b16 %v652
      %v875 = vunpack.c.l.b16 %v653
      %v876 = vunpack.c.l.b16 %v654
      %v877 = vunpack.c.h.b16 %v654
      %v878 = vunpack.c.l.b16 %v655
      %v879 = vunpack.c.l.b16 %v656
      %v880 = vunpack.c.h.b16 %v656
      %v881 = vunpack.c.l.b16 %v657
      %v882 = vunpack.c.l.b16 %v658
      %v883 = vunpack.c.h.b16 %v658
      %v884 = vunpack.c.l.b16 %v659
      %v885 = vunpack.c.l.b16 %v660
      %v886 = vunpack.c.h.b16 %v660
      %v887 = vunpack.c.l.b16 %v661
      %v888 = vunpack.c.l.b16 %v662
      %v889 = vunpack.c.h.b16 %v662
      %v890 = vunpack.c.l.b16 %v663
      %v891 = vunpack.c.l.b16 %v664
      %v892 = vunpack.c.h.b16 %v664
      %v893 = vunpack.c.l.b16 %v665
      %v894 = vunpack.c.l.b16 %v666
      %v895 = vunpack.c.h.b16 %v666
      %v896 = vunpack.c.l.b16 %v667
      %v897 = vunpack.c.l.b16 %v668
      %v898 = vunpack.c.h.b16 %v668
      %v899 = vunpack.c.l.b16 %v669
      %v900 = vunpack.c.l.b16 %v670
      %v901 = vunpack.c.h.b16 %v670
      %v902 = vunpack.c.l.b16 %v671
      %v903 = vunpack.c.l.b16 %v672
      %v904 = vunpack.c.h.b16 %v672
      %v905 = vunpack.c.l.b16 %v673
      %v906 = vunpack.c.l.b16 %v674
      %v907 = vunpack.c.h.b16 %v674
      %v908 = vunpack.c.l.b16 %v675
      %v909 = vunpack.c.l.b16 %v676
      %v910 = vunpack.c.h.b16 %v676
      %v911 = vunpack.c.l.b16 %v677
      %v912 = vunpack.c.l.b16 %v678
      %v913 = vunpack.c.h.b16 %v678
      %v914 = vunpack.c.l.b16 %v679
      %v915 = vunpack.c.l.b16 %v680
      %v916 = vunpack.c.h.b16 %v680
      %v917 = vunpack.c.l.b16 %v681
      %v918 = vunpack.c.l.b16 %v682
      %v919 = vunpack.c.h.b16 %v682
      %v920 = vunpack.c.l.b16 %v683
      %v921 = vunpack.c.l.b16 %v684
      %v922 = vunpack.c.h.b16 %v684
      %v923 = vunpack.c.l.b16 %v685
      %v924 = vunpack.c.l.b16 %v686
      %v925 = vunpack.c.h.b16 %v686
      %v926 = vunpack.c.l.b16 %v687
      %v927 = vunpack.c.l.b16 %v688
      %v928 = vunpack.c.h.b16 %v688
      %v929 = vunpack.c.l.b16 %v689
      %v930 = vpack.c.b16 %v789, %v786
      %v931 = vpack.c.b16 %v790, %v787
      %v932 = vpack.c.b16 %v791, %v788
      %v933 = vpack.c.b16 %v795, %v792
      %v934 = vpack.c.b16 %v796, %v793
      %v935 = vpack.c.b16 %v797, %v794
      %v936 = vpack.c.b16 %v801, %v798
      %v937 = vpack.c.b16 %v802, %v799
      %v938 = vpack.c.b16 %v803, %v800
      %v939 = vpack.c.b16 %v807, %v804
      %v940 = vpack.c.b16 %v808, %v805
      %v941 = vpack.c.b16 %v809, %v806
      %v942 = vpack.c.b16 %v813, %v810
      %v943 = vpack.c.b16 %v814, %v811
      %v944 = vpack.c.b16 %v815, %v812
      %v945 = vpack.c.b16 %v819, %v816
      %v946 = vpack.c.b16 %v820, %v817
      %v947 = vpack.c.b16 %v821, %v818
      %v948 = vpack.c.b16 %v825, %v822
      %v949 = vpack.c.b16 %v826, %v823
      %v950 = vpack.c.b16 %v827, %v824
      %v951 = vpack.c.b16 %v831, %v828
      %v952 = vpack.c.b16 %v832, %v829
      %v953 = vpack.c.b16 %v833, %v830
      %v954 = vpack.c.b16 %v837, %v834
      %v955 = vpack.c.b16 %v838, %v835
      %v956 = vpack.c.b16 %v839, %v836
      %v957 = vpack.c.b16 %v843, %v840
      %v958 = vpack.c.b16 %v844, %v841
      %v959 = vpack.c.b16 %v845, %v842
      %v960 = vpack.c.b16 %v849, %v846
      %v961 = vpack.c.b16 %v850, %v847
      %v962 = vpack.c.b16 %v851, %v848
      %v963 = vpack.c.b16 %v855, %v852
      %v964 = vpack.c.b16 %v856, %v853
      %v965 = vpack.c.b16 %v857, %v854
      %v966 = vpack.c.b16 %v861, %v858
      %v967 = vpack.c.b16 %v862, %v859
      %v968 = vpack.c.b16 %v863, %v860
      %v969 = vpack.c.b16 %v867, %v864
      %v970 = vpack.c.b16 %v868, %v865
      %v971 = vpack.c.b16 %v869, %v866
      %v972 = vpack.c.b16 %v873, %v870
      %v973 = vpack.c.b16 %v874, %v871
      %v974 = vpack.c.b16 %v875, %v872
      %v975 = vpack.c.b16 %v879, %v876
      %v976 = vpack.c.b16 %v880, %v877
      %v977 = vpack.c.b16 %v881, %v878
      %v978 = vpack.c.b16 %v885, %v882
      %v979 = vpack.c.b16 %v886, %v883
      %v980 = vpack.c.b16 %v887, %v884
      %v981 = vpack.c.b16 %v891, %v888
      %v982 = vpack.c.b16 %v892, %v889
      %v983 = vpack.c.b16 %v893, %v890
      %v984 = vpack.c.b16 %v897, %v894
      %v985 = vpack.c.b16 %v898, %v895
      %v986 = vpack.c.b16 %v899, %v896
      %v987 = vpack.c.b16 %v903, %v900
      %v988 = vpack.c.b16 %v904, %v901
      %v989 = vpack.c.b16 %v905, %v902
      %v990 = vpack.c.b16 %v909, %v906
      %v991 = vpack.c.b16 %v910, %v907
      %v992 = vpack.c.b16 %v911, %v908
      %v993 = vpack.c.b16 %v915, %v912
      %v994 = vpack.c.b16 %v916, %v913
      %v995 = vpack.c.b16 %v917, %v914
      %v996 = vpack.c.b16 %v921, %v918
      %v997 = vpack.c.b16 %v922, %v919
      %v998 = vpack.c.b16 %v923, %v920
      %v999 = vpack.c.b16 %v927, %v924
      %v1000 = vpack.c.b16 %v928, %v925
      %v1001 = vpack.c.b16 %v929, %v926
      %1074 = vmatprep.subr.bf16.mxu0 %v952
      %1075 = vmatpush1.bf16.msra.mxu0 %v951
      %1076 = vmatprep.subr.bf16.mxu0 %v949
      %1077 = vmatpush1.bf16.msra.mxu0 %v948
      %1078 = vmatprep.subr.bf16.mxu0 %v946
      %1079 = vmatpush1.bf16.msra.mxu0 %v945
      %1080 = vmatprep.subr.bf16.mxu0 %v943
      %1081 = vmatpush1.bf16.msra.mxu0 %v942
      %1082 = vmatprep.subr.bf16.mxu0 %v940
      %1083 = vmatpush1.bf16.msra.mxu0 %v939
      %1084 = vmatprep.subr.bf16.mxu0 %v937
      %1085 = vmatpush1.bf16.msra.mxu0 %v936
      %1086 = vmatprep.subr.bf16.mxu0 %v934
      %1087 = vmatpush1.bf16.msra.mxu0 %v933
      %1088 = vmatprep.subr.bf16.mxu0 %v931
      %1089 = vmatpush1.bf16.msra.mxu0 %v930
      %1090 = vmatprep.subr.bf16.mxu0 %v976
      %1091 = vmatpush2.bf16.msra.mxu0 %v975
      %1092 = vmatprep.subr.bf16.mxu0 %v973
      %1093 = vmatpush2.bf16.msra.mxu0 %v972
      %1094 = vmatprep.subr.bf16.mxu0 %v970
      %1095 = vmatpush2.bf16.msra.mxu0 %v969
      %1096 = vmatprep.subr.bf16.mxu0 %v967
      %1097 = vmatpush2.bf16.msra.mxu0 %v966
      %1098 = vmatprep.subr.bf16.mxu0 %v964
      %1099 = vmatpush2.bf16.msra.mxu0 %v963
      %1100 = vmatprep.subr.bf16.mxu0 %v961
      %1101 = vmatpush2.bf16.msra.mxu0 %v960
      %1102 = vmatprep.subr.bf16.mxu0 %v958
      %1103 = vmatpush2.bf16.msra.mxu0 %v957
      %1104 = vmatprep.subr.bf16.mxu0 %v955
      %1105 = vmatpush2.bf16.msra.mxu0 %v954
      %1106 = vmatprep.mubr.bf16.mxu0 %v575
      %1107 = vmatmul.mubr.bf16.gmra.mxu0 %v542
      %v1108 = vpop.f32.mrf.mxu0
      %v1109 = vadd.f32 0.0, %v1108
      %v1110 = vpop.f32.mrf.mxu0
      %v1111 = vadd.f32 0.0, %v1110
      %v1112 = vpop.f32.mrf.mxu0
      %v1113 = vadd.f32 0.0, %v1112
      %v1114 = vpop.f32.mrf.mxu0
      %v1115 = vadd.f32 0.0, %v1114
      %1116 = vmatprep.mubr.bf16.mxu0 %v576
      %1117 = vmatmul.mubr.bf16.gmra.mxu0 %v575
      %v1118 = vpop.f32.mrf.mxu0
      %v1119 = vadd.f32 0.0, %v1118
      %v1120 = vpop.f32.mrf.mxu0
      %v1121 = vadd.f32 0.0, %v1120
      %v1122 = vpop.f32.mrf.mxu0
      %v1123 = vadd.f32 0.0, %v1122
      %v1124 = vpop.f32.mrf.mxu0
      %v1125 = vadd.f32 0.0, %v1124
      %1126 = vmatprep.mubr.bf16.mxu0 %v577
      %1127 = vmatmul.mubr.bf16.gmra.mxu0 %v576
      %v1128 = vpop.f32.mrf.mxu0
      %v1129 = vadd.f32 0.0, %v1128
      %v1130 = vpop.f32.mrf.mxu0
      %v1131 = vadd.f32 0.0, %v1130
      %v1132 = vpop.f32.mrf.mxu0
      %v1133 = vadd.f32 0.0, %v1132
      %v1134 = vpop.f32.mrf.mxu0
      %v1135 = vadd.f32 0.0, %v1134
      %1136 = vmatprep.mubr.bf16.mxu0 %v578
      %1137 = vmatmul.mubr.bf16.gmra.mxu0 %v577
      %v1138 = vpop.f32.mrf.mxu0
      %v1139 = vadd.f32 0.0, %v1138
      %v1140 = vpop.f32.mrf.mxu0
      %v1141 = vadd.f32 0.0, %v1140
      %v1142 = vpop.f32.mrf.mxu0
      %v1143 = vadd.f32 0.0, %v1142
      %v1144 = vpop.f32.mrf.mxu0
      %v1145 = vadd.f32 0.0, %v1144
      %1146 = vdwg.mxu0
      %1147 = vmatprep.subr.bf16.mxu0 %v1000
      %1148 = vmatpush1.bf16.msra.mxu0 %v999
      %1149 = vmatprep.subr.bf16.mxu0 %v997
      %1150 = vmatpush1.bf16.msra.mxu0 %v996
      %1151 = vmatprep.subr.bf16.mxu0 %v994
      %1152 = vmatpush1.bf16.msra.mxu0 %v993
      %1153 = vmatprep.subr.bf16.mxu0 %v991
      %1154 = vmatpush1.bf16.msra.mxu0 %v990
      %1155 = vmatprep.subr.bf16.mxu0 %v988
      %1156 = vmatpush1.bf16.msra.mxu0 %v987
      %1157 = vmatprep.subr.bf16.mxu0 %v985
      %1158 = vmatpush1.bf16.msra.mxu0 %v984
      %1159 = vmatprep.subr.bf16.mxu0 %v982
      %1160 = vmatpush1.bf16.msra.mxu0 %v981
      %1161 = vmatprep.subr.bf16.mxu0 %v979
      %1162 = vmatpush1.bf16.msra.mxu0 %v978
      %1163 = vmatprep.subr.bf16.mxu0 0
      %1164 = vmatpush2.bf16.msra.mxu0 0
      %1165 = vmatprep.subr.bf16.mxu0 0
      %1166 = vmatpush2.bf16.msra.mxu0 0
      %1167 = vmatprep.subr.bf16.mxu0 0
      %1168 = vmatpush2.bf16.msra.mxu0 0
      %1169 = vmatprep.subr.bf16.mxu0 0
      %1170 = vmatpush2.bf16.msra.mxu0 0
      %1171 = vmatprep.subr.bf16.mxu0 0
      %1172 = vmatpush2.bf16.msra.mxu0 0
      %1173 = vmatprep.subr.bf16.mxu0 0
      %1174 = vmatpush2.bf16.msra.mxu0 0
      %1175 = vmatprep.subr.bf16.mxu0 0
      %1176 = vmatpush2.bf16.msra.mxu0 0
      %1177 = vmatprep.subr.bf16.mxu0 0
      %1178 = vmatpush2.bf16.msra.mxu0 0
      %1179 = vmatprep.mubr.bf16.mxu0 0
      %1180 = vmatmul.mubr.bf16.gmra.mxu0 %v576
      %v1181 = vpop.f32.mrf.mxu0
      %v1182 = vadd.f32 %v1109, %v1181
      %v1183 = vpop.f32.mrf.mxu0
      %v1184 = vadd.f32 %v1111, %v1183
      %v1185 = vpop.f32.mrf.mxu0
      %v1186 = vadd.f32 %v1113, %v1185
      %v1187 = vpop.f32.mrf.mxu0
      %v1188 = vadd.f32 %v1115, %v1187
      %1189 = vmatprep.mubr.bf16.mxu0 0
      %1190 = vmatmul.mubr.bf16.gmra.mxu0 %v577
      %v1191 = vpop.f32.mrf.mxu0
      %v1192 = vadd.f32 %v1119, %v1191
      %v1193 = vpop.f32.mrf.mxu0
      %v1194 = vadd.f32 %v1121, %v1193
      %v1195 = vpop.f32.mrf.mxu0
      %v1196 = vadd.f32 %v1123, %v1195
      %v1197 = vpop.f32.mrf.mxu0
      %v1198 = vadd.f32 %v1125, %v1197
      %1199 = vmatprep.mubr.bf16.mxu0 0
      %1200 = vmatmul.mubr.bf16.gmra.mxu0 %v578
      %v1201 = vpop.f32.mrf.mxu0
      %v1202 = vadd.f32 %v1129, %v1201
      %v1203 = vpop.f32.mrf.mxu0
      %v1204 = vadd.f32 %v1131, %v1203
      %v1205 = vpop.f32.mrf.mxu0
      %v1206 = vadd.f32 %v1133, %v1205
      %v1207 = vpop.f32.mrf.mxu0
      %v1208 = vadd.f32 %v1135, %v1207
      %1209 = vmatprep.mubr.bf16.mxu0 0
      %1210 = vmatmul.mubr.bf16.gmra.mxu0 %v593
      %v1211 = vpop.f32.mrf.mxu0
      %v1212 = vadd.f32 %v1139, %v1211
      %v1213 = vpop.f32.mrf.mxu0
      %v1214 = vadd.f32 %v1141, %v1213
      %v1215 = vpop.f32.mrf.mxu0
      %v1216 = vadd.f32 %v1143, %v1215
      %v1217 = vpop.f32.mrf.mxu0
      %v1218 = vadd.f32 %v1145, %v1217
      %1219 = vdwg.mxu0
      %1220 = vmatprep.subr.bf16.mxu0 0
      %1221 = vmatpush1.bf16.msra.mxu0 %v953
      %1222 = vmatprep.subr.bf16.mxu0 0
      %1223 = vmatpush1.bf16.msra.mxu0 %v950
      %1224 = vmatprep.subr.bf16.mxu0 0
      %1225 = vmatpush1.bf16.msra.mxu0 %v947
      %1226 = vmatprep.subr.bf16.mxu0 0
      %1227 = vmatpush1.bf16.msra.mxu0 %v944
      %1228 = vmatprep.subr.bf16.mxu0 0
      %1229 = vmatpush1.bf16.msra.mxu0 %v941
      %1230 = vmatprep.subr.bf16.mxu0 0
      %1231 = vmatpush1.bf16.msra.mxu0 %v938
      %1232 = vmatprep.subr.bf16.mxu0 0
      %1233 = vmatpush1.bf16.msra.mxu0 %v935
      %1234 = vmatprep.subr.bf16.mxu0 0
      %1235 = vmatpush1.bf16.msra.mxu0 %v932
      %1236 = vmatprep.subr.bf16.mxu0 0
      %1237 = vmatpush2.bf16.msra.mxu0 %v977
      %1238 = vmatprep.subr.bf16.mxu0 0
      %1239 = vmatpush2.bf16.msra.mxu0 %v974
      %1240 = vmatprep.subr.bf16.mxu0 0
      %1241 = vmatpush2.bf16.msra.mxu0 %v971
      %1242 = vmatprep.subr.bf16.mxu0 0
      %1243 = vmatpush2.bf16.msra.mxu0 %v968
      %1244 = vmatprep.subr.bf16.mxu0 0
      %1245 = vmatpush2.bf16.msra.mxu0 %v965
      %1246 = vmatprep.subr.bf16.mxu0 0
      %1247 = vmatpush2.bf16.msra.mxu0 %v962
      %1248 = vmatprep.subr.bf16.mxu0 0
      %1249 = vmatpush2.bf16.msra.mxu0 %v959
      %1250 = vmatprep.subr.bf16.mxu0 0
      %1251 = vmatpush2.bf16.msra.mxu0 %v956
      %1252 = vmatprep.mubr.bf16.mxu0 %v575
      %1253 = vmatmul.mubr.bf16.gmra.mxu0 %v542
      %v1254 = vpop.f32.mrf.mxu0
      %v1255 = vadd.f32 0.0, %v1254
      %v1256 = vpop.f32.mrf.mxu0
      %v1257 = vpop.f32.mrf.mxu0
      %v1258 = vadd.f32 0.0, %v1257
      %v1259 = vpop.f32.mrf.mxu0
      %1260 = vmatprep.mubr.bf16.mxu0 %v576
      %1261 = vmatmul.mubr.bf16.gmra.mxu0 %v575
      %v1262 = vpop.f32.mrf.mxu0
      %v1263 = vadd.f32 0.0, %v1262
      %v1264 = vpop.f32.mrf.mxu0
      %v1265 = vpop.f32.mrf.mxu0
      %v1266 = vadd.f32 0.0, %v1265
      %v1267 = vpop.f32.mrf.mxu0
      %1268 = vmatprep.mubr.bf16.mxu0 %v577
      %1269 = vmatmul.mubr.bf16.gmra.mxu0 %v576
      %v1270 = vpop.f32.mrf.mxu0
      %v1271 = vadd.f32 0.0, %v1270
      %v1272 = vpop.f32.mrf.mxu0
      %v1273 = vpop.f32.mrf.mxu0
      %v1274 = vadd.f32 0.0, %v1273
      %v1275 = vpop.f32.mrf.mxu0
      %1276 = vmatprep.mubr.bf16.mxu0 %v578
      %1277 = vmatmul.mubr.bf16.gmra.mxu0 %v577
      %v1278 = vpop.f32.mrf.mxu0
      %v1279 = vadd.f32 0.0, %v1278
      %v1280 = vpop.f32.mrf.mxu0
      %v1281 = vpop.f32.mrf.mxu0
      %v1282 = vadd.f32 0.0, %v1281
      %v1283 = vpop.f32.mrf.mxu0
      %1284 = vdwg.mxu0
      %1285 = vmatprep.subr.bf16.mxu0 0
      %1286 = vmatpush1.bf16.msra.mxu0 %v1001
      %1287 = vmatprep.subr.bf16.mxu0 0
      %1288 = vmatpush1.bf16.msra.mxu0 %v998
      %1289 = vmatprep.subr.bf16.mxu0 0
      %1290 = vmatpush1.bf16.msra.mxu0 %v995
      %1291 = vmatprep.subr.bf16.mxu0 0
      %1292 = vmatpush1.bf16.msra.mxu0 %v992
      %1293 = vmatprep.subr.bf16.mxu0 0
      %1294 = vmatpush1.bf16.msra.mxu0 %v989
      %1295 = vmatprep.subr.bf16.mxu0 0
      %1296 = vmatpush1.bf16.msra.mxu0 %v986
      %1297 = vmatprep.subr.bf16.mxu0 0
      %1298 = vmatpush1.bf16.msra.mxu0 %v983
      %1299 = vmatprep.subr.bf16.mxu0 0
      %1300 = vmatpush1.bf16.msra.mxu0 %v980
      %1301 = vmatprep.subr.bf16.mxu0 0
      %1302 = vmatpush2.bf16.msra.mxu0 0
      %1303 = vmatprep.subr.bf16.mxu0 0
      %1304 = vmatpush2.bf16.msra.mxu0 0
      %1305 = vmatprep.subr.bf16.mxu0 0
      %1306 = vmatpush2.bf16.msra.mxu0 0
      %1307 = vmatprep.subr.bf16.mxu0 0
      %1308 = vmatpush2.bf16.msra.mxu0 0
      %1309 = vmatprep.subr.bf16.mxu0 0
      %1310 = vmatpush2.bf16.msra.mxu0 0
      %1311 = vmatprep.subr.bf16.mxu0 0
      %1312 = vmatpush2.bf16.msra.mxu0 0
      %1313 = vmatprep.subr.bf16.mxu0 0
      %1314 = vmatpush2.bf16.msra.mxu0 0
      %1315 = vmatprep.subr.bf16.mxu0 0
      %1316 = vmatpush2.bf16.msra.mxu0 0
      %1317 = vmatprep.mubr.bf16.mxu0 0
      %1318 = vmatmul.mubr.bf16.gmra.mxu0 %v576
      %v1319 = vpop.f32.mrf.mxu0
      %v1320 = vadd.f32 %v1255, %v1319
      %v1321 = vpop.f32.mrf.mxu0
      %v1322 = vpop.f32.mrf.mxu0
      %v1323 = vadd.f32 %v1258, %v1322
      %v1324 = vpop.f32.mrf.mxu0
      %1325 = vmatprep.mubr.bf16.mxu0 0
      %1326 = vmatmul.mubr.bf16.gmra.mxu0 %v577
      %v1327 = vpop.f32.mrf.mxu0
      %v1328 = vadd.f32 %v1263, %v1327
      %v1329 = vpop.f32.mrf.mxu0
      %v1330 = vpop.f32.mrf.mxu0
      %v1331 = vadd.f32 %v1266, %v1330
      %v1332 = vpop.f32.mrf.mxu0
      %1333 = vmatprep.mubr.bf16.mxu0 0
      %1334 = vmatmul.mubr.bf16.gmra.mxu0 %v578
      %v1335 = vpop.f32.mrf.mxu0
      %v1336 = vadd.f32 %v1271, %v1335
      %v1337 = vpop.f32.mrf.mxu0
      %v1338 = vpop.f32.mrf.mxu0
      %v1339 = vadd.f32 %v1274, %v1338
      %v1340 = vpop.f32.mrf.mxu0
      %1341 = vmatprep.mubr.bf16.mxu0 0
      %1342 = vmatmul.mubr.bf16.gmra.mxu0 %v593
      %v1343 = vpop.f32.mrf.mxu0
      %v1344 = vadd.f32 %v1279, %v1343
      %v1345 = vpop.f32.mrf.mxu0
      %v1346 = vpop.f32.mrf.mxu0
      %v1347 = vadd.f32 %v1282, %v1346
      %v1348 = vpop.f32.mrf.mxu0
      %1349 = vdwg.mxu0
      %vm1358 = vcmask 1040384
      %v1359 = vrot.slane %v1182, 7
      %v1360 = vrot.slane %v1186, 7
      %v1361 = vsel %vm1358, %v1359, %v1360
      %v1362 = vrot.slane %v1192, 7
      %v1363 = vrot.slane %v1196, 7
      %v1364 = vsel %vm1358, %v1362, %v1363
      %v1365 = vrot.slane %v1202, 7
      %v1366 = vrot.slane %v1206, 7
      %v1367 = vsel %vm1358, %v1365, %v1366
      %v1368 = vrot.slane %v1212, 7
      %v1369 = vrot.slane %v1216, 7
      %v1370 = vsel %vm1358, %v1368, %v1369
      %v1379 = vsel %vm1358, 0.0, %v1359
      %v1380 = vsel %vm1358, 0.0, %v1362
      %v1381 = vsel %vm1358, 0.0, %v1365
      %v1382 = vsel %vm1358, 0.0, %v1368
      %v1383 = vadd.f32 %v1184, %v1379
      %v1384 = vadd.f32 %v1188, %v1361
      %v1385 = vadd.f32 %v1194, %v1380
      %v1386 = vadd.f32 %v1198, %v1364
      %v1387 = vadd.f32 %v1204, %v1381
      %v1388 = vadd.f32 %v1208, %v1367
      %v1389 = vadd.f32 %v1214, %v1382
      %v1390 = vadd.f32 %v1218, %v1370
      %vm1399 = vcmask 1046528
      %v1400 = vrot.slane %v1320, 1
      %v1401 = vrot.slane %v1323, 1
      %v1402 = vsel %vm1399, %v1400, %v1401
      %v1403 = vrot.slane %v1328, 1
      %v1404 = vrot.slane %v1331, 1
      %v1405 = vsel %vm1399, %v1403, %v1404
      %v1406 = vrot.slane %v1336, 1
      %v1407 = vrot.slane %v1339, 1
      %v1408 = vsel %vm1399, %v1406, %v1407
      %v1409 = vrot.slane %v1344, 1
      %v1410 = vrot.slane %v1347, 1
      %v1411 = vsel %vm1399, %v1409, %v1410
      %v1420 = vsel %vm1399, %v1401, 0.0
      %v1421 = vsel %vm1399, %v1404, 0.0
      %v1422 = vsel %vm1399, %v1407, 0.0
      %v1423 = vsel %vm1399, %v1410, 0.0
      %v1424 = vadd.f32 %v1383, %v1402
      %v1425 = vadd.f32 %v1384, %v1420
      %v1426 = vadd.f32 %v1385, %v1405
      %v1427 = vadd.f32 %v1386, %v1421
      %v1428 = vadd.f32 %v1387, %v1408
      %v1429 = vadd.f32 %v1388, %v1422
      %v1430 = vadd.f32 %v1389, %v1411
      %v1431 = vadd.f32 %v1390, %v1423
      %v1432 = vld [vmem:[%s7] sm:$0x1]
      %v1434 = vlaneseq
      %v1435 = vshrl.u32 %v1434, 7
      %v1436 = vsub.s32 0, %v1435
      %v1437 = vrot.slane %v1432, %v1436
      %v1439 = vadd.f32 %v1424, %v1437
      %v1440 = vadd.f32 %v1425, %v1437
      %v1441 = vadd.f32 %v1426, %v1437
      %v1442 = vadd.f32 %v1427, %v1437
      %v1443 = vadd.f32 %v1428, %v1437
      %v1444 = vadd.f32 %v1429, %v1437
      %v1445 = vadd.f32 %v1430, %v1437
      %v1446 = vadd.f32 %v1431, %v1437
      %v1447 = vld [vmem:[%s500] sm:$0xf]
      %v1448 = vld [vmem:[%s500 + $0x4] sm:$0xf]
      %v1449 = vld [vmem:[%s500 + $0x8] sm:$0xf]
      %v1450 = vld [vmem:[%s500 + $0xc] sm:$0xf]
      %v1451 = vld [vmem:[%s500 + $0x10] sm:$0xf]
      %v1452 = vld [vmem:[%s500 + $0x14] sm:$0xf]
      %v1453 = vld [vmem:[%s500 + $0x18] sm:$0xf]
      %v1454 = vld [vmem:[%s500 + $0x1c] sm:$0xf]
      %v1455 = vunpack.c.l.bf16 %v1447
      %v1456 = vunpack.c.l.bf16 %v1448
      %v1457 = vunpack.c.l.bf16 %v1449
      %v1458 = vunpack.c.l.bf16 %v1450
      %v1459 = vunpack.c.l.bf16 %v1451
      %v1460 = vunpack.c.l.bf16 %v1452
      %v1461 = vunpack.c.l.bf16 %v1453
      %v1462 = vunpack.c.l.bf16 %v1454
      %v1463 = vadd.f32 %v1439, %v1455
      %v1464 = vadd.f32 %v1440, %v1456
      %v1465 = vadd.f32 %v1441, %v1457
      %v1466 = vadd.f32 %v1442, %v1458
      %v1467 = vadd.f32 %v1443, %v1459
      %v1468 = vadd.f32 %v1444, %v1460
      %v1469 = vadd.f32 %v1445, %v1461
      %v1470 = vadd.f32 %v1446, %v1462
      %1471 = vst [vmem:[%s511] sm:$0xff] %v1463
      %1472 = vst [vmem:[%s511 + $0x8] sm:$0xff] %v1464
      %1473 = vst [vmem:[%s511 + $0x10] sm:$0xff] %v1465
      %1474 = vst [vmem:[%s511 + $0x18] sm:$0xff] %v1466
      %1475 = vst [vmem:[%s511 + $0x20] sm:$0xff] %v1467
      %1476 = vst [vmem:[%s511 + $0x28] sm:$0xff] %v1468
      %1477 = vst [vmem:[%s511 + $0x30] sm:$0xff] %v1469
      %1478 = vst [vmem:[%s511 + $0x38] sm:$0xff] %v1470
      %s1479 = smul.u32 4, %s24
      %p1480 = scmp.lt.s32.totalorder %s23, 1
      %s1481 = scalar_select %p1480, %s23, 1
      %p1482 = scmp.lt.s32.totalorder %s1479, 15
      %s1483 = scalar_select %p1482, %s1479, 15
      %s1484 = smul.addr %s1483, 2
      %s1485 = smul.addr %s1481, 32
      %s1486 = sadd.s32 %s1484, %s1485
      %s1487 = smul.addr %s1486, 8
      %s1488 = scalar_lea.vmem %s8, %s1487
      // Predicated region
      $region53: #{residual_block_pallas.3} parent=51 // pred_check
        %p1489 = pneg %p263
      $region54: #{residual_block_pallas.3} parent=51 // pred_check_branch
        %1491 = sbr.rel (%p1489) target = $region56
      $region55: #{residual_block_pallas.3} parent=51 // pred_region
        %s1492 = smul.u32 4, %s24
      $region56: #{residual_block_pallas.3} parent=51 // pred_fallthru
        _
    $region52: #{residual_block_pallas.3} parent=5 // pred_fallthru
      _
    %p1493 = scmp.le.s32.totalorder 2, %s14
    // Predicated region
    $region57: #{residual_block_pallas.3} parent=5 // pred_check
      %p1494 = pneg %p1493
    $region58: #{residual_block_pallas.3} parent=5 // pred_check_branch
      %1496 = sbr.rel (%p1494) target = $region60
    $region59: #{residual_block_pallas.3} parent=5 // pred_region
      %s1497 = ssub.s32 %s14, 2
      // Predicated region
      $region61: #{residual_block_pallas.3} parent=59 // pred_check
        %p1498 = pneg %p269
      $region62: #{residual_block_pallas.3} parent=59 // pred_check_branch
        %1500 = sbr.rel (%p1498) target = $region64
      $region63: #{residual_block_pallas.3} parent=59 // pred_region
        %s1501 = smul.u32 4, %s26
        %p1502 = scmp.lt.s32.totalorder %s25, 1
        %s1503 = scalar_select %p1502, %s25, 1
        %p1504 = scmp.lt.s32.totalorder %s1501, 15
        %s1505 = scalar_select %p1504, %s1501, 15
        %s1506 = smul.addr %s1505, 2
        %s1507 = smul.addr %s1503, 32
        %s1508 = sadd.s32 %s1506, %s1507
        %s1509 = smul.addr %s1508, 8
        %s1510 = scalar_lea.vmem %s8, %s1509
      $region64: #{residual_block_pallas.3} parent=59 // pred_fallthru
        _
    $region60: #{residual_block_pallas.3} parent=5 // pred_fallthru
      _
  $region6: #{residual_block_pallas.3} parent=0 // loop_footer
    %s18 = sadd.s32 1, %s14
  $region7: #{residual_block_pallas.3} parent=0 // loop_footer_branch
    %13 = sbr.rel target = $region3
  $region8: #{residual_block_pallas.3} parent=0 // loop_exit
    _

// kernel: residual_block_pallas.2
$region0: #{residual_block_pallas.2}
  #allocation0 [shape = 'u32[]', space=smem, size = 0x4, offset = 0x4, fixed_abs, tag = 'smem constant byte address 0x4 - core index']
  #allocation1 [shape = 'u32[144,128]{1,0:T(1,128)}', space=vmem, size = 0x12000, scoped, tag = 'internal scratch']
  %s0 = inlined_call_operand.vmem [shape: bf16[2,16,16,128], index: 0, kind: input, shape index: {}, may-alias: {0,1,2}]
  %s1 = inlined_call_operand.vmem [shape: bf16[2,16,16,128], index: 1, kind: input, shape index: {}, may-alias: {0,1,2}]
  %s2 = inlined_call_operand.vmem [shape: bf16[2,16,16,128], index: 2, kind: input, shape index: {}, may-alias: {0,1,2}]
  %s3 = inlined_call_operand.vmem [shape: bf16[384,384], index: 3, kind: input, shape index: {}]
  %s4 = inlined_call_operand.vmem [shape: f32[1,1,128], index: 4, kind: input, shape index: {}]
  %s5 = inlined_call_operand.vmem [shape: bf16[2,16,16,128], index: 5, kind: output, shape index: {0}]
  %s6 = inlined_call_operand.vmem [shape: f32[2,4,1,128], index: 6, kind: output, shape index: {1}]
  %s7 = inlined_call_operand.vmem [shape: f32[2,4,1,128], index: 7, kind: output, shape index: {2}]
  %8 = xla_tuple %s5, %s6, %s7
  %s9 = sld [smem:[#allocation0]]
  $region69: #{residual_block_pallas.2} parent=0
    _
  %s11 = ssub.s32 1, %s9
  %s12 = scalar_select 0, %s11, %s9
  loop: start=0, step=1, limit=10
  $region2: #{residual_block_pallas.2} parent=0 // loop_pre_header
    _
  $region3: #{residual_block_pallas.2} parent=0 // loop_header
    %s14 = sphi 0, %s18
    %p15 = scmp.ge.s32.totalorder %s14, 10
    %s21 = sphi 0, %s33
    %s22 = sphi 0, %s29
    %s23 = sphi 0, %s21
    %s24 = sphi 0, %s22
    %s25 = sphi 0, %s23
    %s26 = sphi 0, %s24
    %s38 = sphi 0, %s40
    %s41 = sphi 0, %s38
    %s42 = sphi 0, %s41
    %s58 = sphi 0, %s42
    %s74 = sphi 0, %s76
    %s77 = sphi 0, %s74
    %s78 = sphi 0, %s77
    %s94 = sphi 0, %s78
    %s110 = sphi 0, %s112
    %s113 = sphi 0, %s110
    %s114 = sphi 0, %s113
    %s130 = sphi 0, %s114
    %s134 = sphi 0, %s134
    %s136 = sphi 0, %s134
    %s137 = sphi 0, %s136
    %s151 = sphi 0, %s137
    %s155 = sphi 0, %s155
    %s157 = sphi 0, %s155
    %s158 = sphi 0, %s157
    %s172 = sphi 0, %s158
    %s180 = sphi 0, %s182
    %s183 = sphi 0, %s180
    %s184 = sphi 0, %s183
    %s200 = sphi 0, %s184
    %s208 = sphi 0, %s210
    %s211 = sphi 0, %s208
    %s212 = sphi 0, %s211
    %s228 = sphi 0, %s212
    %s236 = sphi 0, %s238
    %s239 = sphi 0, %s236
    %s240 = sphi 0, %s239
    %s256 = sphi 0, %s240
  $region4: #{residual_block_pallas.2} parent=0 // loop_header_branch
    %17 = sbr.rel (%p15) target = $region8
  $region5: #{residual_block_pallas.2} parent=0 // loop_body
    %s19 = ssub.s32 %s14, 1
    %s20 = ssub.s32 %s14, 2
    %s27 = sadd.s32 1, %s22
    %p28 = scmp.ge.s32.totalorder %s27, 4
    %s29 = scalar_select %p28, 0, %s27
    %s30 = sadd.s32 1, %s21
    %s31 = scalar_select %p28, %s30, %s21
    %p32 = scmp.ge.s32.totalorder %s31, 2
    %s33 = scalar_select %p32, 0, %s31
    %s34 = ssub.s32 %s21, %s33
    %s35 = ssub.s32 %s22, %s29
    %s36 = sor.u32 %s34, %s35
    %p37 = scmp.eq.s32.totalorder %s36, 0
    %s39 = sadd.s32 %s38, 1
    %s40 = scalar_select %p37, %s38, %s39
    %p43 = pneg %p37
    %p44 = scmp.eq.s32.totalorder %s14, 7
    %p45 = por %p43, %p44
    %p46 = scmp.ne.s32.totalorder %s38, %s41
    %p47 = scmp.eq.s32.totalorder %s14, 0
    %p48 = por %p46, %p47
    %p49 = scmp.ne.s32.totalorder %s38, %s41
    %p50 = scmp.eq.s32.totalorder %s19, 7
    %p51 = por %p49, %p50
    %p52 = scmp.ne.s32.totalorder %s41, %s42
    %p53 = scmp.eq.s32.totalorder %s19, 0
    %p54 = por %p52, %p53
    %p55 = scmp.ne.s32.totalorder %s41, %s42
    %p56 = scmp.eq.s32.totalorder %s20, 7
    %p57 = por %p55, %p56
    %p59 = scmp.ne.s32.totalorder %s42, %s58
    %p60 = scmp.eq.s32.totalorder %s20, 0
    %p61 = por %p59, %p60
    %s62 = smul.u32 %s22, 4
    %s63 = ssub.s32 %s62, 1
    %p64 = scmp.gt.s32.totalorder %s63, 0
    %s65 = scalar_select %p64, %s63, 0
    %s66 = smul.u32 %s29, 4
    %s67 = ssub.s32 %s66, 1
    %p68 = scmp.gt.s32.totalorder %s67, 0
    %s69 = scalar_select %p68, %s67, 0
    %s70 = ssub.s32 %s21, %s33
    %s71 = ssub.s32 %s65, %s69
    %s72 = sor.u32 %s70, %s71
    %p73 = scmp.eq.s32.totalorder %s72, 0
    %s75 = sadd.s32 %s74, 1
    %s76 = scalar_select %p73, %s74, %s75
    %p79 = pneg %p73
    %p80 = scmp.eq.s32.totalorder %s14, 7
    %p81 = por %p79, %p80
    %p82 = scmp.ne.s32.totalorder %s74, %s77
    %p83 = scmp.eq.s32.totalorder %s14, 0
    %p84 = por %p82, %p83
    %p85 = scmp.ne.s32.totalorder %s74, %s77
    %p86 = scmp.eq.s32.totalorder %s19, 7
    %p87 = por %p85, %p86
    %p88 = scmp.ne.s32.totalorder %s77, %s78
    %p89 = scmp.eq.s32.totalorder %s19, 0
    %p90 = por %p88, %p89
    %p91 = scmp.ne.s32.totalorder %s77, %s78
    %p92 = scmp.eq.s32.totalorder %s20, 7
    %p93 = por %p91, %p92
    %p95 = scmp.ne.s32.totalorder %s78, %s94
    %p96 = scmp.eq.s32.totalorder %s20, 0
    %p97 = por %p95, %p96
    %s98 = sadd.s32 %s22, 1
    %s99 = smul.u32 %s98, 4
    %p100 = scmp.lt.s32.totalorder %s99, 15
    %s101 = scalar_select %p100, %s99, 15
    %s102 = sadd.s32 %s29, 1
    %s103 = smul.u32 %s102, 4
    %p104 = scmp.lt.s32.totalorder %s103, 15
    %s105 = scalar_select %p104, %s103, 15
    %s106 = ssub.s32 %s21, %s33
    %s107 = ssub.s32 %s101, %s105
    %s108 = sor.u32 %s106, %s107
    %p109 = scmp.eq.s32.totalorder %s108, 0
    %s111 = sadd.s32 %s110, 1
    %s112 = scalar_select %p109, %s110, %s111
    %p115 = pneg %p109
    %p116 = scmp.eq.s32.totalorder %s14, 7
    %p117 = por %p115, %p116
    %p118 = scmp.ne.s32.totalorder %s110, %s113
    %p119 = scmp.eq.s32.totalorder %s14, 0
    %p120 = por %p118, %p119
    %p121 = scmp.ne.s32.totalorder %s110, %s113
    %p122 = scmp.eq.s32.totalorder %s19, 7
    %p123 = por %p121, %p122
    %p124 = scmp.ne.s32.totalorder %s113, %s114
    %p125 = scmp.eq.s32.totalorder %s19, 0
    %p126 = por %p124, %p125
    %p127 = scmp.ne.s32.totalorder %s113, %s114
    %p128 = scmp.eq.s32.totalorder %s20, 7
    %p129 = por %p127, %p128
    %p131 = scmp.ne.s32.totalorder %s114, %s130
    %p132 = scmp.eq.s32.totalorder %s20, 0
    %p133 = por %p131, %p132
    %s135 = sadd.s32 %s134, 1
    %p138 = scmp.eq.s32.totalorder %s14, 7
    %p139 = scmp.ne.s32.totalorder %s134, %s136
    %p140 = scmp.eq.s32.totalorder %s14, 0
    %p141 = por %p139, %p140
    %p142 = scmp.ne.s32.totalorder %s134, %s136
    %p143 = scmp.eq.s32.totalorder %s19, 7
    %p144 = por %p142, %p143
    %p145 = scmp.ne.s32.totalorder %s136, %s137
    %p146 = scmp.eq.s32.totalorder %s19, 0
    %p147 = por %p145, %p146
    %p148 = scmp.ne.s32.totalorder %s136, %s137
    %p149 = scmp.eq.s32.totalorder %s20, 7
    %p150 = por %p148, %p149
    %p152 = scmp.ne.s32.totalorder %s137, %s151
    %p153 = scmp.eq.s32.totalorder %s20, 0
    %p154 = por %p152, %p153
    %s156 = sadd.s32 %s155, 1
    %p159 = scmp.eq.s32.totalorder %s14, 7
    %p160 = scmp.ne.s32.totalorder %s155, %s157
    %p161 = scmp.eq.s32.totalorder %s14, 0
    %p162 = por %p160, %p161
    %p163 = scmp.ne.s32.totalorder %s155, %s157
    %p164 = scmp.eq.s32.totalorder %s19, 7
    %p165 = por %p163, %p164
    %p166 = scmp.ne.s32.totalorder %s157, %s158
    %p167 = scmp.eq.s32.totalorder %s19, 0
    %p168 = por %p166, %p167
    %p169 = scmp.ne.s32.totalorder %s157, %s158
    %p170 = scmp.eq.s32.totalorder %s20, 7
    %p171 = por %p169, %p170
    %p173 = scmp.ne.s32.totalorder %s158, %s172
    %p174 = scmp.eq.s32.totalorder %s20, 0
    %p175 = por %p173, %p174
    %s176 = ssub.s32 %s21, %s33
    %s177 = ssub.s32 %s22, %s29
    %s178 = sor.u32 %s176, %s177
    %p179 = scmp.eq.s32.totalorder %s178, 0
    %s181 = sadd.s32 %s180, 1
    %s182 = scalar_select %p179, %s180, %s181
    %p185 = pneg %p179
    %p186 = scmp.eq.s32.totalorder %s14, 7
    %p187 = por %p185, %p186
    %p188 = scmp.ne.s32.totalorder %s180, %s183
    %p189 = scmp.eq.s32.totalorder %s14, 0
    %p190 = por %p188, %p189
    %p191 = scmp.ne.s32.totalorder %s180, %s183
    %p192 = scmp.eq.s32.totalorder %s19, 7
    %p193 = por %p191, %p192
    %p194 = scmp.ne.s32.totalorder %s183, %s184
    %p195 = scmp.eq.s32.totalorder %s19, 0
    %p196 = por %p194, %p195
    %p197 = scmp.ne.s32.totalorder %s183, %s184
    %p198 = scmp.eq.s32.totalorder %s20, 7
    %p199 = por %p197, %p198
    %p201 = scmp.ne.s32.totalorder %s184, %s200
    %p202 = scmp.eq.s32.totalorder %s20, 0
    %p203 = por %p201, %p202
    %s204 = ssub.s32 %s21, %s33
    %s205 = ssub.s32 %s22, %s29
    %s206 = sor.u32 %s204, %s205
    %p207 = scmp.eq.s32.totalorder %s206, 0
    %s209 = sadd.s32 %s208, 1
    %s210 = scalar_select %p207, %s208, %s209
    %p213 = pneg %p207
    %p214 = scmp.eq.s32.totalorder %s14, 7
    %p215 = por %p213, %p214
    %p216 = scmp.ne.s32.totalorder %s208, %s211
    %p217 = scmp.eq.s32.totalorder %s14, 0
    %p218 = por %p216, %p217
    %p219 = scmp.ne.s32.totalorder %s208, %s211
    %p220 = scmp.eq.s32.totalorder %s19, 7
    %p221 = por %p219, %p220
    %p222 = scmp.ne.s32.totalorder %s211, %s212
    %p223 = scmp.eq.s32.totalorder %s19, 0
    %p224 = por %p222, %p223
    %p225 = scmp.ne.s32.totalorder %s211, %s212
    %p226 = scmp.eq.s32.totalorder %s20, 7
    %p227 = por %p225, %p226
    %p229 = scmp.ne.s32.totalorder %s212, %s228
    %p230 = scmp.eq.s32.totalorder %s20, 0
    %p231 = por %p229, %p230
    %s232 = ssub.s32 %s21, %s33
    %s233 = ssub.s32 %s22, %s29
    %s234 = sor.u32 %s232, %s233
    %p235 = scmp.eq.s32.totalorder %s234, 0
    %s237 = sadd.s32 %s236, 1
    %s238 = scalar_select %p235, %s236, %s237
    %p241 = pneg %p235
    %p242 = scmp.eq.s32.totalorder %s14, 7
    %p243 = por %p241, %p242
    %p244 = scmp.ne.s32.totalorder %s236, %s239
    %p245 = scmp.eq.s32.totalorder %s14, 0
    %p246 = por %p244, %p245
    %p247 = scmp.ne.s32.totalorder %s236, %s239
    %p248 = scmp.eq.s32.totalorder %s19, 7
    %p249 = por %p247, %p248
    %p250 = scmp.ne.s32.totalorder %s239, %s240
    %p251 = scmp.eq.s32.totalorder %s19, 0
    %p252 = por %p250, %p251
    %p253 = scmp.ne.s32.totalorder %s239, %s240
    %p254 = scmp.eq.s32.totalorder %s20, 7
    %p255 = por %p253, %p254
    %p257 = scmp.ne.s32.totalorder %s240, %s256
    %p258 = scmp.eq.s32.totalorder %s20, 0
    %p259 = por %p257, %p258
    %p260 = scmp.le.s32.totalorder 1, %s14
    %p261 = scmp.lt.s32.totalorder %s14, 9
    %p262 = pnand %p260, %p261
    %p263 = pneg %p262
    // Predicated region
    $region9: #{residual_block_pallas.2} parent=5 // pred_check
      _
    $region10: #{residual_block_pallas.2} parent=5 // pred_check_branch
      %265 = sbr.rel (%p262) target = $region12
    $region11: #{residual_block_pallas.2} parent=5 // pred_region
      %s266 = ssub.s32 %s14, 1
      // Predicated region
      $region13: #{residual_block_pallas.2} parent=11 // pred_check
        %p267 = pneg %p147
      $region14: #{residual_block_pallas.2} parent=11 // pred_check_branch
        %269 = sbr.rel (%p267) target = $region16
      $region15: #{residual_block_pallas.2} parent=11 // pred_region
        _
      $region16: #{residual_block_pallas.2} parent=11 // pred_fallthru
        _
      // Predicated region
      $region17: #{residual_block_pallas.2} parent=11 // pred_check
        %p270 = pneg %p168
      $region18: #{residual_block_pallas.2} parent=11 // pred_check_branch
        %272 = sbr.rel (%p270) target = $region20
      $region19: #{residual_block_pallas.2} parent=11 // pred_region
        _
      $region20: #{residual_block_pallas.2} parent=11 // pred_fallthru
        _
    $region12: #{residual_block_pallas.2} parent=5 // pred_fallthru
      _
    %p273 = scmp.lt.s32.totalorder %s14, 8
    // Predicated region
    $region21: #{residual_block_pallas.2} parent=5 // pred_check
      %p274 = pneg %p273
    $region22: #{residual_block_pallas.2} parent=5 // pred_check_branch
      %276 = sbr.rel (%p274) target = $region24
    $region23: #{residual_block_pallas.2} parent=5 // pred_region
      // Predicated region
      $region25: #{residual_block_pallas.2} parent=23 // pred_check
        %p277 = pneg %p48
      $region26: #{residual_block_pallas.2} parent=23 // pred_check_branch
        %279 = sbr.rel (%p277) target = $region28
      $region27: #{residual_block_pallas.2} parent=23 // pred_region
        %s280 = smul.u32 4, %s22
        %p281 = scmp.lt.s32.totalorder %s21, 1
        %s282 = scalar_select %p281, %s21, 1
        %p283 = scmp.lt.s32.totalorder %s280, 15
        %s284 = scalar_select %p283, %s280, 15
        %s285 = smul.addr %s284, 2
        %s286 = smul.addr %s282, 32
        %s287 = sadd.s32 %s285, %s286
        %s288 = smul.addr %s287, 4
        %s289 = scalar_lea.vmem %s0, %s288
        %s290 = smul.u32 4, %s22
      $region28: #{residual_block_pallas.2} parent=23 // pred_fallthru
        _
      // Predicated region
      $region29: #{residual_block_pallas.2} parent=23 // pred_check
        %p291 = pneg %p84
      $region30: #{residual_block_pallas.2} parent=23 // pred_check_branch
        %293 = sbr.rel (%p291) target = $region32
      $region31: #{residual_block_pallas.2} parent=23 // pred_region
        %s294 = smul.u32 %s22, 4
        %s295 = ssub.s32 %s294, 1
        %p296 = scmp.gt.s32.totalorder %s295, 0
        %s297 = scalar_select %p296, %s295, 0
        %p298 = scmp.lt.s32.totalorder %s21, 1
        %s299 = scalar_select %p298, %s21, 1
        %p300 = scmp.lt.s32.totalorder %s297, 15
        %s301 = scalar_select %p300, %s297, 15
        %s302 = smul.addr %s301, 2
        %s303 = smul.addr %s299, 32
        %s304 = sadd.s32 %s302, %s303
        %s305 = smul.addr %s304, 4
        %s306 = scalar_lea.vmem %s1, %s305
        %s307 = smul.u32 %s22, 4
        %s308 = ssub.s32 %s307, 1
        %p309 = scmp.gt.s32.totalorder %s308, 0
        %s310 = scalar_select %p309, %s308, 0
      $region32: #{residual_block_pallas.2} parent=23 // pred_fallthru
        _
      // Predicated region
      $region33: #{residual_block_pallas.2} parent=23 // pred_check
        %p311 = pneg %p120
      $region34: #{residual_block_pallas.2} parent=23 // pred_check_branch
        %313 = sbr.rel (%p311) target = $region36
      $region35: #{residual_block_pallas.2} parent=23 // pred_region
        %s314 = sadd.s32 %s22, 1
        %s315 = smul.u32 %s314, 4
        %p316 = scmp.lt.s32.totalorder %s315, 15
        %s317 = scalar_select %p316, %s315, 15
        %p318 = scmp.lt.s32.totalorder %s21, 1
        %s319 = scalar_select %p318, %s21, 1
        %p320 = scmp.lt.s32.totalorder %s317, 15
        %s321 = scalar_select %p320, %s317, 15
        %s322 = smul.addr %s321, 2
        %s323 = smul.addr %s319, 32
        %s324 = sadd.s32 %s322, %s323
        %s325 = smul.addr %s324, 4
        %s326 = scalar_lea.vmem %s2, %s325
        %s327 = sadd.s32 %s22, 1
        %s328 = smul.u32 %s327, 4
        %p329 = scmp.lt.s32.totalorder %s328, 15
        %s330 = scalar_select %p329, %s328, 15
      $region36: #{residual_block_pallas.2} parent=23 // pred_fallthru
        _
    $region24: #{residual_block_pallas.2} parent=5 // pred_fallthru
      _
    %p331 = scmp.le.s32.totalorder 1, %s14
    %p332 = scmp.lt.s32.totalorder %s14, 9
    %p333 = pnand %p331, %p332
    %p334 = pneg %p333
    // Predicated region
    $region37: #{residual_block_pallas.2} parent=5 // pred_check
      _
    $region38: #{residual_block_pallas.2} parent=5 // pred_check_branch
      %336 = sbr.rel (%p333) target = $region40
    $region39: #{residual_block_pallas.2} parent=5 // pred_region
      %s337 = ssub.s32 %s14, 1
      %s338 = smul.u32 4, %s24
      %p339 = scmp.lt.s32.totalorder %s23, 1
      %s340 = scalar_select %p339, %s23, 1
      %p341 = scmp.lt.s32.totalorder %s338, 15
      %s342 = scalar_select %p341, %s338, 15
      %s343 = smul.addr %s342, 2
      %s344 = smul.addr %s340, 32
      %s345 = sadd.s32 %s343, %s344
      %s346 = smul.addr %s345, 4
      %s347 = scalar_lea.vmem %s0, %s346
      %p348 = pneg %p54
      %p349 = pneg %p51
      %s350 = smul.u32 %s24, 4
      %s351 = ssub.s32 %s350, 1
      %p352 = scmp.gt.s32.totalorder %s351, 0
      %s353 = scalar_select %p352, %s351, 0
      %p354 = scmp.lt.s32.totalorder %s23, 1
      %s355 = scalar_select %p354, %s23, 1
      %p356 = scmp.lt.s32.totalorder %s353, 15
      %s357 = scalar_select %p356, %s353, 15
      %s358 = smul.addr %s357, 2
      %s359 = smul.addr %s355, 32
      %s360 = sadd.s32 %s358, %s359
      %s361 = smul.addr %s360, 4
      %s362 = scalar_lea.vmem %s1, %s361
      %p363 = pneg %p90
      %p364 = pneg %p87
      %s365 = sadd.s32 %s24, 1
      %s366 = smul.u32 %s365, 4
      %p367 = scmp.lt.s32.totalorder %s366, 15
      %s368 = scalar_select %p367, %s366, 15
      %p369 = scmp.lt.s32.totalorder %s23, 1
      %s370 = scalar_select %p369, %s23, 1
      %p371 = scmp.lt.s32.totalorder %s368, 15
      %s372 = scalar_select %p371, %s368, 15
      %s373 = smul.addr %s372, 2
      %s374 = smul.addr %s370, 32
      %s375 = sadd.s32 %s373, %s374
      %s376 = smul.addr %s375, 4
      %s377 = scalar_lea.vmem %s2, %s376
      %p378 = pneg %p126
      %p379 = pneg %p123
      %p380 = pneg %p147
      %p381 = pneg %p144
      %p382 = pneg %p168
      %p383 = pneg %p165
      %p384 = pneg %p196
      %p385 = pneg %p193
      %s386 = smul.u32 4, %s24
      %p387 = scmp.lt.s32.totalorder %s23, 1
      %s388 = scalar_select %p387, %s23, 1
      %p389 = scmp.lt.s32.totalorder %s386, 15
      %s390 = scalar_select %p389, %s386, 15
      %s391 = smul.addr %s390, 2
      %s392 = smul.addr %s388, 32
      %s393 = sadd.s32 %s391, %s392
      %s394 = smul.addr %s393, 4
      %s395 = scalar_lea.vmem %s5, %s394
      %p396 = pneg %p224
      %p397 = pneg %p221
      %p398 = scmp.lt.s32.totalorder %s23, 1
      %s399 = scalar_select %p398, %s23, 1
      %p400 = scmp.lt.s32.totalorder %s24, 3
      %s401 = scalar_select %p400, %s24, 3
      %s402 = smul.addr %s399, 4
      %s403 = sadd.s32 %s401, %s402
      %s404 = scalar_lea.vmem %s6, %s403
      %p405 = pneg %p252
      %p406 = pneg %p249
      %p407 = scmp.lt.s32.totalorder %s23, 1
      %s408 = scalar_select %p407, %s23, 1
      %p409 = scmp.lt.s32.totalorder %s24, 3
      %s410 = scalar_select %p409, %s24, 3
      %s411 = smul.addr %s408, 4
      %s412 = sadd.s32 %s410, %s411
      %s413 = scalar_lea.vmem %s7, %s412
      %s414 = smul.u32 4, %s24
      %p415 = scmp.lt.s32.totalorder %s23, 1
      %s416 = scalar_select %p415, %s23, 1
      %p417 = scmp.lt.s32.totalorder %s414, 15
      %s418 = scalar_select %p417, %s414, 15
      %s419 = smul.addr %s418, 2
      %s420 = smul.addr %s416, 32
      %s421 = sadd.s32 %s419, %s420
      %s422 = smul.addr %s421, 4
      %s423 = scalar_lea.vmem %s0, %s422
      %s424 = smul.u32 4, %s24
      %s425 = smul.u32 %s24, 4
      %s426 = ssub.s32 %s425, 1
      %p427 = scmp.gt.s32.totalorder %s426, 0
      %s428 = scalar_select %p427, %s426, 0
      %p429 = scmp.lt.s32.totalorder %s23, 1
      %s430 = scalar_select %p429, %s23, 1
      %p431 = scmp.lt.s32.totalorder %s428, 15
      %s432 = scalar_select %p431, %s428, 15
      %s433 = smul.addr %s432, 2
      %s434 = smul.addr %s430, 32
      %s435 = sadd.s32 %s433, %s434
      %s436 = smul.addr %s435, 4
      %s437 = scalar_lea.vmem %s1, %s436
      %s438 = smul.u32 %s24, 4
      %s439 = ssub.s32 %s438, 1
      %p440 = scmp.gt.s32.totalorder %s439, 0
      %s441 = scalar_select %p440, %s439, 0
      %s442 = sadd.s32 %s24, 1
      %s443 = smul.u32 %s442, 4
      %p444 = scmp.lt.s32.totalorder %s443, 15
      %s445 = scalar_select %p444, %s443, 15
      %p446 = scmp.lt.s32.totalorder %s23, 1
      %s447 = scalar_select %p446, %s23, 1
      %p448 = scmp.lt.s32.totalorder %s445, 15
      %s449 = scalar_select %p448, %s445, 15
      %s450 = smul.addr %s449, 2
      %s451 = smul.addr %s447, 32
      %s452 = sadd.s32 %s450, %s451
      %s453 = smul.addr %s452, 4
      %s454 = scalar_lea.vmem %s2, %s453
      %s455 = sadd.s32 %s24, 1
      %s456 = smul.u32 %s455, 4
      %p457 = scmp.lt.s32.totalorder %s456, 15
      %s458 = scalar_select %p457, %s456, 15
      %s459 = smul.u32 4, %s24
      %p460 = scmp.lt.s32.totalorder %s23, 1
      %s461 = scalar_select %p460, %s23, 1
      %p462 = scmp.lt.s32.totalorder %s459, 15
      %s463 = scalar_select %p462, %s459, 15
      %s464 = smul.addr %s463, 2
      %s465 = smul.addr %s461, 32
      %s466 = sadd.s32 %s464, %s465
      %s467 = smul.addr %s466, 4
      %s468 = scalar_lea.vmem %s5, %s467
      %s469 = smul.u32 4, %s24
      %p470 = scmp.lt.s32.totalorder %s23, 1
      %s471 = scalar_select %p470, %s23, 1
      %p472 = scmp.lt.s32.totalorder %s24, 3
      %s473 = scalar_select %p472, %s24, 3
      %s474 = smul.addr %s471, 4
      %s475 = sadd.s32 %s473, %s474
      %s476 = scalar_lea.vmem %s6, %s475
      %p477 = scmp.lt.s32.totalorder %s23, 1
      %s478 = scalar_select %p477, %s23, 1
      %p479 = scmp.lt.s32.totalorder %s24, 3
      %s480 = scalar_select %p479, %s24, 3
      %s481 = smul.addr %s478, 4
      %s482 = sadd.s32 %s480, %s481
      %s483 = scalar_lea.vmem %s7, %s482
      %p485 = scmp.eq.s32.totalorder %s24, 0
      %v486 = vld [vmem:[%s437] sm:$0xf]
      %v487 = vld [vmem:[%s437 + $0x4] sm:$0xf]
      %s488 = scalar_select %p485, 1, 0
      %v489 = vstv %s488
      %vm490 = vcmp.eq.s32.totalorder %v489, 1
      %v491 = vsel %vm490, 0, %v486
      %v492 = vsel %vm490, 0, %v487
      %p493 = scmp.eq.s32.totalorder %s24, 3
      %v494 = vld [vmem:[%s454] sm:$0xf]
      %v495 = vld [vmem:[%s454 + $0x4] sm:$0xf]
      %s496 = scalar_select %p493, 1, 0
      %v497 = vstv %s496
      %vm498 = vcmp.eq.s32.totalorder %v497, 1
      %v499 = vsel %vm498, 0, %v494
      %v500 = vsel %vm498, 0, %v495
      %v501 = vld [vmem:[%s423] sm:$0xf]
      %v502 = vld [vmem:[%s423 + $0x4] sm:$0xf]
      %v503 = vld [vmem:[%s423 + $0x8] sm:$0xf]
      %v504 = vld [vmem:[%s423 + $0xc] sm:$0xf]
      %v505 = vld [vmem:[%s423 + $0x10] sm:$0xf]
      %v506 = vld [vmem:[%s423 + $0x14] sm:$0xf]
      %v507 = vld [vmem:[%s423 + $0x18] sm:$0xf]
      %v508 = vld [vmem:[%s423 + $0x1c] sm:$0xf]
      %v517 = vunpack.c.l.b16 %v491
      %v518 = vunpack.c.l.b16 %v492
      %v519 = vunpack.c.l.b16 %v501
      %v520 = vunpack.c.l.b16 %v502
      %v521 = vunpack.c.l.b16 %v503
      %v522 = vunpack.c.l.b16 %v504
      %v523 = vunpack.c.l.b16 %v505
      %v524 = vunpack.c.l.b16 %v506
      %v525 = vpack.c.b16 %v518, %v517
      %v526 = vpack.c.b16 %v520, %v519
      %v527 = vpack.c.b16 %v522, %v521
      %v528 = vpack.c.b16 %v524, %v523
      %v535 = vunpack.c.l.b16 %v507
      %v536 = vunpack.c.l.b16 %v508
      %v537 = vpack.c.b16 %v536, %v535
      %v541 = vunpack.c.l.b16 %v499
      %v542 = vunpack.c.l.b16 %v500
      %v543 = vpack.c.b16 %v542, %v541
      %v545 = vld [vmem:[%s3] sm:$0xff]
      %v546 = vld [vmem:[%s3 + $0x8] sm:$0xf]
      %v547 = vld [vmem:[%s3 + $0xc] sm:$0xff]
      %v548 = vld [vmem:[%s3 + $0x14] sm:$0xf]
      %v549 = vld [vmem:[%s3 + $0x18] sm:$0xff]
      %v550 = vld [vmem:[%s3 + $0x20] sm:$0xf]
      %v551 = vld [vmem:[%s3 + $0x24] sm:$0xff]
      %v552 = vld [vmem:[%s3 + $0x2c] sm:$0xf]
      %v553 = vld [vmem:[%s3 + $0x30] sm:$0xff]
      %v554 = vld [vmem:[%s3 + $0x38] sm:$0xf]
      %v555 = vld [vmem:[%s3 + $0x3c] sm:$0xff]
      %v556 = vld [vmem:[%s3 + $0x44] sm:$0xf]
      %v557 = vld [vmem:[%s3 + $0x48] sm:$0xff]
      %v558 = vld [vmem:[%s3 + $0x50] sm:$0xf]
      %v559 = vld [vmem:[%s3 + $0x54] sm:$0xff]
      %v560 = vld [vmem:[%s3 + $0x5c] sm:$0xf]
      %v561 = vld [vmem:[%s3 + $0x60] sm:$0xff]
      %v562 = vld [vmem:[%s3 + $0x68] sm:$0xf]
      %v563 = vld [vmem:[%s3 + $0x6c] sm:$0xff]
      %v564 = vld [vmem:[%s3 + $0x74] sm:$0xf]
      %v565 = vld [vmem:[%s3 + $0x78] sm:$0xff]
      %v566 = vld [vmem:[%s3 + $0x80] sm:$0xf]
      %v567 = vld [vmem:[%s3 + $0x84] sm:$0xff]
      %v568 = vld [vmem:[%s3 + $0x8c] sm:$0xf]
      %v569 = vld [vmem:[%s3 + $0x90] sm:$0xff]
      %v570 = vld [vmem:[%s3 + $0x98] sm:$0xf]
      %v571 = vld [vmem:[%s3 + $0x9c] sm:$0xff]
      %v572 = vld [vmem:[%s3 + $0xa4] sm:$0xf]
      %v573 = vld [vmem:[%s3 + $0xa8] sm:$0xff]
      %v574 = vld [vmem:[%s3 + $0xb0] sm:$0xf]
      %v575 = vld [vmem:[%s3 + $0xb4] sm:$0xff]
      %v576 = vld [vmem:[%s3 + $0xbc] sm:$0xf]
      %v577 = vld [vmem:[%s3 + $0xc0] sm:$0xff]
      %v578 = vld [vmem:[%s3 + $0xc8] sm:$0xf]
      %v579 = vld [vmem:[%s3 + $0xcc] sm:$0xff]
      %v580 = vld [vmem:[%s3 + $0xd4] sm:$0xf]
      %v581 = vld [vmem:[%s3 + $0xd8] sm:$0xff]
      %v582 = vld [vmem:[%s3 + $0xe0] sm:$0xf]
      %v583 = vld [vmem:[%s3 + $0xe4] sm:$0xff]
      %v584 = vld [vmem:[%s3 + $0xec] sm:$0xf]
      %v585 = vld [vmem:[%s3 + $0xf0] sm:$0xff]
      %v586 = vld [vmem:[%s3 + $0xf8] sm:$0xf]
      %v587 = vld [vmem:[%s3 + $0xfc] sm:$0xff]
      %v588 = vld [vmem:[%s3 + $0x104] sm:$0xf]
      %v589 = vld [vmem:[%s3 + $0x108] sm:$0xff]
      %v590 = vld [vmem:[%s3 + $0x110] sm:$0xf]
      %v591 = vld [vmem:[%s3 + $0x114] sm:$0xff]
      %v592 = vld [vmem:[%s3 + $0x11c] sm:$0xf]
      %v593 = vld [vmem:[%s3 + $0x120] sm:$0xff]
      %v594 = vld [vmem:[%s3 + $0x128] sm:$0xf]
      %v595 = vld [vmem:[%s3 + $0x12c] sm:$0xff]
      %v596 = vld [vmem:[%s3 + $0x134] sm:$0xf]
      %v597 = vld [vmem:[%s3 + $0x138] sm:$0xff]
      %v598 = vld [vmem:[%s3 + $0x140] sm:$0xf]
      %v599 = vld [vmem:[%s3 + $0x144] sm:$0xff]
      %v600 = vld [vmem:[%s3 + $0x14c] sm:$0xf]
      %v601 = vld [vmem:[%s3 + $0x150] sm:$0xff]
      %v602 = vld [vmem:[%s3 + $0x158] sm:$0xf]
      %v603 = vld [vmem:[%s3 + $0x15c] sm:$0xff]
      %v604 = vld [vmem:[%s3 + $0x164] sm:$0xf]
      %v605 = vld [vmem:[%s3 + $0x168] sm:$0xff]
      %v606 = vld [vmem:[%s3 + $0x170] sm:$0xf]
      %v607 = vld [vmem:[%s3 + $0x174] sm:$0xff]
      %v608 = vld [vmem:[%s3 + $0x17c] sm:$0xf]
      %v609 = vld [vmem:[%s3 + $0x180] sm:$0xff]
      %v610 = vld [vmem:[%s3 + $0x188] sm:$0xf]
      %v611 = vld [vmem:[%s3 + $0x18c] sm:$0xff]
      %v612 = vld [vmem:[%s3 + $0x194] sm:$0xf]
      %v613 = vld [vmem:[%s3 + $0x198] sm:$0xff]
      %v614 = vld [vmem:[%s3 + $0x1a0] sm:$0xf]
      %v615 = vld [vmem:[%s3 + $0x1a4] sm:$0xff]
      %v616 = vld [vmem:[%s3 + $0x1ac] sm:$0xf]
      %v617 = vld [vmem:[%s3 + $0x1b0] sm:$0xff]
      %v618 = vld [vmem:[%s3 + $0x1b8] sm:$0xf]
      %v619 = vld [vmem:[%s3 + $0x1bc] sm:$0xff]
      %v620 = vld [vmem:[%s3 + $0x1c4] sm:$0xf]
      %v621 = vld [vmem:[%s3 + $0x1c8] sm:$0xff]
      %v622 = vld [vmem:[%s3 + $0x1d0] sm:$0xf]
      %v623 = vld [vmem:[%s3 + $0x1d4] sm:$0xff]
      %v624 = vld [vmem:[%s3 + $0x1dc] sm:$0xf]
      %v625 = vld [vmem:[%s3 + $0x1e0] sm:$0xff]
      %v626 = vld [vmem:[%s3 + $0x1e8] sm:$0xf]
      %v627 = vld [vmem:[%s3 + $0x1ec] sm:$0xff]
      %v628 = vld [vmem:[%s3 + $0x1f4] sm:$0xf]
      %v629 = vld [vmem:[%s3 + $0x1f8] sm:$0xff]
      %v630 = vld [vmem:[%s3 + $0x200] sm:$0xf]
      %v631 = vld [vmem:[%s3 + $0x204] sm:$0xff]
      %v632 = vld [vmem:[%s3 + $0x20c] sm:$0xf]
      %v633 = vld [vmem:[%s3 + $0x210] sm:$0xff]
      %v634 = vld [vmem:[%s3 + $0x218] sm:$0xf]
      %v635 = vld [vmem:[%s3 + $0x21c] sm:$0xff]
      %v636 = vld [vmem:[%s3 + $0x224] sm:$0xf]
      %v637 = vld [vmem:[%s3 + $0x228] sm:$0xff]
      %v638 = vld [vmem:[%s3 + $0x230] sm:$0xf]
      %v639 = vld [vmem:[%s3 + $0x234] sm:$0xff]
      %v640 = vld [vmem:[%s3 + $0x23c] sm:$0xf]
      %v737 = vunpack.c.l.b16 %v545
      %v738 = vunpack.c.h.b16 %v545
      %v739 = vunpack.c.l.b16 %v546
      %v740 = vunpack.c.l.b16 %v547
      %v741 = vunpack.c.h.b16 %v547
      %v742 = vunpack.c.l.b16 %v548
      %v743 = vunpack.c.l.b16 %v549
      %v744 = vunpack.c.h.b16 %v549
      %v745 = vunpack.c.l.b16 %v550
      %v746 = vunpack.c.l.b16 %v551
      %v747 = vunpack.c.h.b16 %v551
      %v748 = vunpack.c.l.b16 %v552
      %v749 = vunpack.c.l.b16 %v553
      %v750 = vunpack.c.h.b16 %v553
      %v751 = vunpack.c.l.b16 %v554
      %v752 = vunpack.c.l.b16 %v555
      %v753 = vunpack.c.h.b16 %v555
      %v754 = vunpack.c.l.b16 %v556
      %v755 = vunpack.c.l.b16 %v557
      %v756 = vunpack.c.h.b16 %v557
      %v757 = vunpack.c.l.b16 %v558
      %v758 = vunpack.c.l.b16 %v559
      %v759 = vunpack.c.h.b16 %v559
      %v760 = vunpack.c.l.b16 %v560
      %v761 = vunpack.c.l.b16 %v561
      %v762 = vunpack.c.h.b16 %v561
      %v763 = vunpack.c.l.b16 %v562
      %v764 = vunpack.c.l.b16 %v563
      %v765 = vunpack.c.h.b16 %v563
      %v766 = vunpack.c.l.b16 %v564
      %v767 = vunpack.c.l.b16 %v565
      %v768 = vunpack.c.h.b16 %v565
      %v769 = vunpack.c.l.b16 %v566
      %v770 = vunpack.c.l.b16 %v567
      %v771 = vunpack.c.h.b16 %v567
      %v772 = vunpack.c.l.b16 %v568
      %v773 = vunpack.c.l.b16 %v569
      %v774 = vunpack.c.h.b16 %v569
      %v775 = vunpack.c.l.b16 %v570
      %v776 = vunpack.c.l.b16 %v571
      %v777 = vunpack.c.h.b16 %v571
      %v778 = vunpack.c.l.b16 %v572
      %v779 = vunpack.c.l.b16 %v573
      %v780 = vunpack.c.h.b16 %v573
      %v781 = vunpack.c.l.b16 %v574
      %v782 = vunpack.c.l.b16 %v575
      %v783 = vunpack.c.h.b16 %v575
      %v784 = vunpack.c.l.b16 %v576
      %v785 = vunpack.c.l.b16 %v577
      %v786 = vunpack.c.h.b16 %v577
      %v787 = vunpack.c.l.b16 %v578
      %v788 = vunpack.c.l.b16 %v579
      %v789 = vunpack.c.h.b16 %v579
      %v790 = vunpack.c.l.b16 %v580
      %v791 = vunpack.c.l.b16 %v581
      %v792 = vunpack.c.h.b16 %v581
      %v793 = vunpack.c.l.b16 %v582
      %v794 = vunpack.c.l.b16 %v583
      %v795 = vunpack.c.h.b16 %v583
      %v796 = vunpack.c.l.b16 %v584
      %v797 = vunpack.c.l.b16 %v585
      %v798 = vunpack.c.h.b16 %v585
      %v799 = vunpack.c.l.b16 %v586
      %v800 = vunpack.c.l.b16 %v587
      %v801 = vunpack.c.h.b16 %v587
      %v802 = vunpack.c.l.b16 %v588
      %v803 = vunpack.c.l.b16 %v589
      %v804 = vunpack.c.h.b16 %v589
      %v805 = vunpack.c.l.b16 %v590
      %v806 = vunpack.c.l.b16 %v591
      %v807 = vunpack.c.h.b16 %v591
      %v808 = vunpack.c.l.b16 %v592
      %v809 = vunpack.c.l.b16 %v593
      %v810 = vunpack.c.h.b16 %v593
      %v811 = vunpack.c.l.b16 %v594
      %v812 = vunpack.c.l.b16 %v595
      %v813 = vunpack.c.h.b16 %v595
      %v814 = vunpack.c.l.b16 %v596
      %v815 = vunpack.c.l.b16 %v597
      %v816 = vunpack.c.h.b16 %v597
      %v817 = vunpack.c.l.b16 %v598
      %v818 = vunpack.c.l.b16 %v599
      %v819 = vunpack.c.h.b16 %v599
      %v820 = vunpack.c.l.b16 %v600
      %v821 = vunpack.c.l.b16 %v601
      %v822 = vunpack.c.h.b16 %v601
      %v823 = vunpack.c.l.b16 %v602
      %v824 = vunpack.c.l.b16 %v603
      %v825 = vunpack.c.h.b16 %v603
      %v826 = vunpack.c.l.b16 %v604
      %v827 = vunpack.c.l.b16 %v605
      %v828 = vunpack.c.h.b16 %v605
      %v829 = vunpack.c.l.b16 %v606
      %v830 = vunpack.c.l.b16 %v607
      %v831 = vunpack.c.h.b16 %v607
      %v832 = vunpack.c.l.b16 %v608
      %v833 = vunpack.c.l.b16 %v609
      %v834 = vunpack.c.h.b16 %v609
      %v835 = vunpack.c.l.b16 %v610
      %v836 = vunpack.c.l.b16 %v611
      %v837 = vunpack.c.h.b16 %v611
      %v838 = vunpack.c.l.b16 %v612
      %v839 = vunpack.c.l.b16 %v613
      %v840 = vunpack.c.h.b16 %v613
      %v841 = vunpack.c.l.b16 %v614
      %v842 = vunpack.c.l.b16 %v615
      %v843 = vunpack.c.h.b16 %v615
      %v844 = vunpack.c.l.b16 %v616
      %v845 = vunpack.c.l.b16 %v617
      %v846 = vunpack.c.h.b16 %v617
      %v847 = vunpack.c.l.b16 %v618
      %v848 = vunpack.c.l.b16 %v619
      %v849 = vunpack.c.h.b16 %v619
      %v850 = vunpack.c.l.b16 %v620
      %v851 = vunpack.c.l.b16 %v621
      %v852 = vunpack.c.h.b16 %v621
      %v853 = vunpack.c.l.b16 %v622
      %v854 = vunpack.c.l.b16 %v623
      %v855 = vunpack.c.h.b16 %v623
      %v856 = vunpack.c.l.b16 %v624
      %v857 = vunpack.c.l.b16 %v625
      %v858 = vunpack.c.h.b16 %v625
      %v859 = vunpack.c.l.b16 %v626
      %v860 = vunpack.c.l.b16 %v627
      %v861 = vunpack.c.h.b16 %v627
      %v862 = vunpack.c.l.b16 %v628
      %v863 = vunpack.c.l.b16 %v629
      %v864 = vunpack.c.h.b16 %v629
      %v865 = vunpack.c.l.b16 %v630
      %v866 = vunpack.c.l.b16 %v631
      %v867 = vunpack.c.h.b16 %v631
      %v868 = vunpack.c.l.b16 %v632
      %v869 = vunpack.c.l.b16 %v633
      %v870 = vunpack.c.h.b16 %v633
      %v871 = vunpack.c.l.b16 %v634
      %v872 = vunpack.c.l.b16 %v635
      %v873 = vunpack.c.h.b16 %v635
      %v874 = vunpack.c.l.b16 %v636
      %v875 = vunpack.c.l.b16 %v637
      %v876 = vunpack.c.h.b16 %v637
      %v877 = vunpack.c.l.b16 %v638
      %v878 = vunpack.c.l.b16 %v639
      %v879 = vunpack.c.h.b16 %v639
      %v880 = vunpack.c.l.b16 %v640
      %v881 = vpack.c.b16 %v740, %v737
      %v882 = vpack.c.b16 %v741, %v738
      %v883 = vpack.c.b16 %v742, %v739
      %v884 = vpack.c.b16 %v746, %v743
      %v885 = vpack.c.b16 %v747, %v744
      %v886 = vpack.c.b16 %v748, %v745
      %v887 = vpack.c.b16 %v752, %v749
      %v888 = vpack.c.b16 %v753, %v750
      %v889 = vpack.c.b16 %v754, %v751
      %v890 = vpack.c.b16 %v758, %v755
      %v891 = vpack.c.b16 %v759, %v756
      %v892 = vpack.c.b16 %v760, %v757
      %v893 = vpack.c.b16 %v764, %v761
      %v894 = vpack.c.b16 %v765, %v762
      %v895 = vpack.c.b16 %v766, %v763
      %v896 = vpack.c.b16 %v770, %v767
      %v897 = vpack.c.b16 %v771, %v768
      %v898 = vpack.c.b16 %v772, %v769
      %v899 = vpack.c.b16 %v776, %v773
      %v900 = vpack.c.b16 %v777, %v774
      %v901 = vpack.c.b16 %v778, %v775
      %v902 = vpack.c.b16 %v782, %v779
      %v903 = vpack.c.b16 %v783, %v780
      %v904 = vpack.c.b16 %v784, %v781
      %v905 = vpack.c.b16 %v788, %v785
      %v906 = vpack.c.b16 %v789, %v786
      %v907 = vpack.c.b16 %v790, %v787
      %v908 = vpack.c.b16 %v794, %v791
      %v909 = vpack.c.b16 %v795, %v792
      %v910 = vpack.c.b16 %v796, %v793
      %v911 = vpack.c.b16 %v800, %v797
      %v912 = vpack.c.b16 %v801, %v798
      %v913 = vpack.c.b16 %v802, %v799
      %v914 = vpack.c.b16 %v806, %v803
      %v915 = vpack.c.b16 %v807, %v804
      %v916 = vpack.c.b16 %v808, %v805
      %v917 = vpack.c.b16 %v812, %v809
      %v918 = vpack.c.b16 %v813, %v810
      %v919 = vpack.c.b16 %v814, %v811
      %v920 = vpack.c.b16 %v818, %v815
      %v921 = vpack.c.b16 %v819, %v816
      %v922 = vpack.c.b16 %v820, %v817
      %v923 = vpack.c.b16 %v824, %v821
      %v924 = vpack.c.b16 %v825, %v822
      %v925 = vpack.c.b16 %v826, %v823
      %v926 = vpack.c.b16 %v830, %v827
      %v927 = vpack.c.b16 %v831, %v828
      %v928 = vpack.c.b16 %v832, %v829
      %v929 = vpack.c.b16 %v836, %v833
      %v930 = vpack.c.b16 %v837, %v834
      %v931 = vpack.c.b16 %v838, %v835
      %v932 = vpack.c.b16 %v842, %v839
      %v933 = vpack.c.b16 %v843, %v840
      %v934 = vpack.c.b16 %v844, %v841
      %v935 = vpack.c.b16 %v848, %v845
      %v936 = vpack.c.b16 %v849, %v846
      %v937 = vpack.c.b16 %v850, %v847
      %v938 = vpack.c.b16 %v854, %v851
      %v939 = vpack.c.b16 %v855, %v852
      %v940 = vpack.c.b16 %v856, %v853
      %v941 = vpack.c.b16 %v860, %v857
      %v942 = vpack.c.b16 %v861, %v858
      %v943 = vpack.c.b16 %v862, %v859
      %v944 = vpack.c.b16 %v866, %v863
      %v945 = vpack.c.b16 %v867, %v864
      %v946 = vpack.c.b16 %v868, %v865
      %v947 = vpack.c.b16 %v872, %v869
      %v948 = vpack.c.b16 %v873, %v870
      %v949 = vpack.c.b16 %v874, %v871
      %v950 = vpack.c.b16 %v878, %v875
      %v951 = vpack.c.b16 %v879, %v876
      %v952 = vpack.c.b16 %v880, %v877
      %1025 = vmatprep.subr.bf16.mxu0 %v903
      %1026 = vmatpush1.bf16.msra.mxu0 %v902
      %1027 = vmatprep.subr.bf16.mxu0 %v900
      %1028 = vmatpush1.bf16.msra.mxu0 %v899
      %1029 = vmatprep.subr.bf16.mxu0 %v897
      %1030 = vmatpush1.bf16.msra.mxu0 %v896
      %1031 = vmatprep.subr.bf16.mxu0 %v894
      %1032 = vmatpush1.bf16.msra.mxu0 %v893
      %1033 = vmatprep.subr.bf16.mxu0 %v891
      %1034 = vmatpush1.bf16.msra.mxu0 %v890
      %1035 = vmatprep.subr.bf16.mxu0 %v888
      %1036 = vmatpush1.bf16.msra.mxu0 %v887
      %1037 = vmatprep.subr.bf16.mxu0 %v885
      %1038 = vmatpush1.bf16.msra.mxu0 %v884
      %1039 = vmatprep.subr.bf16.mxu0 %v882
      %1040 = vmatpush1.bf16.msra.mxu0 %v881
      %1041 = vmatprep.subr.bf16.mxu0 %v927
      %1042 = vmatpush2.bf16.msra.mxu0 %v926
      %1043 = vmatprep.subr.bf16.mxu0 %v924
      %1044 = vmatpush2.bf16.msra.mxu0 %v923
      %1045 = vmatprep.subr.bf16.mxu0 %v921
      %1046 = vmatpush2.bf16.msra.mxu0 %v920
      %1047 = vmatprep.subr.bf16.mxu0 %v918
      %1048 = vmatpush2.bf16.msra.mxu0 %v917
      %1049 = vmatprep.subr.bf16.mxu0 %v915
      %1050 = vmatpush2.bf16.msra.mxu0 %v914
      %1051 = vmatprep.subr.bf16.mxu0 %v912
      %1052 = vmatpush2.bf16.msra.mxu0 %v911
      %1053 = vmatprep.subr.bf16.mxu0 %v909
      %1054 = vmatpush2.bf16.msra.mxu0 %v908
      %1055 = vmatprep.subr.bf16.mxu0 %v906
      %1056 = vmatpush2.bf16.msra.mxu0 %v905
      %1057 = vmatprep.mubr.bf16.mxu0 %v526
      %1058 = vmatmul.mubr.bf16.gmra.mxu0 %v525
      %v1059 = vpop.f32.mrf.mxu0
      %v1060 = vadd.f32 0.0, %v1059
      %v1061 = vpop.f32.mrf.mxu0
      %v1062 = vadd.f32 0.0, %v1061
      %v1063 = vpop.f32.mrf.mxu0
      %v1064 = vadd.f32 0.0, %v1063
      %v1065 = vpop.f32.mrf.mxu0
      %v1066 = vadd.f32 0.0, %v1065
      %1067 = vmatprep.mubr.bf16.mxu0 %v527
      %1068 = vmatmul.mubr.bf16.gmra.mxu0 %v526
      %v1069 = vpop.f32.mrf.mxu0
      %v1070 = vadd.f32 0.0, %v1069
      %v1071 = vpop.f32.mrf.mxu0
      %v1072 = vadd.f32 0.0, %v1071
      %v1073 = vpop.f32.mrf.mxu0
      %v1074 = vadd.f32 0.0, %v1073
      %v1075 = vpop.f32.mrf.mxu0
      %v1076 = vadd.f32 0.0, %v1075
      %1077 = vmatprep.mubr.bf16.mxu0 %v528
      %1078 = vmatmul.mubr.bf16.gmra.mxu0 %v527
      %v1079 = vpop.f32.mrf.mxu0
      %v1080 = vadd.f32 0.0, %v1079
      %v1081 = vpop.f32.mrf.mxu0
      %v1082 = vadd.f32 0.0, %v1081
      %v1083 = vpop.f32.mrf.mxu0
      %v1084 = vadd.f32 0.0, %v1083
      %v1085 = vpop.f32.mrf.mxu0
      %v1086 = vadd.f32 0.0, %v1085
      %1087 = vmatprep.mubr.bf16.mxu0 %v537
      %1088 = vmatmul.mubr.bf16.gmra.mxu0 %v528
      %v1089 = vpop.f32.mrf.mxu0
      %v1090 = vadd.f32 0.0, %v1089
      %v1091 = vpop.f32.mrf.mxu0
      %v1092 = vadd.f32 0.0, %v1091
      %v1093 = vpop.f32.mrf.mxu0
      %v1094 = vadd.f32 0.0, %v1093
      %v1095 = vpop.f32.mrf.mxu0
      %v1096 = vadd.f32 0.0, %v1095
      %1097 = vdwg.mxu0
      %1098 = vmatprep.subr.bf16.mxu0 %v951
      %1099 = vmatpush1.bf16.msra.mxu0 %v950
      %1100 = vmatprep.subr.bf16.mxu0 %v948
      %1101 = vmatpush1.bf16.msra.mxu0 %v947
      %1102 = vmatprep.subr.bf16.mxu0 %v945
      %1103 = vmatpush1.bf16.msra.mxu0 %v944
      %1104 = vmatprep.subr.bf16.mxu0 %v942
      %1105 = vmatpush1.bf16.msra.mxu0 %v941
      %1106 = vmatprep.subr.bf16.mxu0 %v939
      %1107 = vmatpush1.bf16.msra.mxu0 %v938
      %1108 = vmatprep.subr.bf16.mxu0 %v936
      %1109 = vmatpush1.bf16.msra.mxu0 %v935
      %1110 = vmatprep.subr.bf16.mxu0 %v933
      %1111 = vmatpush1.bf16.msra.mxu0 %v932
      %1112 = vmatprep.subr.bf16.mxu0 %v930
      %1113 = vmatpush1.bf16.msra.mxu0 %v929
      %1114 = vmatprep.subr.bf16.mxu0 0
      %1115 = vmatpush2.bf16.msra.mxu0 0
      %1116 = vmatprep.subr.bf16.mxu0 0
      %1117 = vmatpush2.bf16.msra.mxu0 0
      %1118 = vmatprep.subr.bf16.mxu0 0
      %1119 = vmatpush2.bf16.msra.mxu0 0
      %1120 = vmatprep.subr.bf16.mxu0 0
      %1121 = vmatpush2.bf16.msra.mxu0 0
      %1122 = vmatprep.subr.bf16.mxu0 0
      %1123 = vmatpush2.bf16.msra.mxu0 0
      %1124 = vmatprep.subr.bf16.mxu0 0
      %1125 = vmatpush2.bf16.msra.mxu0 0
      %1126 = vmatprep.subr.bf16.mxu0 0
      %1127 = vmatpush2.bf16.msra.mxu0 0
      %1128 = vmatprep.subr.bf16.mxu0 0
      %1129 = vmatpush2.bf16.msra.mxu0 0
      %1130 = vmatprep.mubr.bf16.mxu0 0
      %1131 = vmatmul.mubr.bf16.gmra.mxu0 %v527
      %v1132 = vpop.f32.mrf.mxu0
      %v1133 = vadd.f32 %v1060, %v1132
      %v1134 = vpop.f32.mrf.mxu0
      %v1135 = vadd.f32 %v1062, %v1134
      %v1136 = vpop.f32.mrf.mxu0
      %v1137 = vadd.f32 %v1064, %v1136
      %v1138 = vpop.f32.mrf.mxu0
      %v1139 = vadd.f32 %v1066, %v1138
      %1140 = vmatprep.mubr.bf16.mxu0 0
      %1141 = vmatmul.mubr.bf16.gmra.mxu0 %v528
      %v1142 = vpop.f32.mrf.mxu0
      %v1143 = vadd.f32 %v1070, %v1142
      %v1144 = vpop.f32.mrf.mxu0
      %v1145 = vadd.f32 %v1072, %v1144
      %v1146 = vpop.f32.mrf.mxu0
      %v1147 = vadd.f32 %v1074, %v1146
      %v1148 = vpop.f32.mrf.mxu0
      %v1149 = vadd.f32 %v1076, %v1148
      %1150 = vmatprep.mubr.bf16.mxu0 0
      %1151 = vmatmul.mubr.bf16.gmra.mxu0 %v537
      %v1152 = vpop.f32.mrf.mxu0
      %v1153 = vadd.f32 %v1080, %v1152
      %v1154 = vpop.f32.mrf.mxu0
      %v1155 = vadd.f32 %v1082, %v1154
      %v1156 = vpop.f32.mrf.mxu0
      %v1157 = vadd.f32 %v1084, %v1156
      %v1158 = vpop.f32.mrf.mxu0
      %v1159 = vadd.f32 %v1086, %v1158
      %1160 = vmatprep.mubr.bf16.mxu0 0
      %1161 = vmatmul.mubr.bf16.gmra.mxu0 %v543
      %v1162 = vpop.f32.mrf.mxu0
      %v1163 = vadd.f32 %v1090, %v1162
      %v1164 = vpop.f32.mrf.mxu0
      %v1165 = vadd.f32 %v1092, %v1164
      %v1166 = vpop.f32.mrf.mxu0
      %v1167 = vadd.f32 %v1094, %v1166
      %v1168 = vpop.f32.mrf.mxu0
      %v1169 = vadd.f32 %v1096, %v1168
      %1170 = vdwg.mxu0
      %1171 = vmatprep.subr.bf16.mxu0 0
      %1172 = vmatpush1.bf16.msra.mxu0 %v904
      %1173 = vmatprep.subr.bf16.mxu0 0
      %1174 = vmatpush1.bf16.msra.mxu0 %v901
      %1175 = vmatprep.subr.bf16.mxu0 0
      %1176 = vmatpush1.bf16.msra.mxu0 %v898
      %1177 = vmatprep.subr.bf16.mxu0 0
      %1178 = vmatpush1.bf16.msra.mxu0 %v895
      %1179 = vmatprep.subr.bf16.mxu0 0
      %1180 = vmatpush1.bf16.msra.mxu0 %v892
      %1181 = vmatprep.subr.bf16.mxu0 0
      %1182 = vmatpush1.bf16.msra.mxu0 %v889
      %1183 = vmatprep.subr.bf16.mxu0 0
      %1184 = vmatpush1.bf16.msra.mxu0 %v886
      %1185 = vmatprep.subr.bf16.mxu0 0
      %1186 = vmatpush1.bf16.msra.mxu0 %v883
      %1187 = vmatprep.subr.bf16.mxu0 0
      %1188 = vmatpush2.bf16.msra.mxu0 %v928
      %1189 = vmatprep.subr.bf16.mxu0 0
      %1190 = vmatpush2.bf16.msra.mxu0 %v925
      %1191 = vmatprep.subr.bf16.mxu0 0
      %1192 = vmatpush2.bf16.msra.mxu0 %v922
      %1193 = vmatprep.subr.bf16.mxu0 0
      %1194 = vmatpush2.bf16.msra.mxu0 %v919
      %1195 = vmatprep.subr.bf16.mxu0 0
      %1196 = vmatpush2.bf16.msra.mxu0 %v916
      %1197 = vmatprep.subr.bf16.mxu0 0
      %1198 = vmatpush2.bf16.msra.mxu0 %v913
      %1199 = vmatprep.subr.bf16.mxu0 0
      %1200 = vmatpush2.bf16.msra.mxu0 %v910
      %1201 = vmatprep.subr.bf16.mxu0 0
      %1202 = vmatpush2.bf16.msra.mxu0 %v907
      %1203 = vmatprep.mubr.bf16.mxu0 %v526
      %1204 = vmatmul.mubr.bf16.gmra.mxu0 %v525
      %v1205 = vpop.f32.mrf.mxu0
      %v1206 = vadd.f32 0.0, %v1205
      %v1207 = vpop.f32.mrf.mxu0
      %v1208 = vpop.f32.mrf.mxu0
      %v1209 = vadd.f32 0.0, %v1208
      %v1210 = vpop.f32.mrf.mxu0
      %1211 = vmatprep.mubr.bf16.mxu0 %v527
      %1212 = vmatmul.mubr.bf16.gmra.mxu0 %v526
      %v1213 = vpop.f32.mrf.mxu0
      %v1214 = vadd.f32 0.0, %v1213
      %v1215 = vpop.f32.mrf.mxu0
      %v1216 = vpop.f32.mrf.mxu0
      %v1217 = vadd.f32 0.0, %v1216
      %v1218 = vpop.f32.mrf.mxu0
      %1219 = vmatprep.mubr.bf16.mxu0 %v528
      %1220 = vmatmul.mubr.bf16.gmra.mxu0 %v527
      %v1221 = vpop.f32.mrf.mxu0
      %v1222 = vadd.f32 0.0, %v1221
      %v1223 = vpop.f32.mrf.mxu0
      %v1224 = vpop.f32.mrf.mxu0
      %v1225 = vadd.f32 0.0, %v1224
      %v1226 = vpop.f32.mrf.mxu0
      %1227 = vmatprep.mubr.bf16.mxu0 %v537
      %1228 = vmatmul.mubr.bf16.gmra.mxu0 %v528
      %v1229 = vpop.f32.mrf.mxu0
      %v1230 = vadd.f32 0.0, %v1229
      %v1231 = vpop.f32.mrf.mxu0
      %v1232 = vpop.f32.mrf.mxu0
      %v1233 = vadd.f32 0.0, %v1232
      %v1234 = vpop.f32.mrf.mxu0
      %1235 = vdwg.mxu0
      %1236 = vmatprep.subr.bf16.mxu0 0
      %1237 = vmatpush1.bf16.msra.mxu0 %v952
      %1238 = vmatprep.subr.bf16.mxu0 0
      %1239 = vmatpush1.bf16.msra.mxu0 %v949
      %1240 = vmatprep.subr.bf16.mxu0 0
      %1241 = vmatpush1.bf16.msra.mxu0 %v946
      %1242 = vmatprep.subr.bf16.mxu0 0
      %1243 = vmatpush1.bf16.msra.mxu0 %v943
      %1244 = vmatprep.subr.bf16.mxu0 0
      %1245 = vmatpush1.bf16.msra.mxu0 %v940
      %1246 = vmatprep.subr.bf16.mxu0 0
      %1247 = vmatpush1.bf16.msra.mxu0 %v937
      %1248 = vmatprep.subr.bf16.mxu0 0
      %1249 = vmatpush1.bf16.msra.mxu0 %v934
      %1250 = vmatprep.subr.bf16.mxu0 0
      %1251 = vmatpush1.bf16.msra.mxu0 %v931
      %1252 = vmatprep.subr.bf16.mxu0 0
      %1253 = vmatpush2.bf16.msra.mxu0 0
      %1254 = vmatprep.subr.bf16.mxu0 0
      %1255 = vmatpush2.bf16.msra.mxu0 0
      %1256 = vmatprep.subr.bf16.mxu0 0
      %1257 = vmatpush2.bf16.msra.mxu0 0
      %1258 = vmatprep.subr.bf16.mxu0 0
      %1259 = vmatpush2.bf16.msra.mxu0 0
      %1260 = vmatprep.subr.bf16.mxu0 0
      %1261 = vmatpush2.bf16.msra.mxu0 0
      %1262 = vmatprep.subr.bf16.mxu0 0
      %1263 = vmatpush2.bf16.msra.mxu0 0
      %1264 = vmatprep.subr.bf16.mxu0 0
      %1265 = vmatpush2.bf16.msra.mxu0 0
      %1266 = vmatprep.subr.bf16.mxu0 0
      %1267 = vmatpush2.bf16.msra.mxu0 0
      %1268 = vmatprep.mubr.bf16.mxu0 0
      %1269 = vmatmul.mubr.bf16.gmra.mxu0 %v527
      %v1270 = vpop.f32.mrf.mxu0
      %v1271 = vadd.f32 %v1206, %v1270
      %v1272 = vpop.f32.mrf.mxu0
      %v1273 = vpop.f32.mrf.mxu0
      %v1274 = vadd.f32 %v1209, %v1273
      %v1275 = vpop.f32.mrf.mxu0
      %1276 = vmatprep.mubr.bf16.mxu0 0
      %1277 = vmatmul.mubr.bf16.gmra.mxu0 %v528
      %v1278 = vpop.f32.mrf.mxu0
      %v1279 = vadd.f32 %v1214, %v1278
      %v1280 = vpop.f32.mrf.mxu0
      %v1281 = vpop.f32.mrf.mxu0
      %v1282 = vadd.f32 %v1217, %v1281
      %v1283 = vpop.f32.mrf.mxu0
      %1284 = vmatprep.mubr.bf16.mxu0 0
      %1285 = vmatmul.mubr.bf16.gmra.mxu0 %v537
      %v1286 = vpop.f32.mrf.mxu0
      %v1287 = vadd.f32 %v1222, %v1286
      %v1288 = vpop.f32.mrf.mxu0
      %v1289 = vpop.f32.mrf.mxu0
      %v1290 = vadd.f32 %v1225, %v1289
      %v1291 = vpop.f32.mrf.mxu0
      %1292 = vmatprep.mubr.bf16.mxu0 0
      %1293 = vmatmul.mubr.bf16.gmra.mxu0 %v543
      %v1294 = vpop.f32.mrf.mxu0
      %v1295 = vadd.f32 %v1230, %v1294
      %v1296 = vpop.f32.mrf.mxu0
      %v1297 = vpop.f32.mrf.mxu0
      %v1298 = vadd.f32 %v1233, %v1297
      %v1299 = vpop.f32.mrf.mxu0
      %1300 = vdwg.mxu0
      %vm1309 = vcmask 1040384
      %v1310 = vrot.slane %v1133, 7
      %v1311 = vrot.slane %v1137, 7
      %v1312 = vsel %vm1309, %v1310, %v1311
      %v1313 = vrot.slane %v1143, 7
      %v1314 = vrot.slane %v1147, 7
      %v1315 = vsel %vm1309, %v1313, %v1314
      %v1316 = vrot.slane %v1153, 7
      %v1317 = vrot.slane %v1157, 7
      %v1318 = vsel %vm1309, %v1316, %v1317
      %v1319 = vrot.slane %v1163, 7
      %v1320 = vrot.slane %v1167, 7
      %v1321 = vsel %vm1309, %v1319, %v1320
      %v1330 = vsel %vm1309, 0.0, %v1310
      %v1331 = vsel %vm1309, 0.0, %v1313
      %v1332 = vsel %vm1309, 0.0, %v1316
      %v1333 = vsel %vm1309, 0.0, %v1319
      %v1334 = vadd.f32 %v1135, %v1330
      %v1335 = vadd.f32 %v1139, %v1312
      %v1336 = vadd.f32 %v1145, %v1331
      %v1337 = vadd.f32 %v1149, %v1315
      %v1338 = vadd.f32 %v1155, %v1332
      %v1339 = vadd.f32 %v1159, %v1318
      %v1340 = vadd.f32 %v1165, %v1333
      %v1341 = vadd.f32 %v1169, %v1321
      %vm1350 = vcmask 1046528
      %v1351 = vrot.slane %v1271, 1
      %v1352 = vrot.slane %v1274, 1
      %v1353 = vsel %vm1350, %v1351, %v1352
      %v1354 = vrot.slane %v1279, 1
      %v1355 = vrot.slane %v1282, 1
      %v1356 = vsel %vm1350, %v1354, %v1355
      %v1357 = vrot.slane %v1287, 1
      %v1358 = vrot.slane %v1290, 1
      %v1359 = vsel %vm1350, %v1357, %v1358
      %v1360 = vrot.slane %v1295, 1
      %v1361 = vrot.slane %v1298, 1
      %v1362 = vsel %vm1350, %v1360, %v1361
      %v1371 = vsel %vm1350, %v1352, 0.0
      %v1372 = vsel %vm1350, %v1355, 0.0
      %v1373 = vsel %vm1350, %v1358, 0.0
      %v1374 = vsel %vm1350, %v1361, 0.0
      %v1375 = vadd.f32 %v1334, %v1353
      %v1376 = vadd.f32 %v1335, %v1371
      %v1377 = vadd.f32 %v1336, %v1356
      %v1378 = vadd.f32 %v1337, %v1372
      %v1379 = vadd.f32 %v1338, %v1359
      %v1380 = vadd.f32 %v1339, %v1373
      %v1381 = vadd.f32 %v1340, %v1362
      %v1382 = vadd.f32 %v1341, %v1374
      %v1383 = vld [vmem:[%s4] sm:$0x1]
      %v1385 = vlaneseq
      %v1386 = vshrl.u32 %v1385, 7
      %v1387 = vsub.s32 0, %v1386
      %v1388 = vrot.slane %v1383, %v1387
      %v1390 = vadd.f32 %v1375, %v1388
      %v1391 = vadd.f32 %v1376, %v1388
      %v1392 = vadd.f32 %v1377, %v1388
      %v1393 = vadd.f32 %v1378, %v1388
      %v1394 = vadd.f32 %v1379, %v1388
      %v1395 = vadd.f32 %v1380, %v1388
      %v1396 = vadd.f32 %v1381, %v1388
      %v1397 = vadd.f32 %v1382, %v1388
      %v1398 = vmul.f32 %v1390, 0.5
      %v1399 = vmul.f32 %v1391, 0.5
      %v1400 = vmul.f32 %v1392, 0.5
      %v1401 = vmul.f32 %v1393, 0.5
      %v1402 = vmul.f32 %v1394, 0.5
      %v1403 = vmul.f32 %v1395, 0.5
      %v1404 = vmul.f32 %v1396, 0.5
      %v1405 = vmul.f32 %v1397, 0.5
      %v1406 = vmul.f32 %v1390, 0.70710677
      %v1407 = vmul.f32 %v1391, 0.70710677
      %v1408 = vmul.f32 %v1392, 0.70710677
      %v1409 = vmul.f32 %v1393, 0.70710677
      %v1410 = vmul.f32 %v1394, 0.70710677
      %v1411 = vmul.f32 %v1395, 0.70710677
      %v1412 = vmul.f32 %v1396, 0.70710677
      %v1413 = vmul.f32 %v1397, 0.70710677
      %v1414 = verf.f32.pop %v1406
      %v1415 = verf.f32.pop %v1407
      %v1416 = verf.f32.pop %v1408
      %v1417 = verf.f32.pop %v1409
      %v1418 = verf.f32.pop %v1410
      %v1419 = verf.f32.pop %v1411
      %v1420 = verf.f32.pop %v1412
      %v1421 = verf.f32.pop %v1413
      %v1422 = vadd.f32 %v1414, 1.0
      %v1423 = vadd.f32 %v1415, 1.0
      %v1424 = vadd.f32 %v1416, 1.0
      %v1425 = vadd.f32 %v1417, 1.0
      %v1426 = vadd.f32 %v1418, 1.0
      %v1427 = vadd.f32 %v1419, 1.0
      %v1428 = vadd.f32 %v1420, 1.0
      %v1429 = vadd.f32 %v1421, 1.0
      %v1430 = vmul.f32 %v1398, %v1422
      %v1431 = vmul.f32 %v1399, %v1423
      %v1432 = vmul.f32 %v1400, %v1424
      %v1433 = vmul.f32 %v1401, %v1425
      %v1434 = vmul.f32 %v1402, %v1426
      %v1435 = vmul.f32 %v1403, %v1427
      %v1436 = vmul.f32 %v1404, %v1428
      %v1437 = vmul.f32 %v1405, %v1429
      %v1438 = vpack.c.bf16 %v1431, %v1430
      %v1439 = vpack.c.bf16 %v1433, %v1432
      %v1440 = vpack.c.bf16 %v1435, %v1434
      %v1441 = vpack.c.bf16 %v1437, %v1436
      %v1446 = vunpack.c.l.b16 %v1438
      %v1447 = vunpack.c.h.b16 %v1438
      %v1448 = vunpack.c.l.b16 %v1439
      %v1449 = vunpack.c.h.b16 %v1439
      %v1450 = vunpack.c.l.b16 %v1440
      %v1451 = vunpack.c.h.b16 %v1440
      %v1452 = vunpack.c.l.b16 %v1441
      %v1453 = vunpack.c.h.b16 %v1441
      %v1454 = vpack.c.b16 %v1446, %v1446
      %v1455 = vpack.c.b16 %v1447, %v1447
      %v1456 = vpack.c.b16 %v1448, %v1448
      %v1457 = vpack.c.b16 %v1449, %v1449
      %v1458 = vpack.c.b16 %v1450, %v1450
      %v1459 = vpack.c.b16 %v1451, %v1451
      %v1460 = vpack.c.b16 %v1452, %v1452
      %v1461 = vpack.c.b16 %v1453, %v1453
      %1470 = vst [vmem:[%s468] sm:$0xf] %v1454
      %1471 = vst [vmem:[%s468 + $0x4] sm:$0xf] %v1455
      %1472 = vst [vmem:[%s468 + $0x8] sm:$0xf] %v1456
      %1473 = vst [vmem:[%s468 + $0xc] sm:$0xf] %v1457
      %1474 = vst [vmem:[%s468 + $0x10] sm:$0xf] %v1458
      %1475 = vst [vmem:[%s468 + $0x14] sm:$0xf] %v1459
      %1476 = vst [vmem:[%s468 + $0x18] sm:$0xf] %v1460
      %1477 = vst [vmem:[%s468 + $0x1c] sm:$0xf] %v1461
      %v1478 = vunpack.c.l.bf16 %v1438
      %v1479 = vunpack.c.h.bf16 %v1438
      %v1480 = vunpack.c.l.bf16 %v1439
      %v1481 = vunpack.c.h.bf16 %v1439
      %v1482 = vunpack.c.l.bf16 %v1440
      %v1483 = vunpack.c.h.bf16 %v1440
      %v1484 = vunpack.c.l.bf16 %v1441
      %v1485 = vunpack.c.h.bf16 %v1441
      %v1486 = vadd.f32 %v1478, %v1479
      %v1487 = vadd.f32 %v1486, %v1480
      %v1488 = vadd.f32 %v1487, %v1481
      %v1489 = vadd.f32 %v1488, %v1482
      %v1490 = vadd.f32 %v1489, %v1483
      %v1491 = vadd.f32 %v1490, %v1484
      %v1492 = vadd.f32 %v1491, %v1485
      %v1493 = vrot.slane %v1492, 4
      %v1494 = vadd.f32 %v1492, %v1493
      %v1495 = vrot.slane %v1494, 2
      %v1496 = vadd.f32 %v1494, %v1495
      %v1497 = vrot.slane %v1496, 1
      %v1498 = vadd.f32 %v1496, %v1497
      %v1499 = vmul.f32 %v1498, 0.015625
      %v1500 = vsub.f32 %v1478, %v1499
      %v1501 = vsub.f32 %v1479, %v1499
      %v1502 = vsub.f32 %v1480, %v1499
      %v1503 = vsub.f32 %v1481, %v1499
      %v1504 = vsub.f32 %v1482, %v1499
      %v1505 = vsub.f32 %v1483, %v1499
      %v1506 = vsub.f32 %v1484, %v1499
      %v1507 = vsub.f32 %v1485, %v1499
      %1508 = vst [vmem:[%s476] sm:$0x1] %v1498
      %v1509 = vmul.f32 %v1500, %v1500
      %v1510 = vmul.f32 %v1501, %v1501
      %v1511 = vmul.f32 %v1502, %v1502
      %v1512 = vmul.f32 %v1503, %v1503
      %v1513 = vmul.f32 %v1504, %v1504
      %v1514 = vmul.f32 %v1505, %v1505
      %v1515 = vmul.f32 %v1506, %v1506
      %v1516 = vmul.f32 %v1507, %v1507
      %v1517 = vadd.f32 %v1509, %v1510
      %v1518 = vadd.f32 %v1517, %v1511
      %v1519 = vadd.f32 %v1518, %v1512
      %v1520 = vadd.f32 %v1519, %v1513
      %v1521 = vadd.f32 %v1520, %v1514
      %v1522 = vadd.f32 %v1521, %v1515
      %v1523 = vadd.f32 %v1522, %v1516
      %v1524 = vrot.slane %v1523, 4
      %v1525 = vadd.f32 %v1523, %v1524
      %v1526 = vrot.slane %v1525, 2
      %v1527 = vadd.f32 %v1525, %v1526
      %v1528 = vrot.slane %v1527, 1
      %v1529 = vadd.f32 %v1527, %v1528
      %1530 = vst [vmem:[%s483] sm:$0x1] %v1529
      %s1531 = smul.u32 4, %s24
      %p1532 = scmp.lt.s32.totalorder %s23, 1
      %s1533 = scalar_select %p1532, %s23, 1
      %p1534 = scmp.lt.s32.totalorder %s1531, 15
      %s1535 = scalar_select %p1534, %s1531, 15
      %s1536 = smul.addr %s1535, 2
      %s1537 = smul.addr %s1533, 32
      %s1538 = sadd.s32 %s1536, %s1537
      %s1539 = smul.addr %s1538, 4
      %s1540 = scalar_lea.vmem %s5, %s1539
      %p1541 = scmp.lt.s32.totalorder %s23, 1
      %s1542 = scalar_select %p1541, %s23, 1
      %p1543 = scmp.lt.s32.totalorder %s24, 3
      %s1544 = scalar_select %p1543, %s24, 3
      %s1545 = smul.addr %s1542, 4
      %s1546 = sadd.s32 %s1544, %s1545
      %s1547 = scalar_lea.vmem %s6, %s1546
      %p1548 = scmp.lt.s32.totalorder %s23, 1
      %s1549 = scalar_select %p1548, %s23, 1
      %p1550 = scmp.lt.s32.totalorder %s24, 3
      %s1551 = scalar_select %p1550, %s24, 3
      %s1552 = smul.addr %s1549, 4
      %s1553 = sadd.s32 %s1551, %s1552
      %s1554 = scalar_lea.vmem %s7, %s1553
      // Predicated region
      $region41: #{residual_block_pallas.2} parent=39 // pred_check
        %p1555 = pneg %p193
      $region42: #{residual_block_pallas.2} parent=39 // pred_check_branch
        %1557 = sbr.rel (%p1555) target = $region44
      $region43: #{residual_block_pallas.2} parent=39 // pred_region
        %s1558 = smul.u32 4, %s24
      $region44: #{residual_block_pallas.2} parent=39 // pred_fallthru
        _
      // Predicated region
      $region45: #{residual_block_pallas.2} parent=39 // pred_check
        %p1559 = pneg %p221
      $region46: #{residual_block_pallas.2} parent=39 // pred_check_branch
        %1561 = sbr.rel (%p1559) target = $region48
      $region47: #{residual_block_pallas.2} parent=39 // pred_region
        _
      $region48: #{residual_block_pallas.2} parent=39 // pred_fallthru
        _
      // Predicated region
      $region49: #{residual_block_pallas.2} parent=39 // pred_check
        %p1562 = pneg %p249
      $region50: #{residual_block_pallas.2} parent=39 // pred_check_branch
        %1564 = sbr.rel (%p1562) target = $region52
      $region51: #{residual_block_pallas.2} parent=39 // pred_region
        _
      $region52: #{residual_block_pallas.2} parent=39 // pred_fallthru
        _
    $region40: #{residual_block_pallas.2} parent=5 // pred_fallthru
      _
    %p1565 = scmp.le.s32.totalorder 2, %s14
    // Predicated region
    $region53: #{residual_block_pallas.2} parent=5 // pred_check
      %p1566 = pneg %p1565
    $region54: #{residual_block_pallas.2} parent=5 // pred_check_branch
      %1568 = sbr.rel (%p1566) target = $region56
    $region55: #{residual_block_pallas.2} parent=5 // pred_region
      %s1569 = ssub.s32 %s14, 2
      // Predicated region
      $region57: #{residual_block_pallas.2} parent=55 // pred_check
        %p1570 = pneg %p199
      $region58: #{residual_block_pallas.2} parent=55 // pred_check_branch
        %1572 = sbr.rel (%p1570) target = $region60
      $region59: #{residual_block_pallas.2} parent=55 // pred_region
        %s1573 = smul.u32 4, %s26
        %p1574 = scmp.lt.s32.totalorder %s25, 1
        %s1575 = scalar_select %p1574, %s25, 1
        %p1576 = scmp.lt.s32.totalorder %s1573, 15
        %s1577 = scalar_select %p1576, %s1573, 15
        %s1578 = smul.addr %s1577, 2
        %s1579 = smul.addr %s1575, 32
        %s1580 = sadd.s32 %s1578, %s1579
        %s1581 = smul.addr %s1580, 4
        %s1582 = scalar_lea.vmem %s5, %s1581
      $region60: #{residual_block_pallas.2} parent=55 // pred_fallthru
        _
      // Predicated region
      $region61: #{residual_block_pallas.2} parent=55 // pred_check
        %p1583 = pneg %p227
      $region62: #{residual_block_pallas.2} parent=55 // pred_check_branch
        %1585 = sbr.rel (%p1583) target = $region64
      $region63: #{residual_block_pallas.2} parent=55 // pred_region
        %p1586 = scmp.lt.s32.totalorder %s25, 1
        %s1587 = scalar_select %p1586, %s25, 1
        %p1588 = scmp.lt.s32.totalorder %s26, 3
        %s1589 = scalar_select %p1588, %s26, 3
        %s1590 = smul.addr %s1587, 4
        %s1591 = sadd.s32 %s1589, %s1590
        %s1592 = scalar_lea.vmem %s6, %s1591
      $region64: #{residual_block_pallas.2} parent=55 // pred_fallthru
        _
      // Predicated region
      $region65: #{residual_block_pallas.2} parent=55 // pred_check
        %p1593 = pneg %p255
      $region66: #{residual_block_pallas.2} parent=55 // pred_check_branch
        %1595 = sbr.rel (%p1593) target = $region68
      $region67: #{residual_block_pallas.2} parent=55 // pred_region
        %p1596 = scmp.lt.s32.totalorder %s25, 1
        %s1597 = scalar_select %p1596, %s25, 1
        %p1598 = scmp.lt.s32.totalorder %s26, 3
        %s1599 = scalar_select %p1598, %s26, 3
        %s1600 = smul.addr %s1597, 4
        %s1601 = sadd.s32 %s1599, %s1600
        %s1602 = scalar_lea.vmem %s7, %s1601
      $region68: #{residual_block_pallas.2} parent=55 // pred_fallthru
        _
    $region56: #{residual_block_pallas.2} parent=5 // pred_fallthru
      _
  $region6: #{residual_block_pallas.2} parent=0 // loop_footer
    %s18 = sadd.s32 1, %s14
  $region7: #{residual_block_pallas.2} parent=0 // loop_footer_branch
    %13 = sbr.rel target = $region3
  $region8: #{residual_block_pallas.2} parent=0 // loop_exit
    _

</llo_original>
